<compile_context>
chip_gen: v7x
topology: tpu7x:2x2x1
jax: 0.10.0
libtpu: 0.0.40
codegen_flags: <defaults>
</compile_context>

<pallas_src>
import numpy as np
import jax
import jax.numpy as jnp
from jax import lax
from jax.experimental import pallas as pl
from jax.experimental.pallas import tpu as pltpu

_BF16 = jnp.bfloat16

# ----------------------------------------------------------------------------
# Ordered list of kernel inputs (fused / pre-transposed / pre-broadcast params)
# ----------------------------------------------------------------------------
_ORDER = [
    "src", "enc_mask", "oh0", "rate0",
    # encoder GRU, gates fused along columns in [r | z | n] order
    "e_wi", "e_wh", "e_bi", "e_bhn",
    # decoder GRUCell extras (rate column of W_ih, combined biases)
    "d_wir", "d_bi", "d_bhn",
    # fused one-hot consumers: [dec_emb @ W_ie (3H) | mt_emb @ W_r1e (H)]
    "oh_fused_w",
    # fused hidden consumers: [W_eid (E) | W_hh (3H) | W_r1h (H)]
    "h_fused_w",
    # multitask head biases / final rate projection
    "pe_b", "pr1_b", "pr2_w", "pr2_b",
]


def _mxu(a_bf16, w_bf16):
    """bf16 MXU matmul with f32 accumulation."""
    return jnp.dot(a_bf16, w_bf16, preferred_element_type=jnp.float32)


# ----------------------------------------------------------------------------
# Pallas kernel: whole forward (encoder scan + autoregressive decoder loop)
# ----------------------------------------------------------------------------
def _seq2seq_kernel(*refs):
    n_in = len(_ORDER)
    ins = dict(zip(_ORDER, refs[:n_in]))
    eid_out_ref, rate_out_ref = refs[n_in], refs[n_in + 1]

    mask_ref = ins["enc_mask"]
    S, B, H = mask_ref.shape
    E = ins["pe_b"].shape[1]
    T = eid_out_ref.shape[0]
    H3 = 3 * H

    # Row 0 of the eid output is the only row never written by the decoder loop.
    eid_out_ref[0] = jnp.zeros((B, E), jnp.float32)

    # ------------------------- Encoder (masked GRU) --------------------------
    e_wh = ins["e_wh"][...]
    e_bhn = ins["e_bhn"][...]

    # Hoisted input projection: one (S*B, Din) x (Din, 3H) dot for all steps.
    gi_all = _mxu(ins["src"][...], ins["e_wi"][...]) + ins["e_bi"][...]   # (S*B, 3H)

    h = jnp.zeros((B, H), jnp.float32)
    for t in range(S):                                   # fully unrolled, S static
        gi = gi_all[t * B:(t + 1) * B]                   # static sublane-aligned slice
        if t == 0:
            gh = jnp.zeros((B, H3), jnp.float32)         # h == 0 -> gh == 0 exactly
        else:
            gh = _mxu(h.astype(_BF16), e_wh)
        rg = jax.nn.sigmoid(gi[:, :H] + gh[:, :H])
        zg = jax.nn.sigmoid(gi[:, H:2 * H] + gh[:, H:2 * H])
        ng = jnp.tanh(gi[:, 2 * H:] + rg * (gh[:, 2 * H:] + e_bhn))
        h_new = (1.0 - zg) * ng + zg * h
        # pack_padded_sequence semantics: freeze hidden once t >= src_len[b].
        h = jnp.where(mask_ref[t] != 0.0, h_new, h)

    # ------------------ Decoder (autoregressive, unrolled) -------------------
    oh_fw = ins["oh_fused_w"][...]   # (E, 4H)
    h_fw = ins["h_fused_w"][...]     # (H, E + 4H)
    d_wir = ins["d_wir"][...]
    d_bi = ins["d_bi"][...]
    d_bhn = ins["d_bhn"][...]
    pe_b = ins["pe_b"][...]
    pr1_b = ins["pr1_b"][...]
    pr2_w = ins["pr2_w"][...]
    pr2_b = ins["pr2_b"][...]

    col = lax.broadcasted_iota(jnp.int32, (B, E), 1)

    # First step's recurrent projection (from encoder hidden) and embedding-gate
    # projection (from trg_eid[0]); reuse the fused weights and take the slices needed.
    gh = _mxu(h.astype(_BF16), h_fw)[:, E:E + H3]
    gi_emb = _mxu(ins["oh0"][...], oh_fw)[:, :H3]
    rate = ins["rate0"][...]                             # (B, 1)

    rate_rows = [jnp.zeros((B, 1), jnp.float32)]         # output row 0 (never produced)
    for i in range(1, T):                                # fully unrolled, T static
        # --- GRUCell on cat([embedding, rate]); embedding pre-fused into gi_emb ---
        gi = gi_emb + rate * d_wir + d_bi
        rg = jax.nn.sigmoid(gi[:, :H] + gh[:, :H])
        zg = jax.nn.sigmoid(gi[:, H:2 * H] + gh[:, H:2 * H])
        ng = jnp.tanh(gi[:, 2 * H:] + rg * (gh[:, 2 * H:] + d_bhn))
        h = (1.0 - zg) * ng + zg * h

        # --- single fused dot for every consumer of h:
        #     eid logits | next-step h @ W_hh | h @ W_r1h --------------------------
        f2 = _mxu(h.astype(_BF16), h_fw)                 # (B, E + 4H)
        logits = f2[:, :E] + pe_b
        gh = f2[:, E:E + H3]
        hh_rate = f2[:, E + H3:]

        # --- argmax on raw logits (== argmax of log_softmax); first-maximal ties ---
        mx = jnp.max(logits, axis=1, keepdims=True)
        idx = jnp.min(jnp.where(logits >= mx, col, E), axis=1, keepdims=True)
        new_oh = (col == idx).astype(_BF16)

        # --- single fused dot for every consumer of the new one-hot:
        #     next-step embedding gates | embedding part of pre_rate_1 --------------
        f1 = _mxu(new_oh, oh_fw)                         # (B, 4H)
        gi_emb = f1[:, :H3]
        r1 = f1[:, H3:] + hh_rate + pr1_b
        r2 = _mxu(jnp.maximum(r1, 0.0).astype(_BF16), pr2_w) + pr2_b
        rate = jax.nn.sigmoid(r2)

        # --- log_softmax only feeds the stored output (off the serial chain) -------
        sh = logits - mx
        logp = sh - jnp.log(jnp.sum(jnp.exp(sh), axis=1, keepdims=True))

        eid_out_ref[i] = logp                            # static lane-dense (B, E) store
        rate_rows.append(rate)

    # One wide store instead of T-1 one-lane masked stores.
    rate_out_ref[...] = jnp.concatenate(rate_rows, axis=1)   # (B, T)


def seq2seq_multi_pallas(prep, max_trg_len):
    T = max_trg_len
    _, B, _ = prep["enc_mask"].shape
    E = prep["pe_b"].shape[1]
    inputs = [prep[k] for k in _ORDER]
    vmem = pltpu.MemorySpace.VMEM
    eid_res, rate_bt = pl.pallas_call(
        _seq2seq_kernel,
        in_specs=[pl.BlockSpec(memory_space=vmem)] * len(inputs),
        out_specs=(pl.BlockSpec(memory_space=vmem),
                   pl.BlockSpec(memory_space=vmem)),
        out_shape=(jax.ShapeDtypeStruct((T, B, E), jnp.float32),
                   jax.ShapeDtypeStruct((B, T), jnp.float32)),
    )(*inputs)
    return eid_res, rate_bt.T        # (T, B, E), (T, B)


# ----------------------------------------------------------------------------
# Parameter init (deterministic, PyTorch layouts) + prep into kernel layouts
# ----------------------------------------------------------------------------
def init_params(key, input_dim, hid_dim, emb_dim, eid_size, rate_size=1):
    ks = jax.random.split(key, 16)
    s, bs = 0.3, 0.1
    p = {
        "enc_w_ih": jax.random.normal(ks[0], (3 * hid_dim, input_dim)) * s,
        "enc_w_hh": jax.random.normal(ks[1], (3 * hid_dim, hid_dim)) * s,
        "enc_b_ih": jax.random.normal(ks[2], (3 * hid_dim,)) * bs,
        "enc_b_hh": jax.random.normal(ks[3], (3 * hid_dim,)) * bs,
        "dec_w_ih": jax.random.normal(ks[4], (3 * hid_dim, emb_dim + rate_size)) * s,
        "dec_w_hh": jax.random.normal(ks[5], (3 * hid_dim, hid_dim)) * s,
        "dec_b_ih": jax.random.normal(ks[6], (3 * hid_dim,)) * bs,
        "dec_b_hh": jax.random.normal(ks[7], (3 * hid_dim,)) * bs,
        "dec_emb": jax.random.normal(ks[8], (eid_size, emb_dim)) * s,
        "mt_emb": jax.random.normal(ks[9], (eid_size, emb_dim)) * s,
        "pre_eid_w": jax.random.normal(ks[10], (eid_size, hid_dim)) * s,
        "pre_eid_b": jax.random.normal(ks[11], (eid_size,)) * bs,
        "pr1_w": jax.random.normal(ks[12], (hid_dim, hid_dim + emb_dim)) * s,
        "pr1_b": jax.random.normal(ks[13], (hid_dim,)) * bs,
        "pr2_w": jax.random.normal(ks[14], (rate_size, hid_dim)) * s,
        "pr2_b": jax.random.normal(ks[15], (rate_size,)) * bs,
    }
    return jax.tree_util.tree_map(lambda x: x.astype(jnp.float32), p)


def _split3_t(w):  # (3H, X) -> three (X, H) transposed gate weights [r, z, n]
    H = w.shape[0] // 3
    return [w[k * H:(k + 1) * H].T for k in range(3)]


def _split3_b(b):  # (3H,) -> three (H,) gate biases [r, z, n]
    H = b.shape[0] // 3
    return [b[k * H:(k + 1) * H] for k in range(3)]


def prepare_inputs(params, src, src_len, trg_eid, trg_rate, emb_dim):
    bf16 = jnp.bfloat16
    S, B, Din = src.shape
    H = params["enc_w_hh"].shape[1]
    E = params["dec_emb"].shape[0]

    p = {}
    # activations / initial decoder inputs
    p["src"] = src.reshape(S * B, Din).astype(bf16)               # matmul operand only
    t_idx = jnp.arange(S, dtype=jnp.int32)[:, None]
    keep = (t_idx < src_len.astype(jnp.int32)[None, :]).astype(jnp.float32)   # (S, B)
    p["enc_mask"] = jnp.broadcast_to(keep[:, :, None], (S, B, H))             # pre-broadcast
    p["oh0"] = jax.nn.one_hot(trg_eid[0], E, dtype=jnp.float32).astype(bf16)  # trg_eid[0]
    p["rate0"] = trg_rate[0].astype(jnp.float32)[:, None]

    # --- encoder GRU: fuse gates along columns [r | z | n] --------------------
    p["e_wi"] = jnp.concatenate(_split3_t(params["enc_w_ih"]), axis=1).astype(bf16)  # (Din, 3H)
    p["e_wh"] = jnp.concatenate(_split3_t(params["enc_w_hh"]), axis=1).astype(bf16)  # (H, 3H)
    bir, biz, bin_ = _split3_b(params["enc_b_ih"])
    bhr, bhz, bhn = _split3_b(params["enc_b_hh"])
    p["e_bi"] = jnp.concatenate([bir + bhr, biz + bhz, bin_])[None, :]               # (1, 3H)
    p["e_bhn"] = jnp.broadcast_to(bhn[None, :], (B, H))

    # --- decoder GRUCell: input = cat([embedding, rate]); fuse gates ----------
    d_gates = _split3_t(params["dec_w_ih"])                           # each (emb+1, H)
    wie = jnp.concatenate([w[:emb_dim] for w in d_gates], axis=1)     # (emb, 3H) f32
    wir = jnp.concatenate([w[emb_dim:] for w in d_gates], axis=1)     # (1, 3H)
    p["d_wir"] = jnp.broadcast_to(wir, (B, 3 * H))
    dbir, dbiz, dbin = _split3_b(params["dec_b_ih"])
    dbhr, dbhz, dbhn = _split3_b(params["dec_b_hh"])
    p["d_bi"] = jnp.broadcast_to(
        jnp.concatenate([dbir + dbhr, dbiz + dbhz, dbin])[None, :], (B, 3 * H))
    p["d_bhn"] = jnp.broadcast_to(dbhn[None, :], (B, H))
    d_wh = jnp.concatenate(_split3_t(params["dec_w_hh"]), axis=1)     # (H, 3H) f32

    # --- embedding fusions + multitask head ------------------------------------
    w1t = params["pr1_w"].T                       # (emb + H, H); cat order [emb, hidden]
    pr1_we, pr1_wh = w1t[:emb_dim], w1t[emb_dim:]
    dec_emb_wie = params["dec_emb"] @ wie         # (E, 3H): embedding folded into gates
    mt_pr1 = params["mt_emb"] @ pr1_we            # (E, H):  mt embedding folded into pre_rate_1
    p["oh_fused_w"] = jnp.concatenate([dec_emb_wie, mt_pr1], axis=1).astype(bf16)   # (E, 4H)

    pe_w = params["pre_eid_w"].T                  # (H, E)
    # column order [pe_w | d_wh | pr1_wh] so logits occupy lanes 0:E (vreg-aligned)
    p["h_fused_w"] = jnp.concatenate([pe_w, d_wh, pr1_wh], axis=1).astype(bf16)     # (H, E+4H)

    p["pe_b"] = jnp.broadcast_to(params["pre_eid_b"][None, :], (B, E))
    p["pr1_b"] = jnp.broadcast_to(params["pr1_b"][None, :], (B, H))
    p["pr2_w"] = params["pr2_w"].T.astype(bf16)                                     # (H, 1)
    p["pr2_b"] = jnp.broadcast_to(params["pr2_b"][None, :], (B, 1))
    return p


# ----------------------------------------------------------------------------
# Pure-JAX reference (identical math / fusion order, plain Python loops)
# ----------------------------------------------------------------------------
def reference_forward(prep, max_trg_len):
    S, B, H = prep["enc_mask"].shape
    E = prep["pe_b"].shape[1]
    T = max_trg_len
    H3 = 3 * H
    bf16 = jnp.bfloat16

    gi_all = jnp.dot(prep["src"], prep["e_wi"],
                     preferred_element_type=jnp.float32) + prep["e_bi"]
    h = jnp.zeros((B, H), jnp.float32)
    for t in range(S):
        gi = gi_all[t * B:(t + 1) * B]
        gh = (jnp.zeros((B, H3), jnp.float32) if t == 0 else
              jnp.dot(h.astype(bf16), prep["e_wh"], preferred_element_type=jnp.float32))
        rg = jax.nn.sigmoid(gi[:, :H] + gh[:, :H])
        zg = jax.nn.sigmoid(gi[:, H:2 * H] + gh[:, H:2 * H])
        ng = jnp.tanh(gi[:, 2 * H:] + rg * (gh[:, 2 * H:] + prep["e_bhn"]))
        h_new = (1.0 - zg) * ng + zg * h
        h = jnp.where(prep["enc_mask"][t] != 0.0, h_new, h)

    col = jnp.broadcast_to(jnp.arange(E, dtype=jnp.int32)[None, :], (B, E))
    gh = jnp.dot(h.astype(bf16), prep["h_fused_w"],
                 preferred_element_type=jnp.float32)[:, E:E + H3]
    gi_emb = jnp.dot(prep["oh0"], prep["oh_fused_w"],
                     preferred_element_type=jnp.float32)[:, :H3]
    rate = prep["rate0"]

    eid_rows = [jnp.zeros((B, E), jnp.float32)]
    rate_rows = [jnp.zeros((B, 1), jnp.float32)]
    for _ in range(1, T):
        gi = gi_emb + rate * prep["d_wir"] + prep["d_bi"]
        rg = jax.nn.sigmoid(gi[:, :H] + gh[:, :H])
        zg = jax.nn.sigmoid(gi[:, H:2 * H] + gh[:, H:2 * H])
        ng = jnp.tanh(gi[:, 2 * H:] + rg * (gh[:, 2 * H:] + prep["d_bhn"]))
        h = (1.0 - zg) * ng + zg * h

        f2 = jnp.dot(h.astype(bf16), prep["h_fused_w"], preferred_element_type=jnp.float32)
        logits = f2[:, :E] + prep["pe_b"]
        gh = f2[:, E:E + H3]
        hh_rate = f2[:, E + H3:]

        mx = jnp.max(logits, axis=1, keepdims=True)
        idx = jnp.min(jnp.where(logits >= mx, col, E), axis=1, keepdims=True)
        new_oh = (col == idx).astype(bf16)

        f1 = jnp.dot(new_oh, prep["oh_fused_w"], preferred_element_type=jnp.float32)
        gi_emb = f1[:, :H3]
        r1 = f1[:, H3:] + hh_rate + prep["pr1_b"]
        r2 = jnp.dot(jnp.maximum(r1, 0.0).astype(bf16), prep["pr2_w"],
                     preferred_element_type=jnp.float32) + prep["pr2_b"]
        rate = jax.nn.sigmoid(r2)

        sh = logits - mx
        logp = sh - jnp.log(jnp.sum(jnp.exp(sh), axis=1, keepdims=True))
        eid_rows.append(logp)
        rate_rows.append(rate)

    return jnp.stack(eid_rows, 0), jnp.concatenate(rate_rows, axis=1).T


# ----------------------------------------------------------------------------
if __name__ == "__main__":
    # Small shapes consistent with the module:
    S, T, B = 10, 6, 8                  # src seq len, max_trg_len, batch
    Din, H, emb, E = 16, 32, 16, 128    # input_dim, hid_dim/hidden_size, embedding_size, eid_size

    key = jax.random.PRNGKey(0)
    kp, k1, k2, k3 = jax.random.split(key, 4)
    params = init_params(kp, Din, H, emb, E)

    src = jax.random.normal(k1, (S, B, Din), jnp.float32)
    src_len = jnp.array([10, 10, 9, 8, 7, 6, 5, 4], dtype=jnp.int32)   # sorted desc (pack_padded)
    trg_eid = jax.random.randint(k2, (T, B), 0, E, dtype=jnp.int32)
    trg_rate = jax.random.uniform(k3, (T, B), jnp.float32)

    prep = prepare_inputs(params, src, src_len, trg_eid, trg_rate, emb)

    eid_res, rate_res = seq2seq_multi_pallas(prep, T)
    jax.block_until_ready((eid_res, rate_res))

    ref_eid, ref_rate = reference_forward(prep, T)
    assert eid_res.shape == (T, B, E) and rate_res.shape == (T, B)
    np.testing.assert_allclose(np.asarray(eid_res), np.asarray(ref_eid), atol=3e-3, rtol=3e-3)
    np.testing.assert_allclose(np.asarray(rate_res), np.asarray(ref_rate), atol=3e-3, rtol=3e-3)

    print("KERNEL_OK")
</pallas_src>

<mosaic_0001>
module attributes {stable_mosaic.version = 11 : i64} {
  func.func @_seq2seq_kernel(%arg0: memref<80x16xbf16, #tpu.memory_space<vmem>>, %arg1: memref<10x8x32xf32, #tpu.memory_space<vmem>>, %arg2: memref<8x128xbf16, #tpu.memory_space<vmem>>, %arg3: memref<8x1xf32, #tpu.memory_space<vmem>>, %arg4: memref<16x96xbf16, #tpu.memory_space<vmem>>, %arg5: memref<32x96xbf16, #tpu.memory_space<vmem>>, %arg6: memref<1x96xf32, #tpu.memory_space<vmem>>, %arg7: memref<8x32xf32, #tpu.memory_space<vmem>>, %arg8: memref<8x96xf32, #tpu.memory_space<vmem>>, %arg9: memref<8x96xf32, #tpu.memory_space<vmem>>, %arg10: memref<8x32xf32, #tpu.memory_space<vmem>>, %arg11: memref<128x128xbf16, #tpu.memory_space<vmem>>, %arg12: memref<32x256xbf16, #tpu.memory_space<vmem>>, %arg13: memref<8x128xf32, #tpu.memory_space<vmem>>, %arg14: memref<8x32xf32, #tpu.memory_space<vmem>>, %arg15: memref<32x1xbf16, #tpu.memory_space<vmem>>, %arg16: memref<8x1xf32, #tpu.memory_space<vmem>>, %arg17: memref<6x8x128xf32, #tpu.memory_space<vmem>>, %arg18: memref<8x6xf32, #tpu.memory_space<vmem>>) attributes {dimension_semantics = [], scalar_prefetch = 0 : i64, scratch_operands = 0 : i64, tpu.core_type = #tpu.core_type<tc>} {
    %cst = arith.constant 0.000000e+00 : f32
    %0 = vector.broadcast %cst : f32 to vector<8x128xf32>
    %c0 = arith.constant 0 : index
    %c0_0 = arith.constant 0 : index
    %c0_1 = arith.constant 0 : index
    %1 = vector.load %arg17[%c0, %c0_0, %c0_1] : memref<6x8x128xf32, #tpu.memory_space<vmem>>, vector<1x8x128xf32>
    %2 = vector.shape_cast %1 : vector<1x8x128xf32> to vector<8x128xf32>
    %3 = vector.shape_cast %0 : vector<8x128xf32> to vector<1x8x128xf32>
    tpu.vector_store %arg17[%c0, %c0_0, %c0_1], %3 {strides = array<i32>} : memref<6x8x128xf32, #tpu.memory_space<vmem>>, vector<1x8x128xf32>,
    %c0_2 = arith.constant 0 : index
    %c0_3 = arith.constant 0 : index
    %4 = vector.load %arg5[%c0_2, %c0_3] : memref<32x96xbf16, #tpu.memory_space<vmem>>, vector<32x96xbf16>
    %c0_4 = arith.constant 0 : index
    %c0_5 = arith.constant 0 : index
    %5 = vector.load %arg7[%c0_4, %c0_5] : memref<8x32xf32, #tpu.memory_space<vmem>>, vector<8x32xf32>
    %c0_6 = arith.constant 0 : index
    %c0_7 = arith.constant 0 : index
    %6 = vector.load %arg0[%c0_6, %c0_7] : memref<80x16xbf16, #tpu.memory_space<vmem>>, vector<80x16xbf16>
    %c0_8 = arith.constant 0 : index
    %c0_9 = arith.constant 0 : index
    %7 = vector.load %arg4[%c0_8, %c0_9] : memref<16x96xbf16, #tpu.memory_space<vmem>>, vector<16x96xbf16>
    %cst_10 = arith.constant dense<0.000000e+00> : vector<80x96xf32>
    %8 = tpu.matmul %6, %7, %cst_10 {dimension_numbers = #tpu.dot_dimension_numbers<[1], [0], [0], [1], [0, 0, 1, 1], [], []>} : vector<80x16xbf16>, vector<16x96xbf16>, vector<80x96xf32> -> vector<80x96xf32>
    %c0_11 = arith.constant 0 : index
    %c0_12 = arith.constant 0 : index
    %9 = vector.load %arg6[%c0_11, %c0_12] : memref<1x96xf32, #tpu.memory_space<vmem>>, vector<1x96xf32>
    %10 = vector.broadcast %9 : vector<1x96xf32> to vector<80x96xf32>
    %11 = arith.addf %8, %10 : vector<80x96xf32>
    %cst_13 = arith.constant 0.000000e+00 : f32
    %12 = vector.broadcast %cst_13 : f32 to vector<8x32xf32>
    %13 = vector.extract_strided_slice %11 {offsets = [0, 0], sizes = [8, 96], strides = [1, 1]} : vector<80x96xf32> to vector<8x96xf32>
    %cst_14 = arith.constant 0.000000e+00 : f32
    %14 = vector.broadcast %cst_14 : f32 to vector<8x96xf32>
    %15 = vector.extract_strided_slice %13 {offsets = [0, 0], sizes = [8, 32], strides = [1, 1]} : vector<8x96xf32> to vector<8x32xf32>
    %16 = vector.extract_strided_slice %14 {offsets = [0, 0], sizes = [8, 32], strides = [1, 1]} : vector<8x96xf32> to vector<8x32xf32>
    %17 = arith.addf %15, %16 : vector<8x32xf32>
    %18 = arith.negf %17 : vector<8x32xf32>
    %19 = math.exp %18 : vector<8x32xf32>
    %cst_15 = arith.constant 1.000000e+00 : f32
    %20 = vector.broadcast %cst_15 : f32 to vector<8x32xf32>
    %21 = arith.addf %20, %19 : vector<8x32xf32>
    %22 = arith.divf %20, %21 : vector<8x32xf32>
    %23 = vector.extract_strided_slice %13 {offsets = [0, 32], sizes = [8, 32], strides = [1, 1]} : vector<8x96xf32> to vector<8x32xf32>
    %24 = vector.extract_strided_slice %14 {offsets = [0, 32], sizes = [8, 32], strides = [1, 1]} : vector<8x96xf32> to vector<8x32xf32>
    %25 = arith.addf %23, %24 : vector<8x32xf32>
    %26 = arith.negf %25 : vector<8x32xf32>
    %27 = math.exp %26 : vector<8x32xf32>
    %cst_16 = arith.constant 1.000000e+00 : f32
    %28 = vector.broadcast %cst_16 : f32 to vector<8x32xf32>
    %29 = arith.addf %28, %27 : vector<8x32xf32>
    %30 = arith.divf %28, %29 : vector<8x32xf32>
    %31 = vector.extract_strided_slice %13 {offsets = [0, 64], sizes = [8, 32], strides = [1, 1]} : vector<8x96xf32> to vector<8x32xf32>
    %32 = vector.extract_strided_slice %14 {offsets = [0, 64], sizes = [8, 32], strides = [1, 1]} : vector<8x96xf32> to vector<8x32xf32>
    %33 = arith.addf %32, %5 : vector<8x32xf32>
    %34 = arith.mulf %22, %33 : vector<8x32xf32>
    %35 = arith.addf %31, %34 : vector<8x32xf32>
    %36 = math.tanh %35 : vector<8x32xf32>
    %cst_17 = arith.constant 1.000000e+00 : f32
    %37 = vector.broadcast %cst_17 : f32 to vector<8x32xf32>
    %38 = arith.subf %37, %30 : vector<8x32xf32>
    %39 = arith.mulf %38, %36 : vector<8x32xf32>
    %40 = arith.mulf %30, %12 : vector<8x32xf32>
    %41 = arith.addf %39, %40 : vector<8x32xf32>
    %c0_18 = arith.constant 0 : index
    %c0_19 = arith.constant 0 : index
    %c0_20 = arith.constant 0 : index
    %42 = vector.load %arg1[%c0_18, %c0_19, %c0_20] : memref<10x8x32xf32, #tpu.memory_space<vmem>>, vector<1x8x32xf32>
    %43 = vector.shape_cast %42 : vector<1x8x32xf32> to vector<8x32xf32>
    %cst_21 = arith.constant 0.000000e+00 : f32
    %44 = vector.broadcast %cst_21 : f32 to vector<8x32xf32>
    %45 = arith.cmpf one, %43, %44 : vector<8x32xf32>
    %46 = arith.select %45, %41, %12 : vector<8x32xi1>, vector<8x32xf32>
    %47 = vector.extract_strided_slice %11 {offsets = [8, 0], sizes = [8, 96], strides = [1, 1]} : vector<80x96xf32> to vector<8x96xf32>
    %48 = arith.truncf %46 : vector<8x32xf32> to vector<8x32xbf16>
    %cst_22 = arith.constant dense<0.000000e+00> : vector<8x96xf32>
    %49 = tpu.matmul %48, %4, %cst_22 {dimension_numbers = #tpu.dot_dimension_numbers<[1], [0], [0], [1], [0, 0, 1, 1], [], []>} : vector<8x32xbf16>, vector<32x96xbf16>, vector<8x96xf32> -> vector<8x96xf32>
    %50 = vector.extract_strided_slice %47 {offsets = [0, 0], sizes = [8, 32], strides = [1, 1]} : vector<8x96xf32> to vector<8x32xf32>
    %51 = vector.extract_strided_slice %49 {offsets = [0, 0], sizes = [8, 32], strides = [1, 1]} : vector<8x96xf32> to vector<8x32xf32>
    %52 = arith.addf %50, %51 : vector<8x32xf32>
    %53 = arith.negf %52 : vector<8x32xf32>
    %54 = math.exp %53 : vector<8x32xf32>
    %cst_23 = arith.constant 1.000000e+00 : f32
    %55 = vector.broadcast %cst_23 : f32 to vector<8x32xf32>
    %56 = arith.addf %55, %54 : vector<8x32xf32>
    %57 = arith.divf %55, %56 : vector<8x32xf32>
    %58 = vector.extract_strided_slice %47 {offsets = [0, 32], sizes = [8, 32], strides = [1, 1]} : vector<8x96xf32> to vector<8x32xf32>
    %59 = vector.extract_strided_slice %49 {offsets = [0, 32], sizes = [8, 32], strides = [1, 1]} : vector<8x96xf32> to vector<8x32xf32>
    %60 = arith.addf %58, %59 : vector<8x32xf32>
    %61 = arith.negf %60 : vector<8x32xf32>
    %62 = math.exp %61 : vector<8x32xf32>
    %cst_24 = arith.constant 1.000000e+00 : f32
    %63 = vector.broadcast %cst_24 : f32 to vector<8x32xf32>
    %64 = arith.addf %63, %62 : vector<8x32xf32>
    %65 = arith.divf %63, %64 : vector<8x32xf32>
    %66 = vector.extract_strided_slice %47 {offsets = [0, 64], sizes = [8, 32], strides = [1, 1]} : vector<8x96xf32> to vector<8x32xf32>
    %67 = vector.extract_strided_slice %49 {offsets = [0, 64], sizes = [8, 32], strides = [1, 1]} : vector<8x96xf32> to vector<8x32xf32>
    %68 = arith.addf %67, %5 : vector<8x32xf32>
    %69 = arith.mulf %57, %68 : vector<8x32xf32>
    %70 = arith.addf %66, %69 : vector<8x32xf32>
    %71 = math.tanh %70 : vector<8x32xf32>
    %cst_25 = arith.constant 1.000000e+00 : f32
    %72 = vector.broadcast %cst_25 : f32 to vector<8x32xf32>
    %73 = arith.subf %72, %65 : vector<8x32xf32>
    %74 = arith.mulf %73, %71 : vector<8x32xf32>
    %75 = arith.mulf %65, %46 : vector<8x32xf32>
    %76 = arith.addf %74, %75 : vector<8x32xf32>
    %c1 = arith.constant 1 : index
    %c0_26 = arith.constant 0 : index
    %c0_27 = arith.constant 0 : index
    %77 = vector.load %arg1[%c1, %c0_26, %c0_27] : memref<10x8x32xf32, #tpu.memory_space<vmem>>, vector<1x8x32xf32>
    %78 = vector.shape_cast %77 : vector<1x8x32xf32> to vector<8x32xf32>
    %cst_28 = arith.constant 0.000000e+00 : f32
    %79 = vector.broadcast %cst_28 : f32 to vector<8x32xf32>
    %80 = arith.cmpf one, %78, %79 : vector<8x32xf32>
    %81 = arith.select %80, %76, %46 : vector<8x32xi1>, vector<8x32xf32>
    %82 = vector.extract_strided_slice %11 {offsets = [16, 0], sizes = [8, 96], strides = [1, 1]} : vector<80x96xf32> to vector<8x96xf32>
    %83 = arith.truncf %81 : vector<8x32xf32> to vector<8x32xbf16>
    %cst_29 = arith.constant dense<0.000000e+00> : vector<8x96xf32>
    %84 = tpu.matmul %83, %4, %cst_29 {dimension_numbers = #tpu.dot_dimension_numbers<[1], [0], [0], [1], [0, 0, 1, 1], [], []>} : vector<8x32xbf16>, vector<32x96xbf16>, vector<8x96xf32> -> vector<8x96xf32>
    %85 = vector.extract_strided_slice %82 {offsets = [0, 0], sizes = [8, 32], strides = [1, 1]} : vector<8x96xf32> to vector<8x32xf32>
    %86 = vector.extract_strided_slice %84 {offsets = [0, 0], sizes = [8, 32], strides = [1, 1]} : vector<8x96xf32> to vector<8x32xf32>
    %87 = arith.addf %85, %86 : vector<8x32xf32>
    %88 = arith.negf %87 : vector<8x32xf32>
    %89 = math.exp %88 : vector<8x32xf32>
    %cst_30 = arith.constant 1.000000e+00 : f32
    %90 = vector.broadcast %cst_30 : f32 to vector<8x32xf32>
    %91 = arith.addf %90, %89 : vector<8x32xf32>
    %92 = arith.divf %90, %91 : vector<8x32xf32>
    %93 = vector.extract_strided_slice %82 {offsets = [0, 32], sizes = [8, 32], strides = [1, 1]} : vector<8x96xf32> to vector<8x32xf32>
    %94 = vector.extract_strided_slice %84 {offsets = [0, 32], sizes = [8, 32], strides = [1, 1]} : vector<8x96xf32> to vector<8x32xf32>
    %95 = arith.addf %93, %94 : vector<8x32xf32>
    %96 = arith.negf %95 : vector<8x32xf32>
    %97 = math.exp %96 : vector<8x32xf32>
    %cst_31 = arith.constant 1.000000e+00 : f32
    %98 = vector.broadcast %cst_31 : f32 to vector<8x32xf32>
    %99 = arith.addf %98, %97 : vector<8x32xf32>
    %100 = arith.divf %98, %99 : vector<8x32xf32>
    %101 = vector.extract_strided_slice %82 {offsets = [0, 64], sizes = [8, 32], strides = [1, 1]} : vector<8x96xf32> to vector<8x32xf32>
    %102 = vector.extract_strided_slice %84 {offsets = [0, 64], sizes = [8, 32], strides = [1, 1]} : vector<8x96xf32> to vector<8x32xf32>
    %103 = arith.addf %102, %5 : vector<8x32xf32>
    %104 = arith.mulf %92, %103 : vector<8x32xf32>
    %105 = arith.addf %101, %104 : vector<8x32xf32>
    %106 = math.tanh %105 : vector<8x32xf32>
    %cst_32 = arith.constant 1.000000e+00 : f32
    %107 = vector.broadcast %cst_32 : f32 to vector<8x32xf32>
    %108 = arith.subf %107, %100 : vector<8x32xf32>
    %109 = arith.mulf %108, %106 : vector<8x32xf32>
    %110 = arith.mulf %100, %81 : vector<8x32xf32>
    %111 = arith.addf %109, %110 : vector<8x32xf32>
    %c2 = arith.constant 2 : index
    %c0_33 = arith.constant 0 : index
    %c0_34 = arith.constant 0 : index
    %112 = vector.load %arg1[%c2, %c0_33, %c0_34] : memref<10x8x32xf32, #tpu.memory_space<vmem>>, vector<1x8x32xf32>
    %113 = vector.shape_cast %112 : vector<1x8x32xf32> to vector<8x32xf32>
    %cst_35 = arith.constant 0.000000e+00 : f32
    %114 = vector.broadcast %cst_35 : f32 to vector<8x32xf32>
    %115 = arith.cmpf one, %113, %114 : vector<8x32xf32>
    %116 = arith.select %115, %111, %81 : vector<8x32xi1>, vector<8x32xf32>
    %117 = vector.extract_strided_slice %11 {offsets = [24, 0], sizes = [8, 96], strides = [1, 1]} : vector<80x96xf32> to vector<8x96xf32>
    %118 = arith.truncf %116 : vector<8x32xf32> to vector<8x32xbf16>
    %cst_36 = arith.constant dense<0.000000e+00> : vector<8x96xf32>
    %119 = tpu.matmul %118, %4, %cst_36 {dimension_numbers = #tpu.dot_dimension_numbers<[1], [0], [0], [1], [0, 0, 1, 1], [], []>} : vector<8x32xbf16>, vector<32x96xbf16>, vector<8x96xf32> -> vector<8x96xf32>
    %120 = vector.extract_strided_slice %117 {offsets = [0, 0], sizes = [8, 32], strides = [1, 1]} : vector<8x96xf32> to vector<8x32xf32>
    %121 = vector.extract_strided_slice %119 {offsets = [0, 0], sizes = [8, 32], strides = [1, 1]} : vector<8x96xf32> to vector<8x32xf32>
    %122 = arith.addf %120, %121 : vector<8x32xf32>
    %123 = arith.negf %122 : vector<8x32xf32>
    %124 = math.exp %123 : vector<8x32xf32>
    %cst_37 = arith.constant 1.000000e+00 : f32
    %125 = vector.broadcast %cst_37 : f32 to vector<8x32xf32>
    %126 = arith.addf %125, %124 : vector<8x32xf32>
    %127 = arith.divf %125, %126 : vector<8x32xf32>
    %128 = vector.extract_strided_slice %117 {offsets = [0, 32], sizes = [8, 32], strides = [1, 1]} : vector<8x96xf32> to vector<8x32xf32>
    %129 = vector.extract_strided_slice %119 {offsets = [0, 32], sizes = [8, 32], strides = [1, 1]} : vector<8x96xf32> to vector<8x32xf32>
    %130 = arith.addf %128, %129 : vector<8x32xf32>
    %131 = arith.negf %130 : vector<8x32xf32>
    %132 = math.exp %131 : vector<8x32xf32>
    %cst_38 = arith.constant 1.000000e+00 : f32
    %133 = vector.broadcast %cst_38 : f32 to vector<8x32xf32>
    %134 = arith.addf %133, %132 : vector<8x32xf32>
    %135 = arith.divf %133, %134 : vector<8x32xf32>
    %136 = vector.extract_strided_slice %117 {offsets = [0, 64], sizes = [8, 32], strides = [1, 1]} : vector<8x96xf32> to vector<8x32xf32>
    %137 = vector.extract_strided_slice %119 {offsets = [0, 64], sizes = [8, 32], strides = [1, 1]} : vector<8x96xf32> to vector<8x32xf32>
    %138 = arith.addf %137, %5 : vector<8x32xf32>
    %139 = arith.mulf %127, %138 : vector<8x32xf32>
    %140 = arith.addf %136, %139 : vector<8x32xf32>
    %141 = math.tanh %140 : vector<8x32xf32>
    %cst_39 = arith.constant 1.000000e+00 : f32
    %142 = vector.broadcast %cst_39 : f32 to vector<8x32xf32>
    %143 = arith.subf %142, %135 : vector<8x32xf32>
    %144 = arith.mulf %143, %141 : vector<8x32xf32>
    %145 = arith.mulf %135, %116 : vector<8x32xf32>
    %146 = arith.addf %144, %145 : vector<8x32xf32>
    %c3 = arith.constant 3 : index
    %c0_40 = arith.constant 0 : index
    %c0_41 = arith.constant 0 : index
    %147 = vector.load %arg1[%c3, %c0_40, %c0_41] : memref<10x8x32xf32, #tpu.memory_space<vmem>>, vector<1x8x32xf32>
    %148 = vector.shape_cast %147 : vector<1x8x32xf32> to vector<8x32xf32>
    %cst_42 = arith.constant 0.000000e+00 : f32
    %149 = vector.broadcast %cst_42 : f32 to vector<8x32xf32>
    %150 = arith.cmpf one, %148, %149 : vector<8x32xf32>
    %151 = arith.select %150, %146, %116 : vector<8x32xi1>, vector<8x32xf32>
    %152 = vector.extract_strided_slice %11 {offsets = [32, 0], sizes = [8, 96], strides = [1, 1]} : vector<80x96xf32> to vector<8x96xf32>
    %153 = arith.truncf %151 : vector<8x32xf32> to vector<8x32xbf16>
    %cst_43 = arith.constant dense<0.000000e+00> : vector<8x96xf32>
    %154 = tpu.matmul %153, %4, %cst_43 {dimension_numbers = #tpu.dot_dimension_numbers<[1], [0], [0], [1], [0, 0, 1, 1], [], []>} : vector<8x32xbf16>, vector<32x96xbf16>, vector<8x96xf32> -> vector<8x96xf32>
    %155 = vector.extract_strided_slice %152 {offsets = [0, 0], sizes = [8, 32], strides = [1, 1]} : vector<8x96xf32> to vector<8x32xf32>
    %156 = vector.extract_strided_slice %154 {offsets = [0, 0], sizes = [8, 32], strides = [1, 1]} : vector<8x96xf32> to vector<8x32xf32>
    %157 = arith.addf %155, %156 : vector<8x32xf32>
    %158 = arith.negf %157 : vector<8x32xf32>
    %159 = math.exp %158 : vector<8x32xf32>
    %cst_44 = arith.constant 1.000000e+00 : f32
    %160 = vector.broadcast %cst_44 : f32 to vector<8x32xf32>
    %161 = arith.addf %160, %159 : vector<8x32xf32>
    %162 = arith.divf %160, %161 : vector<8x32xf32>
    %163 = vector.extract_strided_slice %152 {offsets = [0, 32], sizes = [8, 32], strides = [1, 1]} : vector<8x96xf32> to vector<8x32xf32>
    %164 = vector.extract_strided_slice %154 {offsets = [0, 32], sizes = [8, 32], strides = [1, 1]} : vector<8x96xf32> to vector<8x32xf32>
    %165 = arith.addf %163, %164 : vector<8x32xf32>
    %166 = arith.negf %165 : vector<8x32xf32>
    %167 = math.exp %166 : vector<8x32xf32>
    %cst_45 = arith.constant 1.000000e+00 : f32
    %168 = vector.broadcast %cst_45 : f32 to vector<8x32xf32>
    %169 = arith.addf %168, %167 : vector<8x32xf32>
    %170 = arith.divf %168, %169 : vector<8x32xf32>
    %171 = vector.extract_strided_slice %152 {offsets = [0, 64], sizes = [8, 32], strides = [1, 1]} : vector<8x96xf32> to vector<8x32xf32>
    %172 = vector.extract_strided_slice %154 {offsets = [0, 64], sizes = [8, 32], strides = [1, 1]} : vector<8x96xf32> to vector<8x32xf32>
    %173 = arith.addf %172, %5 : vector<8x32xf32>
    %174 = arith.mulf %162, %173 : vector<8x32xf32>
    %175 = arith.addf %171, %174 : vector<8x32xf32>
    %176 = math.tanh %175 : vector<8x32xf32>
    %cst_46 = arith.constant 1.000000e+00 : f32
    %177 = vector.broadcast %cst_46 : f32 to vector<8x32xf32>
    %178 = arith.subf %177, %170 : vector<8x32xf32>
    %179 = arith.mulf %178, %176 : vector<8x32xf32>
    %180 = arith.mulf %170, %151 : vector<8x32xf32>
    %181 = arith.addf %179, %180 : vector<8x32xf32>
    %c4 = arith.constant 4 : index
    %c0_47 = arith.constant 0 : index
    %c0_48 = arith.constant 0 : index
    %182 = vector.load %arg1[%c4, %c0_47, %c0_48] : memref<10x8x32xf32, #tpu.memory_space<vmem>>, vector<1x8x32xf32>
    %183 = vector.shape_cast %182 : vector<1x8x32xf32> to vector<8x32xf32>
    %cst_49 = arith.constant 0.000000e+00 : f32
    %184 = vector.broadcast %cst_49 : f32 to vector<8x32xf32>
    %185 = arith.cmpf one, %183, %184 : vector<8x32xf32>
    %186 = arith.select %185, %181, %151 : vector<8x32xi1>, vector<8x32xf32>
    %187 = vector.extract_strided_slice %11 {offsets = [40, 0], sizes = [8, 96], strides = [1, 1]} : vector<80x96xf32> to vector<8x96xf32>
    %188 = arith.truncf %186 : vector<8x32xf32> to vector<8x32xbf16>
    %cst_50 = arith.constant dense<0.000000e+00> : vector<8x96xf32>
    %189 = tpu.matmul %188, %4, %cst_50 {dimension_numbers = #tpu.dot_dimension_numbers<[1], [0], [0], [1], [0, 0, 1, 1], [], []>} : vector<8x32xbf16>, vector<32x96xbf16>, vector<8x96xf32> -> vector<8x96xf32>
    %190 = vector.extract_strided_slice %187 {offsets = [0, 0], sizes = [8, 32], strides = [1, 1]} : vector<8x96xf32> to vector<8x32xf32>
    %191 = vector.extract_strided_slice %189 {offsets = [0, 0], sizes = [8, 32], strides = [1, 1]} : vector<8x96xf32> to vector<8x32xf32>
    %192 = arith.addf %190, %191 : vector<8x32xf32>
    %193 = arith.negf %192 : vector<8x32xf32>
    %194 = math.exp %193 : vector<8x32xf32>
    %cst_51 = arith.constant 1.000000e+00 : f32
    %195 = vector.broadcast %cst_51 : f32 to vector<8x32xf32>
    %196 = arith.addf %195, %194 : vector<8x32xf32>
    %197 = arith.divf %195, %196 : vector<8x32xf32>
    %198 = vector.extract_strided_slice %187 {offsets = [0, 32], sizes = [8, 32], strides = [1, 1]} : vector<8x96xf32> to vector<8x32xf32>
    %199 = vector.extract_strided_slice %189 {offsets = [0, 32], sizes = [8, 32], strides = [1, 1]} : vector<8x96xf32> to vector<8x32xf32>
    %200 = arith.addf %198, %199 : vector<8x32xf32>
    %201 = arith.negf %200 : vector<8x32xf32>
    %202 = math.exp %201 : vector<8x32xf32>
    %cst_52 = arith.constant 1.000000e+00 : f32
    %203 = vector.broadcast %cst_52 : f32 to vector<8x32xf32>
    %204 = arith.addf %203, %202 : vector<8x32xf32>
    %205 = arith.divf %203, %204 : vector<8x32xf32>
    %206 = vector.extract_strided_slice %187 {offsets = [0, 64], sizes = [8, 32], strides = [1, 1]} : vector<8x96xf32> to vector<8x32xf32>
    %207 = vector.extract_strided_slice %189 {offsets = [0, 64], sizes = [8, 32], strides = [1, 1]} : vector<8x96xf32> to vector<8x32xf32>
    %208 = arith.addf %207, %5 : vector<8x32xf32>
    %209 = arith.mulf %197, %208 : vector<8x32xf32>
    %210 = arith.addf %206, %209 : vector<8x32xf32>
    %211 = math.tanh %210 : vector<8x32xf32>
    %cst_53 = arith.constant 1.000000e+00 : f32
    %212 = vector.broadcast %cst_53 : f32 to vector<8x32xf32>
    %213 = arith.subf %212, %205 : vector<8x32xf32>
    %214 = arith.mulf %213, %211 : vector<8x32xf32>
    %215 = arith.mulf %205, %186 : vector<8x32xf32>
    %216 = arith.addf %214, %215 : vector<8x32xf32>
    %c5 = arith.constant 5 : index
    %c0_54 = arith.constant 0 : index
    %c0_55 = arith.constant 0 : index
    %217 = vector.load %arg1[%c5, %c0_54, %c0_55] : memref<10x8x32xf32, #tpu.memory_space<vmem>>, vector<1x8x32xf32>
    %218 = vector.shape_cast %217 : vector<1x8x32xf32> to vector<8x32xf32>
    %cst_56 = arith.constant 0.000000e+00 : f32
    %219 = vector.broadcast %cst_56 : f32 to vector<8x32xf32>
    %220 = arith.cmpf one, %218, %219 : vector<8x32xf32>
    %221 = arith.select %220, %216, %186 : vector<8x32xi1>, vector<8x32xf32>
    %222 = vector.extract_strided_slice %11 {offsets = [48, 0], sizes = [8, 96], strides = [1, 1]} : vector<80x96xf32> to vector<8x96xf32>
    %223 = arith.truncf %221 : vector<8x32xf32> to vector<8x32xbf16>
    %cst_57 = arith.constant dense<0.000000e+00> : vector<8x96xf32>
    %224 = tpu.matmul %223, %4, %cst_57 {dimension_numbers = #tpu.dot_dimension_numbers<[1], [0], [0], [1], [0, 0, 1, 1], [], []>} : vector<8x32xbf16>, vector<32x96xbf16>, vector<8x96xf32> -> vector<8x96xf32>
    %225 = vector.extract_strided_slice %222 {offsets = [0, 0], sizes = [8, 32], strides = [1, 1]} : vector<8x96xf32> to vector<8x32xf32>
    %226 = vector.extract_strided_slice %224 {offsets = [0, 0], sizes = [8, 32], strides = [1, 1]} : vector<8x96xf32> to vector<8x32xf32>
    %227 = arith.addf %225, %226 : vector<8x32xf32>
    %228 = arith.negf %227 : vector<8x32xf32>
    %229 = math.exp %228 : vector<8x32xf32>
    %cst_58 = arith.constant 1.000000e+00 : f32
    %230 = vector.broadcast %cst_58 : f32 to vector<8x32xf32>
    %231 = arith.addf %230, %229 : vector<8x32xf32>
    %232 = arith.divf %230, %231 : vector<8x32xf32>
    %233 = vector.extract_strided_slice %222 {offsets = [0, 32], sizes = [8, 32], strides = [1, 1]} : vector<8x96xf32> to vector<8x32xf32>
    %234 = vector.extract_strided_slice %224 {offsets = [0, 32], sizes = [8, 32], strides = [1, 1]} : vector<8x96xf32> to vector<8x32xf32>
    %235 = arith.addf %233, %234 : vector<8x32xf32>
    %236 = arith.negf %235 : vector<8x32xf32>
    %237 = math.exp %236 : vector<8x32xf32>
    %cst_59 = arith.constant 1.000000e+00 : f32
    %238 = vector.broadcast %cst_59 : f32 to vector<8x32xf32>
    %239 = arith.addf %238, %237 : vector<8x32xf32>
    %240 = arith.divf %238, %239 : vector<8x32xf32>
    %241 = vector.extract_strided_slice %222 {offsets = [0, 64], sizes = [8, 32], strides = [1, 1]} : vector<8x96xf32> to vector<8x32xf32>
    %242 = vector.extract_strided_slice %224 {offsets = [0, 64], sizes = [8, 32], strides = [1, 1]} : vector<8x96xf32> to vector<8x32xf32>
    %243 = arith.addf %242, %5 : vector<8x32xf32>
    %244 = arith.mulf %232, %243 : vector<8x32xf32>
    %245 = arith.addf %241, %244 : vector<8x32xf32>
    %246 = math.tanh %245 : vector<8x32xf32>
    %cst_60 = arith.constant 1.000000e+00 : f32
    %247 = vector.broadcast %cst_60 : f32 to vector<8x32xf32>
    %248 = arith.subf %247, %240 : vector<8x32xf32>
    %249 = arith.mulf %248, %246 : vector<8x32xf32>
    %250 = arith.mulf %240, %221 : vector<8x32xf32>
    %251 = arith.addf %249, %250 : vector<8x32xf32>
    %c6 = arith.constant 6 : index
    %c0_61 = arith.constant 0 : index
    %c0_62 = arith.constant 0 : index
    %252 = vector.load %arg1[%c6, %c0_61, %c0_62] : memref<10x8x32xf32, #tpu.memory_space<vmem>>, vector<1x8x32xf32>
    %253 = vector.shape_cast %252 : vector<1x8x32xf32> to vector<8x32xf32>
    %cst_63 = arith.constant 0.000000e+00 : f32
    %254 = vector.broadcast %cst_63 : f32 to vector<8x32xf32>
    %255 = arith.cmpf one, %253, %254 : vector<8x32xf32>
    %256 = arith.select %255, %251, %221 : vector<8x32xi1>, vector<8x32xf32>
    %257 = vector.extract_strided_slice %11 {offsets = [56, 0], sizes = [8, 96], strides = [1, 1]} : vector<80x96xf32> to vector<8x96xf32>
    %258 = arith.truncf %256 : vector<8x32xf32> to vector<8x32xbf16>
    %cst_64 = arith.constant dense<0.000000e+00> : vector<8x96xf32>
    %259 = tpu.matmul %258, %4, %cst_64 {dimension_numbers = #tpu.dot_dimension_numbers<[1], [0], [0], [1], [0, 0, 1, 1], [], []>} : vector<8x32xbf16>, vector<32x96xbf16>, vector<8x96xf32> -> vector<8x96xf32>
    %260 = vector.extract_strided_slice %257 {offsets = [0, 0], sizes = [8, 32], strides = [1, 1]} : vector<8x96xf32> to vector<8x32xf32>
    %261 = vector.extract_strided_slice %259 {offsets = [0, 0], sizes = [8, 32], strides = [1, 1]} : vector<8x96xf32> to vector<8x32xf32>
    %262 = arith.addf %260, %261 : vector<8x32xf32>
    %263 = arith.negf %262 : vector<8x32xf32>
    %264 = math.exp %263 : vector<8x32xf32>
    %cst_65 = arith.constant 1.000000e+00 : f32
    %265 = vector.broadcast %cst_65 : f32 to vector<8x32xf32>
    %266 = arith.addf %265, %264 : vector<8x32xf32>
    %267 = arith.divf %265, %266 : vector<8x32xf32>
    %268 = vector.extract_strided_slice %257 {offsets = [0, 32], sizes = [8, 32], strides = [1, 1]} : vector<8x96xf32> to vector<8x32xf32>
    %269 = vector.extract_strided_slice %259 {offsets = [0, 32], sizes = [8, 32], strides = [1, 1]} : vector<8x96xf32> to vector<8x32xf32>
    %270 = arith.addf %268, %269 : vector<8x32xf32>
    %271 = arith.negf %270 : vector<8x32xf32>
    %272 = math.exp %271 : vector<8x32xf32>
    %cst_66 = arith.constant 1.000000e+00 : f32
    %273 = vector.broadcast %cst_66 : f32 to vector<8x32xf32>
    %274 = arith.addf %273, %272 : vector<8x32xf32>
    %275 = arith.divf %273, %274 : vector<8x32xf32>
    %276 = vector.extract_strided_slice %257 {offsets = [0, 64], sizes = [8, 32], strides = [1, 1]} : vector<8x96xf32> to vector<8x32xf32>
    %277 = vector.extract_strided_slice %259 {offsets = [0, 64], sizes = [8, 32], strides = [1, 1]} : vector<8x96xf32> to vector<8x32xf32>
    %278 = arith.addf %277, %5 : vector<8x32xf32>
    %279 = arith.mulf %267, %278 : vector<8x32xf32>
    %280 = arith.addf %276, %279 : vector<8x32xf32>
    %281 = math.tanh %280 : vector<8x32xf32>
    %cst_67 = arith.constant 1.000000e+00 : f32
    %282 = vector.broadcast %cst_67 : f32 to vector<8x32xf32>
    %283 = arith.subf %282, %275 : vector<8x32xf32>
    %284 = arith.mulf %283, %281 : vector<8x32xf32>
    %285 = arith.mulf %275, %256 : vector<8x32xf32>
    %286 = arith.addf %284, %285 : vector<8x32xf32>
    %c7 = arith.constant 7 : index
    %c0_68 = arith.constant 0 : index
    %c0_69 = arith.constant 0 : index
    %287 = vector.load %arg1[%c7, %c0_68, %c0_69] : memref<10x8x32xf32, #tpu.memory_space<vmem>>, vector<1x8x32xf32>
    %288 = vector.shape_cast %287 : vector<1x8x32xf32> to vector<8x32xf32>
    %cst_70 = arith.constant 0.000000e+00 : f32
    %289 = vector.broadcast %cst_70 : f32 to vector<8x32xf32>
    %290 = arith.cmpf one, %288, %289 : vector<8x32xf32>
    %291 = arith.select %290, %286, %256 : vector<8x32xi1>, vector<8x32xf32>
    %292 = vector.extract_strided_slice %11 {offsets = [64, 0], sizes = [8, 96], strides = [1, 1]} : vector<80x96xf32> to vector<8x96xf32>
    %293 = arith.truncf %291 : vector<8x32xf32> to vector<8x32xbf16>
    %cst_71 = arith.constant dense<0.000000e+00> : vector<8x96xf32>
    %294 = tpu.matmul %293, %4, %cst_71 {dimension_numbers = #tpu.dot_dimension_numbers<[1], [0], [0], [1], [0, 0, 1, 1], [], []>} : vector<8x32xbf16>, vector<32x96xbf16>, vector<8x96xf32> -> vector<8x96xf32>
    %295 = vector.extract_strided_slice %292 {offsets = [0, 0], sizes = [8, 32], strides = [1, 1]} : vector<8x96xf32> to vector<8x32xf32>
    %296 = vector.extract_strided_slice %294 {offsets = [0, 0], sizes = [8, 32], strides = [1, 1]} : vector<8x96xf32> to vector<8x32xf32>
    %297 = arith.addf %295, %296 : vector<8x32xf32>
    %298 = arith.negf %297 : vector<8x32xf32>
    %299 = math.exp %298 : vector<8x32xf32>
    %cst_72 = arith.constant 1.000000e+00 : f32
    %300 = vector.broadcast %cst_72 : f32 to vector<8x32xf32>
    %301 = arith.addf %300, %299 : vector<8x32xf32>
    %302 = arith.divf %300, %301 : vector<8x32xf32>
    %303 = vector.extract_strided_slice %292 {offsets = [0, 32], sizes = [8, 32], strides = [1, 1]} : vector<8x96xf32> to vector<8x32xf32>
    %304 = vector.extract_strided_slice %294 {offsets = [0, 32], sizes = [8, 32], strides = [1, 1]} : vector<8x96xf32> to vector<8x32xf32>
    %305 = arith.addf %303, %304 : vector<8x32xf32>
    %306 = arith.negf %305 : vector<8x32xf32>
    %307 = math.exp %306 : vector<8x32xf32>
    %cst_73 = arith.constant 1.000000e+00 : f32
    %308 = vector.broadcast %cst_73 : f32 to vector<8x32xf32>
    %309 = arith.addf %308, %307 : vector<8x32xf32>
    %310 = arith.divf %308, %309 : vector<8x32xf32>
    %311 = vector.extract_strided_slice %292 {offsets = [0, 64], sizes = [8, 32], strides = [1, 1]} : vector<8x96xf32> to vector<8x32xf32>
    %312 = vector.extract_strided_slice %294 {offsets = [0, 64], sizes = [8, 32], strides = [1, 1]} : vector<8x96xf32> to vector<8x32xf32>
    %313 = arith.addf %312, %5 : vector<8x32xf32>
    %314 = arith.mulf %302, %313 : vector<8x32xf32>
    %315 = arith.addf %311, %314 : vector<8x32xf32>
    %316 = math.tanh %315 : vector<8x32xf32>
    %cst_74 = arith.constant 1.000000e+00 : f32
    %317 = vector.broadcast %cst_74 : f32 to vector<8x32xf32>
    %318 = arith.subf %317, %310 : vector<8x32xf32>
    %319 = arith.mulf %318, %316 : vector<8x32xf32>
    %320 = arith.mulf %310, %291 : vector<8x32xf32>
    %321 = arith.addf %319, %320 : vector<8x32xf32>
    %c8 = arith.constant 8 : index
    %c0_75 = arith.constant 0 : index
    %c0_76 = arith.constant 0 : index
    %322 = vector.load %arg1[%c8, %c0_75, %c0_76] : memref<10x8x32xf32, #tpu.memory_space<vmem>>, vector<1x8x32xf32>
    %323 = vector.shape_cast %322 : vector<1x8x32xf32> to vector<8x32xf32>
    %cst_77 = arith.constant 0.000000e+00 : f32
    %324 = vector.broadcast %cst_77 : f32 to vector<8x32xf32>
    %325 = arith.cmpf one, %323, %324 : vector<8x32xf32>
    %326 = arith.select %325, %321, %291 : vector<8x32xi1>, vector<8x32xf32>
    %327 = vector.extract_strided_slice %11 {offsets = [72, 0], sizes = [8, 96], strides = [1, 1]} : vector<80x96xf32> to vector<8x96xf32>
    %328 = arith.truncf %326 : vector<8x32xf32> to vector<8x32xbf16>
    %cst_78 = arith.constant dense<0.000000e+00> : vector<8x96xf32>
    %329 = tpu.matmul %328, %4, %cst_78 {dimension_numbers = #tpu.dot_dimension_numbers<[1], [0], [0], [1], [0, 0, 1, 1], [], []>} : vector<8x32xbf16>, vector<32x96xbf16>, vector<8x96xf32> -> vector<8x96xf32>
    %330 = vector.extract_strided_slice %327 {offsets = [0, 0], sizes = [8, 32], strides = [1, 1]} : vector<8x96xf32> to vector<8x32xf32>
    %331 = vector.extract_strided_slice %329 {offsets = [0, 0], sizes = [8, 32], strides = [1, 1]} : vector<8x96xf32> to vector<8x32xf32>
    %332 = arith.addf %330, %331 : vector<8x32xf32>
    %333 = arith.negf %332 : vector<8x32xf32>
    %334 = math.exp %333 : vector<8x32xf32>
    %cst_79 = arith.constant 1.000000e+00 : f32
    %335 = vector.broadcast %cst_79 : f32 to vector<8x32xf32>
    %336 = arith.addf %335, %334 : vector<8x32xf32>
    %337 = arith.divf %335, %336 : vector<8x32xf32>
    %338 = vector.extract_strided_slice %327 {offsets = [0, 32], sizes = [8, 32], strides = [1, 1]} : vector<8x96xf32> to vector<8x32xf32>
    %339 = vector.extract_strided_slice %329 {offsets = [0, 32], sizes = [8, 32], strides = [1, 1]} : vector<8x96xf32> to vector<8x32xf32>
    %340 = arith.addf %338, %339 : vector<8x32xf32>
    %341 = arith.negf %340 : vector<8x32xf32>
    %342 = math.exp %341 : vector<8x32xf32>
    %cst_80 = arith.constant 1.000000e+00 : f32
    %343 = vector.broadcast %cst_80 : f32 to vector<8x32xf32>
    %344 = arith.addf %343, %342 : vector<8x32xf32>
    %345 = arith.divf %343, %344 : vector<8x32xf32>
    %346 = vector.extract_strided_slice %327 {offsets = [0, 64], sizes = [8, 32], strides = [1, 1]} : vector<8x96xf32> to vector<8x32xf32>
    %347 = vector.extract_strided_slice %329 {offsets = [0, 64], sizes = [8, 32], strides = [1, 1]} : vector<8x96xf32> to vector<8x32xf32>
    %348 = arith.addf %347, %5 : vector<8x32xf32>
    %349 = arith.mulf %337, %348 : vector<8x32xf32>
    %350 = arith.addf %346, %349 : vector<8x32xf32>
    %351 = math.tanh %350 : vector<8x32xf32>
    %cst_81 = arith.constant 1.000000e+00 : f32
    %352 = vector.broadcast %cst_81 : f32 to vector<8x32xf32>
    %353 = arith.subf %352, %345 : vector<8x32xf32>
    %354 = arith.mulf %353, %351 : vector<8x32xf32>
    %355 = arith.mulf %345, %326 : vector<8x32xf32>
    %356 = arith.addf %354, %355 : vector<8x32xf32>
    %c9 = arith.constant 9 : index
    %c0_82 = arith.constant 0 : index
    %c0_83 = arith.constant 0 : index
    %357 = vector.load %arg1[%c9, %c0_82, %c0_83] : memref<10x8x32xf32, #tpu.memory_space<vmem>>, vector<1x8x32xf32>
    %358 = vector.shape_cast %357 : vector<1x8x32xf32> to vector<8x32xf32>
    %cst_84 = arith.constant 0.000000e+00 : f32
    %359 = vector.broadcast %cst_84 : f32 to vector<8x32xf32>
    %360 = arith.cmpf one, %358, %359 : vector<8x32xf32>
    %361 = arith.select %360, %356, %326 : vector<8x32xi1>, vector<8x32xf32>
    %c0_85 = arith.constant 0 : index
    %c0_86 = arith.constant 0 : index
    %362 = vector.load %arg11[%c0_85, %c0_86] : memref<128x128xbf16, #tpu.memory_space<vmem>>, vector<128x128xbf16>
    %c0_87 = arith.constant 0 : index
    %c0_88 = arith.constant 0 : index
    %363 = vector.load %arg12[%c0_87, %c0_88] : memref<32x256xbf16, #tpu.memory_space<vmem>>, vector<32x256xbf16>
    %c0_89 = arith.constant 0 : index
    %c0_90 = arith.constant 0 : index
    %364 = vector.load %arg8[%c0_89, %c0_90] : memref<8x96xf32, #tpu.memory_space<vmem>>, vector<8x96xf32>
    %c0_91 = arith.constant 0 : index
    %c0_92 = arith.constant 0 : index
    %365 = vector.load %arg9[%c0_91, %c0_92] : memref<8x96xf32, #tpu.memory_space<vmem>>, vector<8x96xf32>
    %c0_93 = arith.constant 0 : index
    %c0_94 = arith.constant 0 : index
    %366 = vector.load %arg10[%c0_93, %c0_94] : memref<8x32xf32, #tpu.memory_space<vmem>>, vector<8x32xf32>
    %c0_95 = arith.constant 0 : index
    %c0_96 = arith.constant 0 : index
    %367 = vector.load %arg13[%c0_95, %c0_96] : memref<8x128xf32, #tpu.memory_space<vmem>>, vector<8x128xf32>
    %c0_97 = arith.constant 0 : index
    %c0_98 = arith.constant 0 : index
    %368 = vector.load %arg14[%c0_97, %c0_98] : memref<8x32xf32, #tpu.memory_space<vmem>>, vector<8x32xf32>
    %c0_99 = arith.constant 0 : index
    %c0_100 = arith.constant 0 : index
    %369 = vector.load %arg15[%c0_99, %c0_100] : memref<32x1xbf16, #tpu.memory_space<vmem>>, vector<32x1xbf16>
    %c0_101 = arith.constant 0 : index
    %c0_102 = arith.constant 0 : index
    %370 = vector.load %arg16[%c0_101, %c0_102] : memref<8x1xf32, #tpu.memory_space<vmem>>, vector<8x1xf32>
    %371 = tpu.iota {dimensions = array<i32: 1>} : vector<8x128xi32>
    %372 = arith.truncf %361 : vector<8x32xf32> to vector<8x32xbf16>
    %cst_103 = arith.constant dense<0.000000e+00> : vector<8x256xf32>
    %373 = tpu.matmul %372, %363, %cst_103 {dimension_numbers = #tpu.dot_dimension_numbers<[1], [0], [0], [1], [0, 0, 1, 1], [], []>} : vector<8x32xbf16>, vector<32x256xbf16>, vector<8x256xf32> -> vector<8x256xf32>
    %374 = vector.extract_strided_slice %373 {offsets = [0, 128], sizes = [8, 96], strides = [1, 1]} : vector<8x256xf32> to vector<8x96xf32>
    %c0_104 = arith.constant 0 : index
    %c0_105 = arith.constant 0 : index
    %375 = vector.load %arg2[%c0_104, %c0_105] : memref<8x128xbf16, #tpu.memory_space<vmem>>, vector<8x128xbf16>
    %cst_106 = arith.constant dense<0.000000e+00> : vector<8x128xf32>
    %376 = tpu.matmul %375, %362, %cst_106 {dimension_numbers = #tpu.dot_dimension_numbers<[1], [0], [0], [1], [0, 0, 1, 1], [], []>} : vector<8x128xbf16>, vector<128x128xbf16>, vector<8x128xf32> -> vector<8x128xf32>
    %377 = vector.extract_strided_slice %376 {offsets = [0, 0], sizes = [8, 96], strides = [1, 1]} : vector<8x128xf32> to vector<8x96xf32>
    %c0_107 = arith.constant 0 : index
    %c0_108 = arith.constant 0 : index
    %378 = vector.load %arg3[%c0_107, %c0_108] : memref<8x1xf32, #tpu.memory_space<vmem>>, vector<8x1xf32>
    %cst_109 = arith.constant 0.000000e+00 : f32
    %379 = vector.broadcast %cst_109 : f32 to vector<8x1xf32>
    %380 = vector.broadcast %378 : vector<8x1xf32> to vector<8x96xf32>
    %381 = arith.mulf %380, %364 : vector<8x96xf32>
    %382 = arith.addf %377, %381 : vector<8x96xf32>
    %383 = arith.addf %382, %365 : vector<8x96xf32>
    %384 = vector.extract_strided_slice %383 {offsets = [0, 0], sizes = [8, 32], strides = [1, 1]} : vector<8x96xf32> to vector<8x32xf32>
    %385 = vector.extract_strided_slice %374 {offsets = [0, 0], sizes = [8, 32], strides = [1, 1]} : vector<8x96xf32> to vector<8x32xf32>
    %386 = arith.addf %384, %385 : vector<8x32xf32>
    %387 = arith.negf %386 : vector<8x32xf32>
    %388 = math.exp %387 : vector<8x32xf32>
    %cst_110 = arith.constant 1.000000e+00 : f32
    %389 = vector.broadcast %cst_110 : f32 to vector<8x32xf32>
    %390 = arith.addf %389, %388 : vector<8x32xf32>
    %391 = arith.divf %389, %390 : vector<8x32xf32>
    %392 = vector.extract_strided_slice %383 {offsets = [0, 32], sizes = [8, 32], strides = [1, 1]} : vector<8x96xf32> to vector<8x32xf32>
    %393 = vector.extract_strided_slice %374 {offsets = [0, 32], sizes = [8, 32], strides = [1, 1]} : vector<8x96xf32> to vector<8x32xf32>
    %394 = arith.addf %392, %393 : vector<8x32xf32>
    %395 = arith.negf %394 : vector<8x32xf32>
    %396 = math.exp %395 : vector<8x32xf32>
    %cst_111 = arith.constant 1.000000e+00 : f32
    %397 = vector.broadcast %cst_111 : f32 to vector<8x32xf32>
    %398 = arith.addf %397, %396 : vector<8x32xf32>
    %399 = arith.divf %397, %398 : vector<8x32xf32>
    %400 = vector.extract_strided_slice %383 {offsets = [0, 64], sizes = [8, 32], strides = [1, 1]} : vector<8x96xf32> to vector<8x32xf32>
    %401 = vector.extract_strided_slice %374 {offsets = [0, 64], sizes = [8, 32], strides = [1, 1]} : vector<8x96xf32> to vector<8x32xf32>
    %402 = arith.addf %401, %366 : vector<8x32xf32>
    %403 = arith.mulf %391, %402 : vector<8x32xf32>
    %404 = arith.addf %400, %403 : vector<8x32xf32>
    %405 = math.tanh %404 : vector<8x32xf32>
    %cst_112 = arith.constant 1.000000e+00 : f32
    %406 = vector.broadcast %cst_112 : f32 to vector<8x32xf32>
    %407 = arith.subf %406, %399 : vector<8x32xf32>
    %408 = arith.mulf %407, %405 : vector<8x32xf32>
    %409 = arith.mulf %399, %361 : vector<8x32xf32>
    %410 = arith.addf %408, %409 : vector<8x32xf32>
    %411 = arith.truncf %410 : vector<8x32xf32> to vector<8x32xbf16>
    %cst_113 = arith.constant dense<0.000000e+00> : vector<8x256xf32>
    %412 = tpu.matmul %411, %363, %cst_113 {dimension_numbers = #tpu.dot_dimension_numbers<[1], [0], [0], [1], [0, 0, 1, 1], [], []>} : vector<8x32xbf16>, vector<32x256xbf16>, vector<8x256xf32> -> vector<8x256xf32>
    %413 = vector.extract_strided_slice %412 {offsets = [0, 0], sizes = [8, 128], strides = [1, 1]} : vector<8x256xf32> to vector<8x128xf32>
    %414 = arith.addf %413, %367 : vector<8x128xf32>
    %415 = vector.extract_strided_slice %412 {offsets = [0, 128], sizes = [8, 96], strides = [1, 1]} : vector<8x256xf32> to vector<8x96xf32>
    %416 = vector.extract_strided_slice %412 {offsets = [0, 224], sizes = [8, 32], strides = [1, 1]} : vector<8x256xf32> to vector<8x32xf32>
    %cst_114 = arith.constant dense<0xFF800000> : vector<8xf32>
    %417 = vector.multi_reduction <maximumf>, %414, %cst_114 [1] : vector<8x128xf32> to vector<8xf32>
    %418 = vector.shape_cast %417 : vector<8xf32> to vector<8x1xf32>
    %419 = vector.broadcast %418 : vector<8x1xf32> to vector<8x128xf32>
    %420 = arith.cmpf oge, %414, %419 : vector<8x128xf32>
    %c128_i32 = arith.constant 128 : i32
    %421 = vector.broadcast %c128_i32 : i32 to vector<8x128xi32>
    %422 = arith.select %420, %371, %421 : vector<8x128xi1>, vector<8x128xi32>
    %cst_115 = arith.constant dense<2147483647> : vector<8xi32>
    %423 = vector.multi_reduction <minsi>, %422, %cst_115 [1] : vector<8x128xi32> to vector<8xi32>
    %424 = vector.shape_cast %423 : vector<8xi32> to vector<8x1xi32>
    %425 = vector.broadcast %424 : vector<8x1xi32> to vector<8x128xi32>
    %426 = arith.cmpi eq, %371, %425 : vector<8x128xi32>
    %427 = arith.extui %426 : vector<8x128xi1> to vector<8x128xi32>
    %428 = arith.sitofp %427 : vector<8x128xi32> to vector<8x128xf32>
    %429 = arith.truncf %428 : vector<8x128xf32> to vector<8x128xbf16>
    %cst_116 = arith.constant dense<0.000000e+00> : vector<8x128xf32>
    %430 = tpu.matmul %429, %362, %cst_116 {dimension_numbers = #tpu.dot_dimension_numbers<[1], [0], [0], [1], [0, 0, 1, 1], [], []>} : vector<8x128xbf16>, vector<128x128xbf16>, vector<8x128xf32> -> vector<8x128xf32>
    %431 = vector.extract_strided_slice %430 {offsets = [0, 0], sizes = [8, 96], strides = [1, 1]} : vector<8x128xf32> to vector<8x96xf32>
    %432 = vector.extract_strided_slice %430 {offsets = [0, 96], sizes = [8, 32], strides = [1, 1]} : vector<8x128xf32> to vector<8x32xf32>
    %433 = arith.addf %432, %416 : vector<8x32xf32>
    %434 = arith.addf %433, %368 : vector<8x32xf32>
    %cst_117 = arith.constant 0.000000e+00 : f32
    %435 = vector.broadcast %cst_117 : f32 to vector<8x32xf32>
    %436 = arith.maximumf %434, %435 : vector<8x32xf32>
    %437 = arith.truncf %436 : vector<8x32xf32> to vector<8x32xbf16>
    %cst_118 = arith.constant dense<0.000000e+00> : vector<8x1xf32>
    %438 = tpu.matmul %437, %369, %cst_118 {dimension_numbers = #tpu.dot_dimension_numbers<[1], [0], [0], [1], [0, 0, 1, 1], [], []>} : vector<8x32xbf16>, vector<32x1xbf16>, vector<8x1xf32> -> vector<8x1xf32>
    %439 = arith.addf %438, %370 : vector<8x1xf32>
    %440 = arith.negf %439 : vector<8x1xf32>
    %441 = math.exp %440 : vector<8x1xf32>
    %cst_119 = arith.constant 1.000000e+00 : f32
    %442 = vector.broadcast %cst_119 : f32 to vector<8x1xf32>
    %443 = arith.addf %442, %441 : vector<8x1xf32>
    %444 = arith.divf %442, %443 : vector<8x1xf32>
    %445 = vector.broadcast %418 : vector<8x1xf32> to vector<8x128xf32>
    %446 = arith.subf %414, %445 : vector<8x128xf32>
    %447 = math.exp %446 : vector<8x128xf32>
    %cst_120 = arith.constant dense<0.000000e+00> : vector<8xf32>
    %448 = vector.multi_reduction <add>, %447, %cst_120 [1] : vector<8x128xf32> to vector<8xf32>
    %449 = vector.shape_cast %448 : vector<8xf32> to vector<8x1xf32>
    %450 = math.log %449 : vector<8x1xf32>
    %451 = vector.broadcast %450 : vector<8x1xf32> to vector<8x128xf32>
    %452 = arith.subf %446, %451 : vector<8x128xf32>
    %c1_121 = arith.constant 1 : index
    %c0_122 = arith.constant 0 : index
    %c0_123 = arith.constant 0 : index
    %453 = vector.load %arg17[%c1_121, %c0_122, %c0_123] : memref<6x8x128xf32, #tpu.memory_space<vmem>>, vector<1x8x128xf32>
    %454 = vector.shape_cast %453 : vector<1x8x128xf32> to vector<8x128xf32>
    %455 = vector.shape_cast %452 : vector<8x128xf32> to vector<1x8x128xf32>
    tpu.vector_store %arg17[%c1_121, %c0_122, %c0_123], %455 {strides = array<i32>} : memref<6x8x128xf32, #tpu.memory_space<vmem>>, vector<1x8x128xf32>,
    %456 = vector.broadcast %444 : vector<8x1xf32> to vector<8x96xf32>
    %457 = arith.mulf %456, %364 : vector<8x96xf32>
    %458 = arith.addf %431, %457 : vector<8x96xf32>
    %459 = arith.addf %458, %365 : vector<8x96xf32>
    %460 = vector.extract_strided_slice %459 {offsets = [0, 0], sizes = [8, 32], strides = [1, 1]} : vector<8x96xf32> to vector<8x32xf32>
    %461 = vector.extract_strided_slice %415 {offsets = [0, 0], sizes = [8, 32], strides = [1, 1]} : vector<8x96xf32> to vector<8x32xf32>
    %462 = arith.addf %460, %461 : vector<8x32xf32>
    %463 = arith.negf %462 : vector<8x32xf32>
    %464 = math.exp %463 : vector<8x32xf32>
    %cst_124 = arith.constant 1.000000e+00 : f32
    %465 = vector.broadcast %cst_124 : f32 to vector<8x32xf32>
    %466 = arith.addf %465, %464 : vector<8x32xf32>
    %467 = arith.divf %465, %466 : vector<8x32xf32>
    %468 = vector.extract_strided_slice %459 {offsets = [0, 32], sizes = [8, 32], strides = [1, 1]} : vector<8x96xf32> to vector<8x32xf32>
    %469 = vector.extract_strided_slice %415 {offsets = [0, 32], sizes = [8, 32], strides = [1, 1]} : vector<8x96xf32> to vector<8x32xf32>
    %470 = arith.addf %468, %469 : vector<8x32xf32>
    %471 = arith.negf %470 : vector<8x32xf32>
    %472 = math.exp %471 : vector<8x32xf32>
    %cst_125 = arith.constant 1.000000e+00 : f32
    %473 = vector.broadcast %cst_125 : f32 to vector<8x32xf32>
    %474 = arith.addf %473, %472 : vector<8x32xf32>
    %475 = arith.divf %473, %474 : vector<8x32xf32>
    %476 = vector.extract_strided_slice %459 {offsets = [0, 64], sizes = [8, 32], strides = [1, 1]} : vector<8x96xf32> to vector<8x32xf32>
    %477 = vector.extract_strided_slice %415 {offsets = [0, 64], sizes = [8, 32], strides = [1, 1]} : vector<8x96xf32> to vector<8x32xf32>
    %478 = arith.addf %477, %366 : vector<8x32xf32>
    %479 = arith.mulf %467, %478 : vector<8x32xf32>
    %480 = arith.addf %476, %479 : vector<8x32xf32>
    %481 = math.tanh %480 : vector<8x32xf32>
    %cst_126 = arith.constant 1.000000e+00 : f32
    %482 = vector.broadcast %cst_126 : f32 to vector<8x32xf32>
    %483 = arith.subf %482, %475 : vector<8x32xf32>
    %484 = arith.mulf %483, %481 : vector<8x32xf32>
    %485 = arith.mulf %475, %410 : vector<8x32xf32>
    %486 = arith.addf %484, %485 : vector<8x32xf32>
    %487 = arith.truncf %486 : vector<8x32xf32> to vector<8x32xbf16>
    %cst_127 = arith.constant dense<0.000000e+00> : vector<8x256xf32>
    %488 = tpu.matmul %487, %363, %cst_127 {dimension_numbers = #tpu.dot_dimension_numbers<[1], [0], [0], [1], [0, 0, 1, 1], [], []>} : vector<8x32xbf16>, vector<32x256xbf16>, vector<8x256xf32> -> vector<8x256xf32>
    %489 = vector.extract_strided_slice %488 {offsets = [0, 0], sizes = [8, 128], strides = [1, 1]} : vector<8x256xf32> to vector<8x128xf32>
    %490 = arith.addf %489, %367 : vector<8x128xf32>
    %491 = vector.extract_strided_slice %488 {offsets = [0, 128], sizes = [8, 96], strides = [1, 1]} : vector<8x256xf32> to vector<8x96xf32>
    %492 = vector.extract_strided_slice %488 {offsets = [0, 224], sizes = [8, 32], strides = [1, 1]} : vector<8x256xf32> to vector<8x32xf32>
    %cst_128 = arith.constant dense<0xFF800000> : vector<8xf32>
    %493 = vector.multi_reduction <maximumf>, %490, %cst_128 [1] : vector<8x128xf32> to vector<8xf32>
    %494 = vector.shape_cast %493 : vector<8xf32> to vector<8x1xf32>
    %495 = vector.broadcast %494 : vector<8x1xf32> to vector<8x128xf32>
    %496 = arith.cmpf oge, %490, %495 : vector<8x128xf32>
    %c128_i32_129 = arith.constant 128 : i32
    %497 = vector.broadcast %c128_i32_129 : i32 to vector<8x128xi32>
    %498 = arith.select %496, %371, %497 : vector<8x128xi1>, vector<8x128xi32>
    %cst_130 = arith.constant dense<2147483647> : vector<8xi32>
    %499 = vector.multi_reduction <minsi>, %498, %cst_130 [1] : vector<8x128xi32> to vector<8xi32>
    %500 = vector.shape_cast %499 : vector<8xi32> to vector<8x1xi32>
    %501 = vector.broadcast %500 : vector<8x1xi32> to vector<8x128xi32>
    %502 = arith.cmpi eq, %371, %501 : vector<8x128xi32>
    %503 = arith.extui %502 : vector<8x128xi1> to vector<8x128xi32>
    %504 = arith.sitofp %503 : vector<8x128xi32> to vector<8x128xf32>
    %505 = arith.truncf %504 : vector<8x128xf32> to vector<8x128xbf16>
    %cst_131 = arith.constant dense<0.000000e+00> : vector<8x128xf32>
    %506 = tpu.matmul %505, %362, %cst_131 {dimension_numbers = #tpu.dot_dimension_numbers<[1], [0], [0], [1], [0, 0, 1, 1], [], []>} : vector<8x128xbf16>, vector<128x128xbf16>, vector<8x128xf32> -> vector<8x128xf32>
    %507 = vector.extract_strided_slice %506 {offsets = [0, 0], sizes = [8, 96], strides = [1, 1]} : vector<8x128xf32> to vector<8x96xf32>
    %508 = vector.extract_strided_slice %506 {offsets = [0, 96], sizes = [8, 32], strides = [1, 1]} : vector<8x128xf32> to vector<8x32xf32>
    %509 = arith.addf %508, %492 : vector<8x32xf32>
    %510 = arith.addf %509, %368 : vector<8x32xf32>
    %cst_132 = arith.constant 0.000000e+00 : f32
    %511 = vector.broadcast %cst_132 : f32 to vector<8x32xf32>
    %512 = arith.maximumf %510, %511 : vector<8x32xf32>
    %513 = arith.truncf %512 : vector<8x32xf32> to vector<8x32xbf16>
    %cst_133 = arith.constant dense<0.000000e+00> : vector<8x1xf32>
    %514 = tpu.matmul %513, %369, %cst_133 {dimension_numbers = #tpu.dot_dimension_numbers<[1], [0], [0], [1], [0, 0, 1, 1], [], []>} : vector<8x32xbf16>, vector<32x1xbf16>, vector<8x1xf32> -> vector<8x1xf32>
    %515 = arith.addf %514, %370 : vector<8x1xf32>
    %516 = arith.negf %515 : vector<8x1xf32>
    %517 = math.exp %516 : vector<8x1xf32>
    %cst_134 = arith.constant 1.000000e+00 : f32
    %518 = vector.broadcast %cst_134 : f32 to vector<8x1xf32>
    %519 = arith.addf %518, %517 : vector<8x1xf32>
    %520 = arith.divf %518, %519 : vector<8x1xf32>
    %521 = vector.broadcast %494 : vector<8x1xf32> to vector<8x128xf32>
    %522 = arith.subf %490, %521 : vector<8x128xf32>
    %523 = math.exp %522 : vector<8x128xf32>
    %cst_135 = arith.constant dense<0.000000e+00> : vector<8xf32>
    %524 = vector.multi_reduction <add>, %523, %cst_135 [1] : vector<8x128xf32> to vector<8xf32>
    %525 = vector.shape_cast %524 : vector<8xf32> to vector<8x1xf32>
    %526 = math.log %525 : vector<8x1xf32>
    %527 = vector.broadcast %526 : vector<8x1xf32> to vector<8x128xf32>
    %528 = arith.subf %522, %527 : vector<8x128xf32>
    %c2_136 = arith.constant 2 : index
    %c0_137 = arith.constant 0 : index
    %c0_138 = arith.constant 0 : index
    %529 = vector.load %arg17[%c2_136, %c0_137, %c0_138] : memref<6x8x128xf32, #tpu.memory_space<vmem>>, vector<1x8x128xf32>
    %530 = vector.shape_cast %529 : vector<1x8x128xf32> to vector<8x128xf32>
    %531 = vector.shape_cast %528 : vector<8x128xf32> to vector<1x8x128xf32>
    tpu.vector_store %arg17[%c2_136, %c0_137, %c0_138], %531 {strides = array<i32>} : memref<6x8x128xf32, #tpu.memory_space<vmem>>, vector<1x8x128xf32>,
    %532 = vector.broadcast %520 : vector<8x1xf32> to vector<8x96xf32>
    %533 = arith.mulf %532, %364 : vector<8x96xf32>
    %534 = arith.addf %507, %533 : vector<8x96xf32>
    %535 = arith.addf %534, %365 : vector<8x96xf32>
    %536 = vector.extract_strided_slice %535 {offsets = [0, 0], sizes = [8, 32], strides = [1, 1]} : vector<8x96xf32> to vector<8x32xf32>
    %537 = vector.extract_strided_slice %491 {offsets = [0, 0], sizes = [8, 32], strides = [1, 1]} : vector<8x96xf32> to vector<8x32xf32>
    %538 = arith.addf %536, %537 : vector<8x32xf32>
    %539 = arith.negf %538 : vector<8x32xf32>
    %540 = math.exp %539 : vector<8x32xf32>
    %cst_139 = arith.constant 1.000000e+00 : f32
    %541 = vector.broadcast %cst_139 : f32 to vector<8x32xf32>
    %542 = arith.addf %541, %540 : vector<8x32xf32>
    %543 = arith.divf %541, %542 : vector<8x32xf32>
    %544 = vector.extract_strided_slice %535 {offsets = [0, 32], sizes = [8, 32], strides = [1, 1]} : vector<8x96xf32> to vector<8x32xf32>
    %545 = vector.extract_strided_slice %491 {offsets = [0, 32], sizes = [8, 32], strides = [1, 1]} : vector<8x96xf32> to vector<8x32xf32>
    %546 = arith.addf %544, %545 : vector<8x32xf32>
    %547 = arith.negf %546 : vector<8x32xf32>
    %548 = math.exp %547 : vector<8x32xf32>
    %cst_140 = arith.constant 1.000000e+00 : f32
    %549 = vector.broadcast %cst_140 : f32 to vector<8x32xf32>
    %550 = arith.addf %549, %548 : vector<8x32xf32>
    %551 = arith.divf %549, %550 : vector<8x32xf32>
    %552 = vector.extract_strided_slice %535 {offsets = [0, 64], sizes = [8, 32], strides = [1, 1]} : vector<8x96xf32> to vector<8x32xf32>
    %553 = vector.extract_strided_slice %491 {offsets = [0, 64], sizes = [8, 32], strides = [1, 1]} : vector<8x96xf32> to vector<8x32xf32>
    %554 = arith.addf %553, %366 : vector<8x32xf32>
    %555 = arith.mulf %543, %554 : vector<8x32xf32>
    %556 = arith.addf %552, %555 : vector<8x32xf32>
    %557 = math.tanh %556 : vector<8x32xf32>
    %cst_141 = arith.constant 1.000000e+00 : f32
    %558 = vector.broadcast %cst_141 : f32 to vector<8x32xf32>
    %559 = arith.subf %558, %551 : vector<8x32xf32>
    %560 = arith.mulf %559, %557 : vector<8x32xf32>
    %561 = arith.mulf %551, %486 : vector<8x32xf32>
    %562 = arith.addf %560, %561 : vector<8x32xf32>
    %563 = arith.truncf %562 : vector<8x32xf32> to vector<8x32xbf16>
    %cst_142 = arith.constant dense<0.000000e+00> : vector<8x256xf32>
    %564 = tpu.matmul %563, %363, %cst_142 {dimension_numbers = #tpu.dot_dimension_numbers<[1], [0], [0], [1], [0, 0, 1, 1], [], []>} : vector<8x32xbf16>, vector<32x256xbf16>, vector<8x256xf32> -> vector<8x256xf32>
    %565 = vector.extract_strided_slice %564 {offsets = [0, 0], sizes = [8, 128], strides = [1, 1]} : vector<8x256xf32> to vector<8x128xf32>
    %566 = arith.addf %565, %367 : vector<8x128xf32>
    %567 = vector.extract_strided_slice %564 {offsets = [0, 128], sizes = [8, 96], strides = [1, 1]} : vector<8x256xf32> to vector<8x96xf32>
    %568 = vector.extract_strided_slice %564 {offsets = [0, 224], sizes = [8, 32], strides = [1, 1]} : vector<8x256xf32> to vector<8x32xf32>
    %cst_143 = arith.constant dense<0xFF800000> : vector<8xf32>
    %569 = vector.multi_reduction <maximumf>, %566, %cst_143 [1] : vector<8x128xf32> to vector<8xf32>
    %570 = vector.shape_cast %569 : vector<8xf32> to vector<8x1xf32>
    %571 = vector.broadcast %570 : vector<8x1xf32> to vector<8x128xf32>
    %572 = arith.cmpf oge, %566, %571 : vector<8x128xf32>
    %c128_i32_144 = arith.constant 128 : i32
    %573 = vector.broadcast %c128_i32_144 : i32 to vector<8x128xi32>
    %574 = arith.select %572, %371, %573 : vector<8x128xi1>, vector<8x128xi32>
    %cst_145 = arith.constant dense<2147483647> : vector<8xi32>
    %575 = vector.multi_reduction <minsi>, %574, %cst_145 [1] : vector<8x128xi32> to vector<8xi32>
    %576 = vector.shape_cast %575 : vector<8xi32> to vector<8x1xi32>
    %577 = vector.broadcast %576 : vector<8x1xi32> to vector<8x128xi32>
    %578 = arith.cmpi eq, %371, %577 : vector<8x128xi32>
    %579 = arith.extui %578 : vector<8x128xi1> to vector<8x128xi32>
    %580 = arith.sitofp %579 : vector<8x128xi32> to vector<8x128xf32>
    %581 = arith.truncf %580 : vector<8x128xf32> to vector<8x128xbf16>
    %cst_146 = arith.constant dense<0.000000e+00> : vector<8x128xf32>
    %582 = tpu.matmul %581, %362, %cst_146 {dimension_numbers = #tpu.dot_dimension_numbers<[1], [0], [0], [1], [0, 0, 1, 1], [], []>} : vector<8x128xbf16>, vector<128x128xbf16>, vector<8x128xf32> -> vector<8x128xf32>
    %583 = vector.extract_strided_slice %582 {offsets = [0, 0], sizes = [8, 96], strides = [1, 1]} : vector<8x128xf32> to vector<8x96xf32>
    %584 = vector.extract_strided_slice %582 {offsets = [0, 96], sizes = [8, 32], strides = [1, 1]} : vector<8x128xf32> to vector<8x32xf32>
    %585 = arith.addf %584, %568 : vector<8x32xf32>
    %586 = arith.addf %585, %368 : vector<8x32xf32>
    %cst_147 = arith.constant 0.000000e+00 : f32
    %587 = vector.broadcast %cst_147 : f32 to vector<8x32xf32>
    %588 = arith.maximumf %586, %587 : vector<8x32xf32>
    %589 = arith.truncf %588 : vector<8x32xf32> to vector<8x32xbf16>
    %cst_148 = arith.constant dense<0.000000e+00> : vector<8x1xf32>
    %590 = tpu.matmul %589, %369, %cst_148 {dimension_numbers = #tpu.dot_dimension_numbers<[1], [0], [0], [1], [0, 0, 1, 1], [], []>} : vector<8x32xbf16>, vector<32x1xbf16>, vector<8x1xf32> -> vector<8x1xf32>
    %591 = arith.addf %590, %370 : vector<8x1xf32>
    %592 = arith.negf %591 : vector<8x1xf32>
    %593 = math.exp %592 : vector<8x1xf32>
    %cst_149 = arith.constant 1.000000e+00 : f32
    %594 = vector.broadcast %cst_149 : f32 to vector<8x1xf32>
    %595 = arith.addf %594, %593 : vector<8x1xf32>
    %596 = arith.divf %594, %595 : vector<8x1xf32>
    %597 = vector.broadcast %570 : vector<8x1xf32> to vector<8x128xf32>
    %598 = arith.subf %566, %597 : vector<8x128xf32>
    %599 = math.exp %598 : vector<8x128xf32>
    %cst_150 = arith.constant dense<0.000000e+00> : vector<8xf32>
    %600 = vector.multi_reduction <add>, %599, %cst_150 [1] : vector<8x128xf32> to vector<8xf32>
    %601 = vector.shape_cast %600 : vector<8xf32> to vector<8x1xf32>
    %602 = math.log %601 : vector<8x1xf32>
    %603 = vector.broadcast %602 : vector<8x1xf32> to vector<8x128xf32>
    %604 = arith.subf %598, %603 : vector<8x128xf32>
    %c3_151 = arith.constant 3 : index
    %c0_152 = arith.constant 0 : index
    %c0_153 = arith.constant 0 : index
    %605 = vector.load %arg17[%c3_151, %c0_152, %c0_153] : memref<6x8x128xf32, #tpu.memory_space<vmem>>, vector<1x8x128xf32>
    %606 = vector.shape_cast %605 : vector<1x8x128xf32> to vector<8x128xf32>
    %607 = vector.shape_cast %604 : vector<8x128xf32> to vector<1x8x128xf32>
    tpu.vector_store %arg17[%c3_151, %c0_152, %c0_153], %607 {strides = array<i32>} : memref<6x8x128xf32, #tpu.memory_space<vmem>>, vector<1x8x128xf32>,
    %608 = vector.broadcast %596 : vector<8x1xf32> to vector<8x96xf32>
    %609 = arith.mulf %608, %364 : vector<8x96xf32>
    %610 = arith.addf %583, %609 : vector<8x96xf32>
    %611 = arith.addf %610, %365 : vector<8x96xf32>
    %612 = vector.extract_strided_slice %611 {offsets = [0, 0], sizes = [8, 32], strides = [1, 1]} : vector<8x96xf32> to vector<8x32xf32>
    %613 = vector.extract_strided_slice %567 {offsets = [0, 0], sizes = [8, 32], strides = [1, 1]} : vector<8x96xf32> to vector<8x32xf32>
    %614 = arith.addf %612, %613 : vector<8x32xf32>
    %615 = arith.negf %614 : vector<8x32xf32>
    %616 = math.exp %615 : vector<8x32xf32>
    %cst_154 = arith.constant 1.000000e+00 : f32
    %617 = vector.broadcast %cst_154 : f32 to vector<8x32xf32>
    %618 = arith.addf %617, %616 : vector<8x32xf32>
    %619 = arith.divf %617, %618 : vector<8x32xf32>
    %620 = vector.extract_strided_slice %611 {offsets = [0, 32], sizes = [8, 32], strides = [1, 1]} : vector<8x96xf32> to vector<8x32xf32>
    %621 = vector.extract_strided_slice %567 {offsets = [0, 32], sizes = [8, 32], strides = [1, 1]} : vector<8x96xf32> to vector<8x32xf32>
    %622 = arith.addf %620, %621 : vector<8x32xf32>
    %623 = arith.negf %622 : vector<8x32xf32>
    %624 = math.exp %623 : vector<8x32xf32>
    %cst_155 = arith.constant 1.000000e+00 : f32
    %625 = vector.broadcast %cst_155 : f32 to vector<8x32xf32>
    %626 = arith.addf %625, %624 : vector<8x32xf32>
    %627 = arith.divf %625, %626 : vector<8x32xf32>
    %628 = vector.extract_strided_slice %611 {offsets = [0, 64], sizes = [8, 32], strides = [1, 1]} : vector<8x96xf32> to vector<8x32xf32>
    %629 = vector.extract_strided_slice %567 {offsets = [0, 64], sizes = [8, 32], strides = [1, 1]} : vector<8x96xf32> to vector<8x32xf32>
    %630 = arith.addf %629, %366 : vector<8x32xf32>
    %631 = arith.mulf %619, %630 : vector<8x32xf32>
    %632 = arith.addf %628, %631 : vector<8x32xf32>
    %633 = math.tanh %632 : vector<8x32xf32>
    %cst_156 = arith.constant 1.000000e+00 : f32
    %634 = vector.broadcast %cst_156 : f32 to vector<8x32xf32>
    %635 = arith.subf %634, %627 : vector<8x32xf32>
    %636 = arith.mulf %635, %633 : vector<8x32xf32>
    %637 = arith.mulf %627, %562 : vector<8x32xf32>
    %638 = arith.addf %636, %637 : vector<8x32xf32>
    %639 = arith.truncf %638 : vector<8x32xf32> to vector<8x32xbf16>
    %cst_157 = arith.constant dense<0.000000e+00> : vector<8x256xf32>
    %640 = tpu.matmul %639, %363, %cst_157 {dimension_numbers = #tpu.dot_dimension_numbers<[1], [0], [0], [1], [0, 0, 1, 1], [], []>} : vector<8x32xbf16>, vector<32x256xbf16>, vector<8x256xf32> -> vector<8x256xf32>
    %641 = vector.extract_strided_slice %640 {offsets = [0, 0], sizes = [8, 128], strides = [1, 1]} : vector<8x256xf32> to vector<8x128xf32>
    %642 = arith.addf %641, %367 : vector<8x128xf32>
    %643 = vector.extract_strided_slice %640 {offsets = [0, 128], sizes = [8, 96], strides = [1, 1]} : vector<8x256xf32> to vector<8x96xf32>
    %644 = vector.extract_strided_slice %640 {offsets = [0, 224], sizes = [8, 32], strides = [1, 1]} : vector<8x256xf32> to vector<8x32xf32>
    %cst_158 = arith.constant dense<0xFF800000> : vector<8xf32>
    %645 = vector.multi_reduction <maximumf>, %642, %cst_158 [1] : vector<8x128xf32> to vector<8xf32>
    %646 = vector.shape_cast %645 : vector<8xf32> to vector<8x1xf32>
    %647 = vector.broadcast %646 : vector<8x1xf32> to vector<8x128xf32>
    %648 = arith.cmpf oge, %642, %647 : vector<8x128xf32>
    %c128_i32_159 = arith.constant 128 : i32
    %649 = vector.broadcast %c128_i32_159 : i32 to vector<8x128xi32>
    %650 = arith.select %648, %371, %649 : vector<8x128xi1>, vector<8x128xi32>
    %cst_160 = arith.constant dense<2147483647> : vector<8xi32>
    %651 = vector.multi_reduction <minsi>, %650, %cst_160 [1] : vector<8x128xi32> to vector<8xi32>
    %652 = vector.shape_cast %651 : vector<8xi32> to vector<8x1xi32>
    %653 = vector.broadcast %652 : vector<8x1xi32> to vector<8x128xi32>
    %654 = arith.cmpi eq, %371, %653 : vector<8x128xi32>
    %655 = arith.extui %654 : vector<8x128xi1> to vector<8x128xi32>
    %656 = arith.sitofp %655 : vector<8x128xi32> to vector<8x128xf32>
    %657 = arith.truncf %656 : vector<8x128xf32> to vector<8x128xbf16>
    %cst_161 = arith.constant dense<0.000000e+00> : vector<8x128xf32>
    %658 = tpu.matmul %657, %362, %cst_161 {dimension_numbers = #tpu.dot_dimension_numbers<[1], [0], [0], [1], [0, 0, 1, 1], [], []>} : vector<8x128xbf16>, vector<128x128xbf16>, vector<8x128xf32> -> vector<8x128xf32>
    %659 = vector.extract_strided_slice %658 {offsets = [0, 0], sizes = [8, 96], strides = [1, 1]} : vector<8x128xf32> to vector<8x96xf32>
    %660 = vector.extract_strided_slice %658 {offsets = [0, 96], sizes = [8, 32], strides = [1, 1]} : vector<8x128xf32> to vector<8x32xf32>
    %661 = arith.addf %660, %644 : vector<8x32xf32>
    %662 = arith.addf %661, %368 : vector<8x32xf32>
    %cst_162 = arith.constant 0.000000e+00 : f32
    %663 = vector.broadcast %cst_162 : f32 to vector<8x32xf32>
    %664 = arith.maximumf %662, %663 : vector<8x32xf32>
    %665 = arith.truncf %664 : vector<8x32xf32> to vector<8x32xbf16>
    %cst_163 = arith.constant dense<0.000000e+00> : vector<8x1xf32>
    %666 = tpu.matmul %665, %369, %cst_163 {dimension_numbers = #tpu.dot_dimension_numbers<[1], [0], [0], [1], [0, 0, 1, 1], [], []>} : vector<8x32xbf16>, vector<32x1xbf16>, vector<8x1xf32> -> vector<8x1xf32>
    %667 = arith.addf %666, %370 : vector<8x1xf32>
    %668 = arith.negf %667 : vector<8x1xf32>
    %669 = math.exp %668 : vector<8x1xf32>
    %cst_164 = arith.constant 1.000000e+00 : f32
    %670 = vector.broadcast %cst_164 : f32 to vector<8x1xf32>
    %671 = arith.addf %670, %669 : vector<8x1xf32>
    %672 = arith.divf %670, %671 : vector<8x1xf32>
    %673 = vector.broadcast %646 : vector<8x1xf32> to vector<8x128xf32>
    %674 = arith.subf %642, %673 : vector<8x128xf32>
    %675 = math.exp %674 : vector<8x128xf32>
    %cst_165 = arith.constant dense<0.000000e+00> : vector<8xf32>
    %676 = vector.multi_reduction <add>, %675, %cst_165 [1] : vector<8x128xf32> to vector<8xf32>
    %677 = vector.shape_cast %676 : vector<8xf32> to vector<8x1xf32>
    %678 = math.log %677 : vector<8x1xf32>
    %679 = vector.broadcast %678 : vector<8x1xf32> to vector<8x128xf32>
    %680 = arith.subf %674, %679 : vector<8x128xf32>
    %c4_166 = arith.constant 4 : index
    %c0_167 = arith.constant 0 : index
    %c0_168 = arith.constant 0 : index
    %681 = vector.load %arg17[%c4_166, %c0_167, %c0_168] : memref<6x8x128xf32, #tpu.memory_space<vmem>>, vector<1x8x128xf32>
    %682 = vector.shape_cast %681 : vector<1x8x128xf32> to vector<8x128xf32>
    %683 = vector.shape_cast %680 : vector<8x128xf32> to vector<1x8x128xf32>
    tpu.vector_store %arg17[%c4_166, %c0_167, %c0_168], %683 {strides = array<i32>} : memref<6x8x128xf32, #tpu.memory_space<vmem>>, vector<1x8x128xf32>,
    %684 = vector.broadcast %672 : vector<8x1xf32> to vector<8x96xf32>
    %685 = arith.mulf %684, %364 : vector<8x96xf32>
    %686 = arith.addf %659, %685 : vector<8x96xf32>
    %687 = arith.addf %686, %365 : vector<8x96xf32>
    %688 = vector.extract_strided_slice %687 {offsets = [0, 0], sizes = [8, 32], strides = [1, 1]} : vector<8x96xf32> to vector<8x32xf32>
    %689 = vector.extract_strided_slice %643 {offsets = [0, 0], sizes = [8, 32], strides = [1, 1]} : vector<8x96xf32> to vector<8x32xf32>
    %690 = arith.addf %688, %689 : vector<8x32xf32>
    %691 = arith.negf %690 : vector<8x32xf32>
    %692 = math.exp %691 : vector<8x32xf32>
    %cst_169 = arith.constant 1.000000e+00 : f32
    %693 = vector.broadcast %cst_169 : f32 to vector<8x32xf32>
    %694 = arith.addf %693, %692 : vector<8x32xf32>
    %695 = arith.divf %693, %694 : vector<8x32xf32>
    %696 = vector.extract_strided_slice %687 {offsets = [0, 32], sizes = [8, 32], strides = [1, 1]} : vector<8x96xf32> to vector<8x32xf32>
    %697 = vector.extract_strided_slice %643 {offsets = [0, 32], sizes = [8, 32], strides = [1, 1]} : vector<8x96xf32> to vector<8x32xf32>
    %698 = arith.addf %696, %697 : vector<8x32xf32>
    %699 = arith.negf %698 : vector<8x32xf32>
    %700 = math.exp %699 : vector<8x32xf32>
    %cst_170 = arith.constant 1.000000e+00 : f32
    %701 = vector.broadcast %cst_170 : f32 to vector<8x32xf32>
    %702 = arith.addf %701, %700 : vector<8x32xf32>
    %703 = arith.divf %701, %702 : vector<8x32xf32>
    %704 = vector.extract_strided_slice %687 {offsets = [0, 64], sizes = [8, 32], strides = [1, 1]} : vector<8x96xf32> to vector<8x32xf32>
    %705 = vector.extract_strided_slice %643 {offsets = [0, 64], sizes = [8, 32], strides = [1, 1]} : vector<8x96xf32> to vector<8x32xf32>
    %706 = arith.addf %705, %366 : vector<8x32xf32>
    %707 = arith.mulf %695, %706 : vector<8x32xf32>
    %708 = arith.addf %704, %707 : vector<8x32xf32>
    %709 = math.tanh %708 : vector<8x32xf32>
    %cst_171 = arith.constant 1.000000e+00 : f32
    %710 = vector.broadcast %cst_171 : f32 to vector<8x32xf32>
    %711 = arith.subf %710, %703 : vector<8x32xf32>
    %712 = arith.mulf %711, %709 : vector<8x32xf32>
    %713 = arith.mulf %703, %638 : vector<8x32xf32>
    %714 = arith.addf %712, %713 : vector<8x32xf32>
    %715 = arith.truncf %714 : vector<8x32xf32> to vector<8x32xbf16>
    %cst_172 = arith.constant dense<0.000000e+00> : vector<8x256xf32>
    %716 = tpu.matmul %715, %363, %cst_172 {dimension_numbers = #tpu.dot_dimension_numbers<[1], [0], [0], [1], [0, 0, 1, 1], [], []>} : vector<8x32xbf16>, vector<32x256xbf16>, vector<8x256xf32> -> vector<8x256xf32>
    %717 = vector.extract_strided_slice %716 {offsets = [0, 0], sizes = [8, 128], strides = [1, 1]} : vector<8x256xf32> to vector<8x128xf32>
    %718 = arith.addf %717, %367 : vector<8x128xf32>
    %719 = vector.extract_strided_slice %716 {offsets = [0, 224], sizes = [8, 32], strides = [1, 1]} : vector<8x256xf32> to vector<8x32xf32>
    %cst_173 = arith.constant dense<0xFF800000> : vector<8xf32>
    %720 = vector.multi_reduction <maximumf>, %718, %cst_173 [1] : vector<8x128xf32> to vector<8xf32>
    %721 = vector.shape_cast %720 : vector<8xf32> to vector<8x1xf32>
    %722 = vector.broadcast %721 : vector<8x1xf32> to vector<8x128xf32>
    %723 = arith.cmpf oge, %718, %722 : vector<8x128xf32>
    %c128_i32_174 = arith.constant 128 : i32
    %724 = vector.broadcast %c128_i32_174 : i32 to vector<8x128xi32>
    %725 = arith.select %723, %371, %724 : vector<8x128xi1>, vector<8x128xi32>
    %cst_175 = arith.constant dense<2147483647> : vector<8xi32>
    %726 = vector.multi_reduction <minsi>, %725, %cst_175 [1] : vector<8x128xi32> to vector<8xi32>
    %727 = vector.shape_cast %726 : vector<8xi32> to vector<8x1xi32>
    %728 = vector.broadcast %727 : vector<8x1xi32> to vector<8x128xi32>
    %729 = arith.cmpi eq, %371, %728 : vector<8x128xi32>
    %730 = arith.extui %729 : vector<8x128xi1> to vector<8x128xi32>
    %731 = arith.sitofp %730 : vector<8x128xi32> to vector<8x128xf32>
    %732 = arith.truncf %731 : vector<8x128xf32> to vector<8x128xbf16>
    %cst_176 = arith.constant dense<0.000000e+00> : vector<8x128xf32>
    %733 = tpu.matmul %732, %362, %cst_176 {dimension_numbers = #tpu.dot_dimension_numbers<[1], [0], [0], [1], [0, 0, 1, 1], [], []>} : vector<8x128xbf16>, vector<128x128xbf16>, vector<8x128xf32> -> vector<8x128xf32>
    %734 = vector.extract_strided_slice %733 {offsets = [0, 96], sizes = [8, 32], strides = [1, 1]} : vector<8x128xf32> to vector<8x32xf32>
    %735 = arith.addf %734, %719 : vector<8x32xf32>
    %736 = arith.addf %735, %368 : vector<8x32xf32>
    %cst_177 = arith.constant 0.000000e+00 : f32
    %737 = vector.broadcast %cst_177 : f32 to vector<8x32xf32>
    %738 = arith.maximumf %736, %737 : vector<8x32xf32>
    %739 = arith.truncf %738 : vector<8x32xf32> to vector<8x32xbf16>
    %cst_178 = arith.constant dense<0.000000e+00> : vector<8x1xf32>
    %740 = tpu.matmul %739, %369, %cst_178 {dimension_numbers = #tpu.dot_dimension_numbers<[1], [0], [0], [1], [0, 0, 1, 1], [], []>} : vector<8x32xbf16>, vector<32x1xbf16>, vector<8x1xf32> -> vector<8x1xf32>
    %741 = arith.addf %740, %370 : vector<8x1xf32>
    %742 = arith.negf %741 : vector<8x1xf32>
    %743 = math.exp %742 : vector<8x1xf32>
    %cst_179 = arith.constant 1.000000e+00 : f32
    %744 = vector.broadcast %cst_179 : f32 to vector<8x1xf32>
    %745 = arith.addf %744, %743 : vector<8x1xf32>
    %746 = arith.divf %744, %745 : vector<8x1xf32>
    %747 = vector.broadcast %721 : vector<8x1xf32> to vector<8x128xf32>
    %748 = arith.subf %718, %747 : vector<8x128xf32>
    %749 = math.exp %748 : vector<8x128xf32>
    %cst_180 = arith.constant dense<0.000000e+00> : vector<8xf32>
    %750 = vector.multi_reduction <add>, %749, %cst_180 [1] : vector<8x128xf32> to vector<8xf32>
    %751 = vector.shape_cast %750 : vector<8xf32> to vector<8x1xf32>
    %752 = math.log %751 : vector<8x1xf32>
    %753 = vector.broadcast %752 : vector<8x1xf32> to vector<8x128xf32>
    %754 = arith.subf %748, %753 : vector<8x128xf32>
    %c5_181 = arith.constant 5 : index
    %c0_182 = arith.constant 0 : index
    %c0_183 = arith.constant 0 : index
    %755 = vector.load %arg17[%c5_181, %c0_182, %c0_183] : memref<6x8x128xf32, #tpu.memory_space<vmem>>, vector<1x8x128xf32>
    %756 = vector.shape_cast %755 : vector<1x8x128xf32> to vector<8x128xf32>
    %757 = vector.shape_cast %754 : vector<8x128xf32> to vector<1x8x128xf32>
    tpu.vector_store %arg17[%c5_181, %c0_182, %c0_183], %757 {strides = array<i32>} : memref<6x8x128xf32, #tpu.memory_space<vmem>>, vector<1x8x128xf32>,
    %758 = tpu.concatenate %379, %444, %520, %596, %672, %746 in 1 : vector<8x1xf32>, vector<8x1xf32>, vector<8x1xf32>, vector<8x1xf32>, vector<8x1xf32>, vector<8x1xf32> -> vector<8x6xf32>
    %c0_184 = arith.constant 0 : index
    %c0_185 = arith.constant 0 : index
    %759 = vector.load %arg18[%c0_184, %c0_185] : memref<8x6xf32, #tpu.memory_space<vmem>>, vector<8x6xf32>
    tpu.vector_store %arg18[%c0_184, %c0_185], %758 {strides = array<i32>} : memref<8x6xf32, #tpu.memory_space<vmem>>, vector<8x6xf32>,
    return
  }
}

</mosaic_0001>

<llo_original>
// kernel: tpu_custom_call.1
$region0: #{tpu_custom_call.1}
  #allocation0 [shape = 'u32[]', space=smem, size = 0x4, offset = 0x4, fixed_abs, tag = 'smem constant byte address 0x4 - core index']
  #allocation1 [shape = 'u32[144,128]{1,0:T(1,128)}', space=vmem, size = 0x12000, scoped, tag = 'internal scratch']
  %s0 = inlined_call_operand.vmem [shape: bf16[80,16], index: 0, kind: input, shape index: {}]
  %s1 = inlined_call_operand.vmem [shape: f32[10,8,32], index: 1, kind: input, shape index: {}]
  %s2 = inlined_call_operand.hbm [shape: bf16[8,128], index: 2, kind: input, shape index: {}]
  %s3 = inlined_call_operand.vmem [shape: f32[8,1], index: 3, kind: input, shape index: {}]
  %s4 = inlined_call_operand.hbm [shape: bf16[16,96], index: 4, kind: input, shape index: {}]
  %s5 = inlined_call_operand.hbm [shape: bf16[32,96], index: 5, kind: input, shape index: {}]
  %s6 = inlined_call_operand.hbm [shape: f32[1,96], index: 6, kind: input, shape index: {}]
  %s7 = inlined_call_operand.hbm [shape: f32[8,32], index: 7, kind: input, shape index: {}]
  %s8 = inlined_call_operand.hbm [shape: f32[8,96], index: 8, kind: input, shape index: {}]
  %s9 = inlined_call_operand.hbm [shape: f32[8,96], index: 9, kind: input, shape index: {}]
  %s10 = inlined_call_operand.vmem [shape: f32[8,32], index: 10, kind: input, shape index: {}]
  %s11 = inlined_call_operand.hbm [shape: bf16[128,128], index: 11, kind: input, shape index: {}]
  %s12 = inlined_call_operand.vmem [shape: bf16[32,256], index: 12, kind: input, shape index: {}]
  %s13 = inlined_call_operand.vmem [shape: f32[8,128], index: 13, kind: input, shape index: {}]
  %s14 = inlined_call_operand.hbm [shape: f32[8,32], index: 14, kind: input, shape index: {}]
  %s15 = inlined_call_operand.vmem [shape: bf16[32,1], index: 15, kind: input, shape index: {}]
  %s16 = inlined_call_operand.vmem [shape: f32[8,1], index: 16, kind: input, shape index: {}]
  %s17 = inlined_call_operand.hbm [shape: f32[6,8,128], index: 17, kind: output, shape index: {0}]
  %s18 = inlined_call_operand.hbm [shape: f32[8,6], index: 18, kind: output, shape index: {1}]
  %19 = xla_tuple %s17, %s18
  %s20 = sld [smem:[#allocation0]]
  $region122: #{tpu_custom_call.1} parent=0
    _
  %s22 = ssub.s32 1, %s20
  %s23 = scalar_select 0, %s22, %s20
  $region1: #{tpu_custom_call.1} parent=0
    #allocation2 [shape = 'u8[2048]{0}', space=vmem, size = 0x800, scoped, tag = 'input window, operand 2, single buffered']
    #allocation3 [shape = 's32[1]{0}', space=sflag, size = 0x4, scoped, tag = 'scoped memory for tpu_custom_call.1']
    #allocation4 [shape = 's32[1]{0}', space=sflag, size = 0x4, scoped, tag = 'scoped memory for tpu_custom_call.1']
    #allocation5 [shape = 'u8[4096]{0}', space=vmem, size = 0x1000, scoped, tag = 'input window, operand 4, single buffered']
    #allocation6 [shape = 's32[1]{0}', space=sflag, size = 0x4, scoped, tag = 'scoped memory for tpu_custom_call.1']
    #allocation7 [shape = 'u8[8192]{0}', space=vmem, size = 0x2000, scoped, tag = 'input window, operand 5, single buffered']
    #allocation8 [shape = 'u8[512]{0}', space=vmem, size = 0x400, scoped, tag = 'input window, operand 6, single buffered']
    #allocation9 [shape = 's32[1]{0}', space=sflag, size = 0x4, scoped, tag = 'scoped memory for tpu_custom_call.1']
    #allocation10 [shape = 'u8[4096]{0}', space=vmem, size = 0x1000, scoped, tag = 'input window, operand 7, single buffered']
    #allocation11 [shape = 'u8[4096]{0}', space=vmem, size = 0x1000, scoped, tag = 'input window, operand 8, single buffered']
    #allocation12 [shape = 's32[1]{0}', space=sflag, size = 0x4, scoped, tag = 'scoped memory for tpu_custom_call.1']
    #allocation13 [shape = 'u8[4096]{0}', space=vmem, size = 0x1000, scoped, tag = 'input window, operand 9, single buffered']
    #allocation14 [shape = 'u8[32768]{0}', space=vmem, size = 0x8000, scoped, tag = 'input window, operand 11, single buffered']
    #allocation15 [shape = 's32[1]{0}', space=sflag, size = 0x4, scoped, tag = 'scoped memory for tpu_custom_call.1']
    #allocation16 [shape = 'u8[4096]{0}', space=vmem, size = 0x1000, scoped, tag = 'input window, operand 14, single buffered']
    #allocation17 [shape = 'u8[24576]{0}', space=vmem, size = 0x6000, scoped, tag = 'output window, operand 0, single buffered']
    #allocation18 [shape = 'u8[4096]{0}', space=vmem, size = 0x1000, scoped, tag = 'output window, operand 1, single buffered']
    #allocation19 [shape = 's32[1]{0}', space=sflag, size = 0x4, scoped, tag = 'scoped memory for tpu_custom_call.1']
    %24 = vsyncpa [#allocation3], 0
    %25 = vsyncpa [#allocation6], 0
    %26 = vsyncpa [#allocation9], 0
    %27 = vsyncpa [#allocation12], 0
    %28 = vsyncpa [#allocation15], 0
    %29 = vsyncpa [#allocation4], 0
    %30 = vsyncpa [#allocation19], 0
    // Predicated region
    $region2: #{tpu_custom_call.1} parent=1 // pred_check
      _
    $region3: #{tpu_custom_call.1} parent=1 // pred_check_branch
      %32 = sbr.rel (0) target = $region5
    $region4: #{tpu_custom_call.1} parent=1 // pred_region
      _
    $region5: #{tpu_custom_call.1} parent=1 // pred_fallthru
      _
    // Predicated region
    $region6: #{tpu_custom_call.1} parent=1 // pred_check
      _
    $region7: #{tpu_custom_call.1} parent=1 // pred_check_branch
      %34 = sbr.rel (0) target = $region9
    $region8: #{tpu_custom_call.1} parent=1 // pred_region
      _
    $region9: #{tpu_custom_call.1} parent=1 // pred_fallthru
      _
    // Predicated region
    $region10: #{tpu_custom_call.1} parent=1 // pred_check
      _
    $region11: #{tpu_custom_call.1} parent=1 // pred_check_branch
      %36 = sbr.rel (0) target = $region13
    $region12: #{tpu_custom_call.1} parent=1 // pred_region
      %s38 = ssub.s32 64, 64
      %39 = vsyncadd [#allocation3], %s38
      %s41 = sshll.u32 [#allocation2], 4
      %s42 = int_to_ptr.vmem [resolvable:$true] %s41
      %44 = dma.hbm_to_vmem [thread:$0]  %s2, 64, %s42, [#allocation3]
    $region13: #{tpu_custom_call.1} parent=1 // pred_fallthru
      _
    // Predicated region
    $region14: #{tpu_custom_call.1} parent=1 // pred_check
      _
    $region15: #{tpu_custom_call.1} parent=1 // pred_check_branch
      %46 = sbr.rel (0) target = $region17
    $region16: #{tpu_custom_call.1} parent=1 // pred_region
      _
    $region17: #{tpu_custom_call.1} parent=1 // pred_fallthru
      _
    // Predicated region
    $region18: #{tpu_custom_call.1} parent=1 // pred_check
      _
    $region19: #{tpu_custom_call.1} parent=1 // pred_check_branch
      %48 = sbr.rel (0) target = $region21
    $region20: #{tpu_custom_call.1} parent=1 // pred_region
      %s50 = ssub.s32 128, 128
      %51 = vsyncadd [#allocation6], %s50
      %s52 = sshll.u32 [#allocation5], 4
      %s53 = int_to_ptr.vmem [resolvable:$true] %s52
      %58 = dma.hbm_to_vmem [thread:$0]  %s4, 128, %s53, [#allocation6], 64, 64, 4
    $region21: #{tpu_custom_call.1} parent=1 // pred_fallthru
      _
    // Predicated region
    $region22: #{tpu_custom_call.1} parent=1 // pred_check
      _
    $region23: #{tpu_custom_call.1} parent=1 // pred_check_branch
      %60 = sbr.rel (0) target = $region25
    $region24: #{tpu_custom_call.1} parent=1 // pred_region
      %s62 = ssub.s32 256, 256
      %63 = vsyncadd [#allocation6], %s62
      %s64 = sshll.u32 [#allocation7], 4
      %s65 = int_to_ptr.vmem [resolvable:$true] %s64
      %70 = dma.hbm_to_vmem [thread:$0]  %s5, 256, %s65, [#allocation6], 64, 64, 4
    $region25: #{tpu_custom_call.1} parent=1 // pred_fallthru
      _
    // Predicated region
    $region26: #{tpu_custom_call.1} parent=1 // pred_check
      _
    $region27: #{tpu_custom_call.1} parent=1 // pred_check_branch
      %72 = sbr.rel (0) target = $region29
    $region28: #{tpu_custom_call.1} parent=1 // pred_region
      %s74 = ssub.s32 16, 16
      %75 = vsyncadd [#allocation9], %s74
      %s77 = sshll.u32 [#allocation8], 4
      %s78 = int_to_ptr.vmem [resolvable:$true] %s77
      %80 = dma.hbm_to_vmem [thread:$0]  %s6, 16, %s78, [#allocation9]
    $region29: #{tpu_custom_call.1} parent=1 // pred_fallthru
      _
    // Predicated region
    $region30: #{tpu_custom_call.1} parent=1 // pred_check
      _
    $region31: #{tpu_custom_call.1} parent=1 // pred_check_branch
      %82 = sbr.rel (0) target = $region33
    $region32: #{tpu_custom_call.1} parent=1 // pred_region
      %s84 = ssub.s32 128, 128
      %85 = vsyncadd [#allocation9], %s84
      %s87 = sshll.u32 [#allocation10], 4
      %s88 = int_to_ptr.vmem [resolvable:$true] %s87
      %90 = dma.hbm_to_vmem [thread:$0]  %s7, 128, %s88, [#allocation9]
    $region33: #{tpu_custom_call.1} parent=1 // pred_fallthru
      _
    // Predicated region
    $region34: #{tpu_custom_call.1} parent=1 // pred_check
      _
    $region35: #{tpu_custom_call.1} parent=1 // pred_check_branch
      %92 = sbr.rel (0) target = $region37
    $region36: #{tpu_custom_call.1} parent=1 // pred_region
      %s94 = ssub.s32 128, 128
      %95 = vsyncadd [#allocation12], %s94
      %s97 = sshll.u32 [#allocation11], 4
      %s98 = int_to_ptr.vmem [resolvable:$true] %s97
      %100 = dma.hbm_to_vmem [thread:$0]  %s8, 128, %s98, [#allocation12]
    $region37: #{tpu_custom_call.1} parent=1 // pred_fallthru
      _
    // Predicated region
    $region38: #{tpu_custom_call.1} parent=1 // pred_check
      _
    $region39: #{tpu_custom_call.1} parent=1 // pred_check_branch
      %102 = sbr.rel (0) target = $region41
    $region40: #{tpu_custom_call.1} parent=1 // pred_region
      %s104 = ssub.s32 128, 128
      %105 = vsyncadd [#allocation12], %s104
      %s107 = sshll.u32 [#allocation13], 4
      %s108 = int_to_ptr.vmem [resolvable:$true] %s107
      %110 = dma.hbm_to_vmem [thread:$0]  %s9, 128, %s108, [#allocation12]
    $region41: #{tpu_custom_call.1} parent=1 // pred_fallthru
      _
    // Predicated region
    $region42: #{tpu_custom_call.1} parent=1 // pred_check
      _
    $region43: #{tpu_custom_call.1} parent=1 // pred_check_branch
      %112 = sbr.rel (0) target = $region45
    $region44: #{tpu_custom_call.1} parent=1 // pred_region
      _
    $region45: #{tpu_custom_call.1} parent=1 // pred_fallthru
      _
    // Predicated region
    $region46: #{tpu_custom_call.1} parent=1 // pred_check
      _
    $region47: #{tpu_custom_call.1} parent=1 // pred_check_branch
      %114 = sbr.rel (0) target = $region49
    $region48: #{tpu_custom_call.1} parent=1 // pred_region
      %s116 = ssub.s32 1024, 1024
      %117 = vsyncadd [#allocation15], %s116
      %s118 = sshll.u32 [#allocation14], 4
      %s119 = int_to_ptr.vmem [resolvable:$true] %s118
      %124 = dma.hbm_to_vmem [thread:$0]  %s11, 1024, %s119, [#allocation15], 64, 64, 4
    $region49: #{tpu_custom_call.1} parent=1 // pred_fallthru
      _
    // Predicated region
    $region50: #{tpu_custom_call.1} parent=1 // pred_check
      _
    $region51: #{tpu_custom_call.1} parent=1 // pred_check_branch
      %126 = sbr.rel (0) target = $region53
    $region52: #{tpu_custom_call.1} parent=1 // pred_region
      _
    $region53: #{tpu_custom_call.1} parent=1 // pred_fallthru
      _
    // Predicated region
    $region54: #{tpu_custom_call.1} parent=1 // pred_check
      _
    $region55: #{tpu_custom_call.1} parent=1 // pred_check_branch
      %128 = sbr.rel (0) target = $region57
    $region56: #{tpu_custom_call.1} parent=1 // pred_region
      _
    $region57: #{tpu_custom_call.1} parent=1 // pred_fallthru
      _
    // Predicated region
    $region58: #{tpu_custom_call.1} parent=1 // pred_check
      _
    $region59: #{tpu_custom_call.1} parent=1 // pred_check_branch
      %130 = sbr.rel (0) target = $region61
    $region60: #{tpu_custom_call.1} parent=1 // pred_region
      %s132 = ssub.s32 128, 128
      %133 = vsyncadd [#allocation15], %s132
      %s135 = sshll.u32 [#allocation16], 4
      %s136 = int_to_ptr.vmem [resolvable:$true] %s135
      %138 = dma.hbm_to_vmem [thread:$0]  %s14, 128, %s136, [#allocation15]
    $region61: #{tpu_custom_call.1} parent=1 // pred_fallthru
      _
    // Predicated region
    $region62: #{tpu_custom_call.1} parent=1 // pred_check
      _
    $region63: #{tpu_custom_call.1} parent=1 // pred_check_branch
      %140 = sbr.rel (0) target = $region65
    $region64: #{tpu_custom_call.1} parent=1 // pred_region
      _
    $region65: #{tpu_custom_call.1} parent=1 // pred_fallthru
      _
    // Predicated region
    $region66: #{tpu_custom_call.1} parent=1 // pred_check
      _
    $region67: #{tpu_custom_call.1} parent=1 // pred_check_branch
      %142 = sbr.rel (0) target = $region69
    $region68: #{tpu_custom_call.1} parent=1 // pred_region
      _
    $region69: #{tpu_custom_call.1} parent=1 // pred_fallthru
      _
    // Predicated region
    $region70: #{tpu_custom_call.1} parent=1 // pred_check
      _
    $region71: #{tpu_custom_call.1} parent=1 // pred_check_branch
      %144 = sbr.rel (0) target = $region73
    $region72: #{tpu_custom_call.1} parent=1 // pred_region
      %145 = dma.done [#allocation3], 64
    $region73: #{tpu_custom_call.1} parent=1 // pred_fallthru
      _
    // Predicated region
    $region74: #{tpu_custom_call.1} parent=1 // pred_check
      _
    $region75: #{tpu_custom_call.1} parent=1 // pred_check_branch
      %147 = sbr.rel (0) target = $region77
    $region76: #{tpu_custom_call.1} parent=1 // pred_region
      %148 = dma.done [#allocation6], 128
    $region77: #{tpu_custom_call.1} parent=1 // pred_fallthru
      _
    // Predicated region
    $region78: #{tpu_custom_call.1} parent=1 // pred_check
      _
    $region79: #{tpu_custom_call.1} parent=1 // pred_check_branch
      %150 = sbr.rel (0) target = $region81
    $region80: #{tpu_custom_call.1} parent=1 // pred_region
      %151 = dma.done [#allocation6], 256
    $region81: #{tpu_custom_call.1} parent=1 // pred_fallthru
      _
    // Predicated region
    $region82: #{tpu_custom_call.1} parent=1 // pred_check
      _
    $region83: #{tpu_custom_call.1} parent=1 // pred_check_branch
      %153 = sbr.rel (0) target = $region85
    $region84: #{tpu_custom_call.1} parent=1 // pred_region
      %154 = dma.done [#allocation9], 16
    $region85: #{tpu_custom_call.1} parent=1 // pred_fallthru
      _
    // Predicated region
    $region86: #{tpu_custom_call.1} parent=1 // pred_check
      _
    $region87: #{tpu_custom_call.1} parent=1 // pred_check_branch
      %156 = sbr.rel (0) target = $region89
    $region88: #{tpu_custom_call.1} parent=1 // pred_region
      %157 = dma.done [#allocation9], 128
    $region89: #{tpu_custom_call.1} parent=1 // pred_fallthru
      _
    // Predicated region
    $region90: #{tpu_custom_call.1} parent=1 // pred_check
      _
    $region91: #{tpu_custom_call.1} parent=1 // pred_check_branch
      %159 = sbr.rel (0) target = $region93
    $region92: #{tpu_custom_call.1} parent=1 // pred_region
      %160 = dma.done [#allocation12], 128
    $region93: #{tpu_custom_call.1} parent=1 // pred_fallthru
      _
    // Predicated region
    $region94: #{tpu_custom_call.1} parent=1 // pred_check
      _
    $region95: #{tpu_custom_call.1} parent=1 // pred_check_branch
      %162 = sbr.rel (0) target = $region97
    $region96: #{tpu_custom_call.1} parent=1 // pred_region
      %163 = dma.done [#allocation12], 128
    $region97: #{tpu_custom_call.1} parent=1 // pred_fallthru
      _
    // Predicated region
    $region98: #{tpu_custom_call.1} parent=1 // pred_check
      _
    $region99: #{tpu_custom_call.1} parent=1 // pred_check_branch
      %165 = sbr.rel (0) target = $region101
    $region100: #{tpu_custom_call.1} parent=1 // pred_region
      %166 = dma.done [#allocation15], 1024
    $region101: #{tpu_custom_call.1} parent=1 // pred_fallthru
      _
    // Predicated region
    $region102: #{tpu_custom_call.1} parent=1 // pred_check
      _
    $region103: #{tpu_custom_call.1} parent=1 // pred_check_branch
      %168 = sbr.rel (0) target = $region105
    $region104: #{tpu_custom_call.1} parent=1 // pred_region
      %169 = dma.done [#allocation15], 128
    $region105: #{tpu_custom_call.1} parent=1 // pred_fallthru
      _
    %171 = vst [vmem:[#allocation17] sm:$0xff] 0.0
    %v172 = vld [vmem:[#allocation7] sm:$0xf]
    %v173 = vld [vmem:[#allocation7 + $0x4] sm:$0xf]
    %v174 = vld [vmem:[#allocation7 + $0x8] sm:$0xf]
    %v175 = vld [vmem:[#allocation7 + $0xc] sm:$0xf]
    %v176 = vld [vmem:[#allocation10] sm:$0xff]
    %v177 = vld [vmem:[%s0] sm:$0xf]
    %v178 = vld [vmem:[%s0 + $0x4] sm:$0xf]
    %v179 = vld [vmem:[%s0 + $0x8] sm:$0xf]
    %v180 = vld [vmem:[%s0 + $0xc] sm:$0xf]
    %v181 = vld [vmem:[%s0 + $0x10] sm:$0xf]
    %v182 = vld [vmem:[%s0 + $0x14] sm:$0xf]
    %v183 = vld [vmem:[%s0 + $0x18] sm:$0xf]
    %v184 = vld [vmem:[%s0 + $0x1c] sm:$0xf]
    %v185 = vld [vmem:[%s0 + $0x20] sm:$0xf]
    %v186 = vld [vmem:[%s0 + $0x24] sm:$0xf]
    %v187 = vld [vmem:[#allocation5] sm:$0xf]
    %v188 = vld [vmem:[#allocation5 + $0x4] sm:$0xf]
    %v189 = vld [vmem:[#allocation8] sm:$0x1]
    %v191 = vlaneseq
    %v192 = vshrl.u32 %v191, 7
    %v193 = vsub.s32 0, %v192
    %v194 = vrot.slane %v189, %v193
    %v206 = vunpack.c.l.b16 %v177
    %v207 = vunpack.c.l.b16 %v178
    %v208 = vunpack.c.l.b16 %v179
    %v209 = vunpack.c.l.b16 %v180
    %v210 = vunpack.c.l.b16 %v181
    %v211 = vunpack.c.l.b16 %v182
    %v212 = vunpack.c.l.b16 %v183
    %v213 = vunpack.c.l.b16 %v184
    %v214 = vunpack.c.l.b16 %v185
    %v215 = vunpack.c.l.b16 %v186
    %v216 = vpack.c.b16 %v207, %v206
    %v217 = vpack.c.b16 %v209, %v208
    %v218 = vpack.c.b16 %v211, %v210
    %v219 = vpack.c.b16 %v213, %v212
    %v220 = vpack.c.b16 %v215, %v214
    %v223 = vunpack.c.l.b16 %v187
    %v224 = vunpack.c.l.b16 %v188
    %v225 = vpack.c.b16 %v224, %v223
    %vm227 = vcmask 130048
    %v229 = vsel %vm227, %v216, 0
    %v232 = vsel %vm227, %v217, 0
    %v235 = vsel %vm227, %v218, 0
    %v238 = vsel %vm227, %v219, 0
    %v241 = vsel %vm227, %v220, 0
    %243 = vmatprep.subr.bf16.mxu0 0
    %244 = vmatpush1.bf16.msra.mxu0 %v225
    %245 = vmatprep.subr.bf16.mxu0 0
    %246 = vmatpush1.bf16.msra.mxu0 0
    %247 = vmatprep.subr.bf16.mxu0 0
    %248 = vmatpush1.bf16.msra.mxu0 0
    %249 = vmatprep.subr.bf16.mxu0 0
    %250 = vmatpush1.bf16.msra.mxu0 0
    %251 = vmatprep.subr.bf16.mxu0 0
    %252 = vmatpush1.bf16.msra.mxu0 0
    %253 = vmatprep.subr.bf16.mxu0 0
    %254 = vmatpush1.bf16.msra.mxu0 0
    %255 = vmatprep.subr.bf16.mxu0 0
    %256 = vmatpush1.bf16.msra.mxu0 0
    %257 = vmatprep.subr.bf16.mxu0 0
    %258 = vmatpush1.bf16.msra.mxu0 0
    %259 = vmatprep.subr.bf16.mxu0 0
    %260 = vmatpush1.bf16.msra.mxu0 0
    %261 = vmatprep.subr.bf16.mxu0 0
    %262 = vmatpush1.bf16.msra.mxu0 0
    %263 = vmatprep.subr.bf16.mxu0 0
    %264 = vmatpush1.bf16.msra.mxu0 0
    %265 = vmatprep.subr.bf16.mxu0 0
    %266 = vmatpush1.bf16.msra.mxu0 0
    %267 = vmatprep.subr.bf16.mxu0 0
    %268 = vmatpush1.bf16.msra.mxu0 0
    %269 = vmatprep.subr.bf16.mxu0 0
    %270 = vmatpush1.bf16.msra.mxu0 0
    %271 = vmatprep.subr.bf16.mxu0 0
    %272 = vmatpush1.bf16.msra.mxu0 0
    %273 = vmatprep.subr.bf16.mxu0 0
    %274 = vmatpush1.bf16.msra.mxu0 0
    %275 = vmatprep.mubr.bf16.mxu0 0
    %276 = vmatmul.mubr.bf16.gmra.mrb[0].mxu0 %v229
    %v277 = vpop.f32.mrb[0].mxu0
    %v278 = vadd.f32 %v194, %v277
    %v279 = vpop.f32.mrb[0].mxu0
    %v280 = vpop.f32.mrb[0].mxu0
    %v281 = vadd.f32 %v194, %v280
    %v282 = vpop.f32.mrb[0].mxu0
    %283 = vmatprep.mubr.bf16.mxu0 0
    %284 = vmatmul.mubr.bf16.gmra.mrb[0].mxu0 %v232
    %v285 = vpop.f32.mrb[0].mxu0
    %v286 = vadd.f32 %v194, %v285
    %v287 = vpop.f32.mrb[0].mxu0
    %v288 = vpop.f32.mrb[0].mxu0
    %v289 = vadd.f32 %v194, %v288
    %v290 = vpop.f32.mrb[0].mxu0
    %291 = vmatprep.mubr.bf16.mxu0 0
    %292 = vmatmul.mubr.bf16.gmra.mrb[0].mxu0 %v235
    %v293 = vpop.f32.mrb[0].mxu0
    %v294 = vadd.f32 %v194, %v293
    %v295 = vpop.f32.mrb[0].mxu0
    %v296 = vpop.f32.mrb[0].mxu0
    %v297 = vadd.f32 %v194, %v296
    %v298 = vpop.f32.mrb[0].mxu0
    %299 = vmatprep.mubr.bf16.mxu0 0
    %300 = vmatmul.mubr.bf16.gmra.mrb[0].mxu0 %v238
    %v301 = vpop.f32.mrb[0].mxu0
    %v302 = vadd.f32 %v194, %v301
    %v303 = vpop.f32.mrb[0].mxu0
    %v304 = vpop.f32.mrb[0].mxu0
    %v305 = vadd.f32 %v194, %v304
    %v306 = vpop.f32.mrb[0].mxu0
    %307 = vmatprep.mubr.bf16.mxu0 0
    %308 = vmatmul.mubr.bf16.gmra.mrb[0].mxu0 %v241
    %v309 = vpop.f32.mrb[0].mxu0
    %v310 = vadd.f32 %v194, %v309
    %v311 = vpop.f32.mrb[0].mxu0
    %v312 = vpop.f32.mrb[0].mxu0
    %v313 = vadd.f32 %v194, %v312
    %v314 = vpop.f32.mrb[0].mxu0
    %315 = vdwg.mxu0
    %v316 = vadd.f32 %v278, 0.0
    %v317 = vxor.u32 %v316, 2147483648
    %v318 = vmul.f32 %v317, 1.442695
    %v319 = vpow.pop %v318
    %v320 = vadd.f32 %v319, 1.0
    %v321 = vrcp.pop %v320
    %v322 = vmul.f32 1.0, %v321
    %v323 = vadd.f32 %v176, 0.0
    %v324 = vmul.f32 %v322, %v323
    %326 = vrot.lane.b32.xlu0 %v324, 64
    %v327 = vpop.permute.xlu0 %326
    %v329 = vadd.f32 %v278, %v327
    %v330 = vtanh.pop %v329
    %v331 = vsub.f32 1.0, %v322
    %333 = vrot.lane.b32.xlu0 %v330, 96
    %v334 = vpop.permute.xlu0 %333
    %v336 = vmul.f32 %v331, %v334
    %v337 = vmul.f32 %v322, 0.0
    %v338 = vadd.f32 %v336, %v337
    %v339 = vld [vmem:[%s1] sm:$0xff]
    %vm340 = vcmp.ne.f32.partialorder %v339, 0.0
    %342 = vrot.lane.b32.xlu0 %v338, 96
    %v343 = vpop.permute.xlu0 %342
    %v345 = vsel %vm340, %v343, 0.0
    %v346 = vpack.c.bf16 %v345, %v345
    %v351 = vunpack.c.l.b16 %v172
    %v352 = vunpack.c.l.b16 %v173
    %v353 = vunpack.c.l.b16 %v174
    %v354 = vunpack.c.l.b16 %v175
    %v355 = vpack.c.b16 %v352, %v351
    %v356 = vpack.c.b16 %v354, %v353
    %vm359 = vcmask 261120
    %v361 = vsel %vm359, %v346, 0
    %363 = vmatprep.subr.bf16.mxu0 0
    %364 = vmatpush1.bf16.msra.mxu0 %v355
    %365 = vmatprep.subr.bf16.mxu0 0
    %366 = vmatpush1.bf16.msra.mxu0 %v356
    %367 = vmatprep.subr.bf16.mxu0 0
    %368 = vmatpush1.bf16.msra.mxu0 0
    %369 = vmatprep.subr.bf16.mxu0 0
    %370 = vmatpush1.bf16.msra.mxu0 0
    %371 = vmatprep.subr.bf16.mxu0 0
    %372 = vmatpush1.bf16.msra.mxu0 0
    %373 = vmatprep.subr.bf16.mxu0 0
    %374 = vmatpush1.bf16.msra.mxu0 0
    %375 = vmatprep.subr.bf16.mxu0 0
    %376 = vmatpush1.bf16.msra.mxu0 0
    %377 = vmatprep.subr.bf16.mxu0 0
    %378 = vmatpush1.bf16.msra.mxu0 0
    %379 = vmatprep.subr.bf16.mxu0 0
    %380 = vmatpush1.bf16.msra.mxu0 0
    %381 = vmatprep.subr.bf16.mxu0 0
    %382 = vmatpush1.bf16.msra.mxu0 0
    %383 = vmatprep.subr.bf16.mxu0 0
    %384 = vmatpush1.bf16.msra.mxu0 0
    %385 = vmatprep.subr.bf16.mxu0 0
    %386 = vmatpush1.bf16.msra.mxu0 0
    %387 = vmatprep.subr.bf16.mxu0 0
    %388 = vmatpush1.bf16.msra.mxu0 0
    %389 = vmatprep.subr.bf16.mxu0 0
    %390 = vmatpush1.bf16.msra.mxu0 0
    %391 = vmatprep.subr.bf16.mxu0 0
    %392 = vmatpush1.bf16.msra.mxu0 0
    %393 = vmatprep.subr.bf16.mxu0 0
    %394 = vmatpush1.bf16.msra.mxu0 0
    %395 = vmatprep.mubr.bf16.mxu0 0
    %396 = vmatmul.mubr.bf16.gmra.mrb[0].mxu0 %v361
    %v397 = vpop.f32.mrb[0].mxu0
    %v398 = vadd.f32 0.0, %v397
    %v399 = vpop.f32.mrb[0].mxu0
    %v400 = vpop.f32.mrb[0].mxu0
    %v401 = vpop.f32.mrb[0].mxu0
    %402 = vdwg.mxu0
    %v403 = vadd.f32 %v281, %v398
    %v404 = vxor.u32 %v403, 2147483648
    %v405 = vmul.f32 %v404, 1.442695
    %v406 = vpow.pop %v405
    %v407 = vadd.f32 %v406, 1.0
    %v408 = vrcp.pop %v407
    %v409 = vmul.f32 1.0, %v408
    %411 = vrot.lane.b32.xlu0 %v176, 64
    %v412 = vpop.permute.xlu0 %411
    %v414 = vadd.f32 %v398, %v412
    %416 = vrot.lane.b32.xlu0 %v414, 64
    %v417 = vpop.permute.xlu0 %416
    %v419 = vmul.f32 %v409, %v417
    %421 = vrot.lane.b32.xlu0 %v419, 64
    %v422 = vpop.permute.xlu0 %421
    %v424 = vadd.f32 %v281, %v422
    %v425 = vtanh.pop %v424
    %v426 = vsub.f32 1.0, %v409
    %428 = vrot.lane.b32.xlu0 %v425, 96
    %v429 = vpop.permute.xlu0 %428
    %v431 = vmul.f32 %v426, %v429
    %433 = vrot.lane.b32.xlu0 %v345, 32
    %v434 = vpop.permute.xlu0 %433
    %v436 = vmul.f32 %v409, %v434
    %v437 = vadd.f32 %v431, %v436
    %s438 = scalar_lea.vmem %s1, 8
    %v439 = vld [vmem:[%s438] sm:$0xff]
    %vm440 = vcmp.ne.f32.partialorder %v439, 0.0
    %442 = vrot.lane.b32.xlu0 %v437, 96
    %v443 = vpop.permute.xlu0 %442
    %v445 = vsel %vm440, %v443, %v345
    %v446 = vpack.c.bf16 %v445, %v445
    %v448 = vsel %vm359, %v446, 0
    %450 = vmatprep.subr.bf16.mxu0 0
    %451 = vmatpush1.bf16.msra.mxu0 %v355
    %452 = vmatprep.subr.bf16.mxu0 0
    %453 = vmatpush1.bf16.msra.mxu0 %v356
    %454 = vmatprep.subr.bf16.mxu0 0
    %455 = vmatpush1.bf16.msra.mxu0 0
    %456 = vmatprep.subr.bf16.mxu0 0
    %457 = vmatpush1.bf16.msra.mxu0 0
    %458 = vmatprep.subr.bf16.mxu0 0
    %459 = vmatpush1.bf16.msra.mxu0 0
    %460 = vmatprep.subr.bf16.mxu0 0
    %461 = vmatpush1.bf16.msra.mxu0 0
    %462 = vmatprep.subr.bf16.mxu0 0
    %463 = vmatpush1.bf16.msra.mxu0 0
    %464 = vmatprep.subr.bf16.mxu0 0
    %465 = vmatpush1.bf16.msra.mxu0 0
    %466 = vmatprep.subr.bf16.mxu0 0
    %467 = vmatpush1.bf16.msra.mxu0 0
    %468 = vmatprep.subr.bf16.mxu0 0
    %469 = vmatpush1.bf16.msra.mxu0 0
    %470 = vmatprep.subr.bf16.mxu0 0
    %471 = vmatpush1.bf16.msra.mxu0 0
    %472 = vmatprep.subr.bf16.mxu0 0
    %473 = vmatpush1.bf16.msra.mxu0 0
    %474 = vmatprep.subr.bf16.mxu0 0
    %475 = vmatpush1.bf16.msra.mxu0 0
    %476 = vmatprep.subr.bf16.mxu0 0
    %477 = vmatpush1.bf16.msra.mxu0 0
    %478 = vmatprep.subr.bf16.mxu0 0
    %479 = vmatpush1.bf16.msra.mxu0 0
    %480 = vmatprep.subr.bf16.mxu0 0
    %481 = vmatpush1.bf16.msra.mxu0 0
    %482 = vmatprep.mubr.bf16.mxu0 0
    %483 = vmatmul.mubr.bf16.gmra.mrb[0].mxu0 %v448
    %v484 = vpop.f32.mrb[0].mxu0
    %v485 = vadd.f32 0.0, %v484
    %v486 = vpop.f32.mrb[0].mxu0
    %v487 = vpop.f32.mrb[0].mxu0
    %v488 = vpop.f32.mrb[0].mxu0
    %489 = vdwg.mxu0
    %v490 = vadd.f32 %v286, %v485
    %v491 = vxor.u32 %v490, 2147483648
    %v492 = vmul.f32 %v491, 1.442695
    %v493 = vpow.pop %v492
    %v494 = vadd.f32 %v493, 1.0
    %v495 = vrcp.pop %v494
    %v496 = vmul.f32 1.0, %v495
    %v497 = vadd.f32 %v485, %v412
    %499 = vrot.lane.b32.xlu0 %v497, 64
    %v500 = vpop.permute.xlu0 %499
    %v502 = vmul.f32 %v496, %v500
    %504 = vrot.lane.b32.xlu0 %v502, 64
    %v505 = vpop.permute.xlu0 %504
    %v507 = vadd.f32 %v286, %v505
    %v508 = vtanh.pop %v507
    %v509 = vsub.f32 1.0, %v496
    %511 = vrot.lane.b32.xlu0 %v508, 96
    %v512 = vpop.permute.xlu0 %511
    %v514 = vmul.f32 %v509, %v512
    %516 = vrot.lane.b32.xlu0 %v445, 32
    %v517 = vpop.permute.xlu0 %516
    %v519 = vmul.f32 %v496, %v517
    %v520 = vadd.f32 %v514, %v519
    %s521 = scalar_lea.vmem %s1, 16
    %v522 = vld [vmem:[%s521] sm:$0xff]
    %vm523 = vcmp.ne.f32.partialorder %v522, 0.0
    %525 = vrot.lane.b32.xlu0 %v520, 96
    %v526 = vpop.permute.xlu0 %525
    %v528 = vsel %vm523, %v526, %v445
    %v529 = vpack.c.bf16 %v528, %v528
    %v531 = vsel %vm359, %v529, 0
    %533 = vmatprep.subr.bf16.mxu0 0
    %534 = vmatpush1.bf16.msra.mxu0 %v355
    %535 = vmatprep.subr.bf16.mxu0 0
    %536 = vmatpush1.bf16.msra.mxu0 %v356
    %537 = vmatprep.subr.bf16.mxu0 0
    %538 = vmatpush1.bf16.msra.mxu0 0
    %539 = vmatprep.subr.bf16.mxu0 0
    %540 = vmatpush1.bf16.msra.mxu0 0
    %541 = vmatprep.subr.bf16.mxu0 0
    %542 = vmatpush1.bf16.msra.mxu0 0
    %543 = vmatprep.subr.bf16.mxu0 0
    %544 = vmatpush1.bf16.msra.mxu0 0
    %545 = vmatprep.subr.bf16.mxu0 0
    %546 = vmatpush1.bf16.msra.mxu0 0
    %547 = vmatprep.subr.bf16.mxu0 0
    %548 = vmatpush1.bf16.msra.mxu0 0
    %549 = vmatprep.subr.bf16.mxu0 0
    %550 = vmatpush1.bf16.msra.mxu0 0
    %551 = vmatprep.subr.bf16.mxu0 0
    %552 = vmatpush1.bf16.msra.mxu0 0
    %553 = vmatprep.subr.bf16.mxu0 0
    %554 = vmatpush1.bf16.msra.mxu0 0
    %555 = vmatprep.subr.bf16.mxu0 0
    %556 = vmatpush1.bf16.msra.mxu0 0
    %557 = vmatprep.subr.bf16.mxu0 0
    %558 = vmatpush1.bf16.msra.mxu0 0
    %559 = vmatprep.subr.bf16.mxu0 0
    %560 = vmatpush1.bf16.msra.mxu0 0
    %561 = vmatprep.subr.bf16.mxu0 0
    %562 = vmatpush1.bf16.msra.mxu0 0
    %563 = vmatprep.subr.bf16.mxu0 0
    %564 = vmatpush1.bf16.msra.mxu0 0
    %565 = vmatprep.mubr.bf16.mxu0 0
    %566 = vmatmul.mubr.bf16.gmra.mrb[0].mxu0 %v531
    %v567 = vpop.f32.mrb[0].mxu0
    %v568 = vadd.f32 0.0, %v567
    %v569 = vpop.f32.mrb[0].mxu0
    %v570 = vpop.f32.mrb[0].mxu0
    %v571 = vpop.f32.mrb[0].mxu0
    %572 = vdwg.mxu0
    %v573 = vadd.f32 %v289, %v568
    %v574 = vxor.u32 %v573, 2147483648
    %v575 = vmul.f32 %v574, 1.442695
    %v576 = vpow.pop %v575
    %v577 = vadd.f32 %v576, 1.0
    %v578 = vrcp.pop %v577
    %v579 = vmul.f32 1.0, %v578
    %v580 = vadd.f32 %v568, %v412
    %582 = vrot.lane.b32.xlu0 %v580, 64
    %v583 = vpop.permute.xlu0 %582
    %v585 = vmul.f32 %v579, %v583
    %587 = vrot.lane.b32.xlu0 %v585, 64
    %v588 = vpop.permute.xlu0 %587
    %v590 = vadd.f32 %v289, %v588
    %v591 = vtanh.pop %v590
    %v592 = vsub.f32 1.0, %v579
    %594 = vrot.lane.b32.xlu0 %v591, 96
    %v595 = vpop.permute.xlu0 %594
    %v597 = vmul.f32 %v592, %v595
    %599 = vrot.lane.b32.xlu0 %v528, 32
    %v600 = vpop.permute.xlu0 %599
    %v602 = vmul.f32 %v579, %v600
    %v603 = vadd.f32 %v597, %v602
    %s604 = scalar_lea.vmem %s1, 24
    %v605 = vld [vmem:[%s604] sm:$0xff]
    %vm606 = vcmp.ne.f32.partialorder %v605, 0.0
    %608 = vrot.lane.b32.xlu0 %v603, 96
    %v609 = vpop.permute.xlu0 %608
    %v611 = vsel %vm606, %v609, %v528
    %v612 = vpack.c.bf16 %v611, %v611
    %v614 = vsel %vm359, %v612, 0
    %616 = vmatprep.subr.bf16.mxu0 0
    %617 = vmatpush1.bf16.msra.mxu0 %v355
    %618 = vmatprep.subr.bf16.mxu0 0
    %619 = vmatpush1.bf16.msra.mxu0 %v356
    %620 = vmatprep.subr.bf16.mxu0 0
    %621 = vmatpush1.bf16.msra.mxu0 0
    %622 = vmatprep.subr.bf16.mxu0 0
    %623 = vmatpush1.bf16.msra.mxu0 0
    %624 = vmatprep.subr.bf16.mxu0 0
    %625 = vmatpush1.bf16.msra.mxu0 0
    %626 = vmatprep.subr.bf16.mxu0 0
    %627 = vmatpush1.bf16.msra.mxu0 0
    %628 = vmatprep.subr.bf16.mxu0 0
    %629 = vmatpush1.bf16.msra.mxu0 0
    %630 = vmatprep.subr.bf16.mxu0 0
    %631 = vmatpush1.bf16.msra.mxu0 0
    %632 = vmatprep.subr.bf16.mxu0 0
    %633 = vmatpush1.bf16.msra.mxu0 0
    %634 = vmatprep.subr.bf16.mxu0 0
    %635 = vmatpush1.bf16.msra.mxu0 0
    %636 = vmatprep.subr.bf16.mxu0 0
    %637 = vmatpush1.bf16.msra.mxu0 0
    %638 = vmatprep.subr.bf16.mxu0 0
    %639 = vmatpush1.bf16.msra.mxu0 0
    %640 = vmatprep.subr.bf16.mxu0 0
    %641 = vmatpush1.bf16.msra.mxu0 0
    %642 = vmatprep.subr.bf16.mxu0 0
    %643 = vmatpush1.bf16.msra.mxu0 0
    %644 = vmatprep.subr.bf16.mxu0 0
    %645 = vmatpush1.bf16.msra.mxu0 0
    %646 = vmatprep.subr.bf16.mxu0 0
    %647 = vmatpush1.bf16.msra.mxu0 0
    %648 = vmatprep.mubr.bf16.mxu0 0
    %649 = vmatmul.mubr.bf16.gmra.mrb[0].mxu0 %v614
    %v650 = vpop.f32.mrb[0].mxu0
    %v651 = vadd.f32 0.0, %v650
    %v652 = vpop.f32.mrb[0].mxu0
    %v653 = vpop.f32.mrb[0].mxu0
    %v654 = vpop.f32.mrb[0].mxu0
    %655 = vdwg.mxu0
    %v656 = vadd.f32 %v294, %v651
    %v657 = vxor.u32 %v656, 2147483648
    %v658 = vmul.f32 %v657, 1.442695
    %v659 = vpow.pop %v658
    %v660 = vadd.f32 %v659, 1.0
    %v661 = vrcp.pop %v660
    %v662 = vmul.f32 1.0, %v661
    %v663 = vadd.f32 %v651, %v412
    %665 = vrot.lane.b32.xlu0 %v663, 64
    %v666 = vpop.permute.xlu0 %665
    %v668 = vmul.f32 %v662, %v666
    %670 = vrot.lane.b32.xlu0 %v668, 64
    %v671 = vpop.permute.xlu0 %670
    %v673 = vadd.f32 %v294, %v671
    %v674 = vtanh.pop %v673
    %v675 = vsub.f32 1.0, %v662
    %677 = vrot.lane.b32.xlu0 %v674, 96
    %v678 = vpop.permute.xlu0 %677
    %v680 = vmul.f32 %v675, %v678
    %682 = vrot.lane.b32.xlu0 %v611, 32
    %v683 = vpop.permute.xlu0 %682
    %v685 = vmul.f32 %v662, %v683
    %v686 = vadd.f32 %v680, %v685
    %s687 = scalar_lea.vmem %s1, 32
    %v688 = vld [vmem:[%s687] sm:$0xff]
    %vm689 = vcmp.ne.f32.partialorder %v688, 0.0
    %691 = vrot.lane.b32.xlu0 %v686, 96
    %v692 = vpop.permute.xlu0 %691
    %v694 = vsel %vm689, %v692, %v611
    %v695 = vpack.c.bf16 %v694, %v694
    %v697 = vsel %vm359, %v695, 0
    %699 = vmatprep.subr.bf16.mxu0 0
    %700 = vmatpush1.bf16.msra.mxu0 %v355
    %701 = vmatprep.subr.bf16.mxu0 0
    %702 = vmatpush1.bf16.msra.mxu0 %v356
    %703 = vmatprep.subr.bf16.mxu0 0
    %704 = vmatpush1.bf16.msra.mxu0 0
    %705 = vmatprep.subr.bf16.mxu0 0
    %706 = vmatpush1.bf16.msra.mxu0 0
    %707 = vmatprep.subr.bf16.mxu0 0
    %708 = vmatpush1.bf16.msra.mxu0 0
    %709 = vmatprep.subr.bf16.mxu0 0
    %710 = vmatpush1.bf16.msra.mxu0 0
    %711 = vmatprep.subr.bf16.mxu0 0
    %712 = vmatpush1.bf16.msra.mxu0 0
    %713 = vmatprep.subr.bf16.mxu0 0
    %714 = vmatpush1.bf16.msra.mxu0 0
    %715 = vmatprep.subr.bf16.mxu0 0
    %716 = vmatpush1.bf16.msra.mxu0 0
    %717 = vmatprep.subr.bf16.mxu0 0
    %718 = vmatpush1.bf16.msra.mxu0 0
    %719 = vmatprep.subr.bf16.mxu0 0
    %720 = vmatpush1.bf16.msra.mxu0 0
    %721 = vmatprep.subr.bf16.mxu0 0
    %722 = vmatpush1.bf16.msra.mxu0 0
    %723 = vmatprep.subr.bf16.mxu0 0
    %724 = vmatpush1.bf16.msra.mxu0 0
    %725 = vmatprep.subr.bf16.mxu0 0
    %726 = vmatpush1.bf16.msra.mxu0 0
    %727 = vmatprep.subr.bf16.mxu0 0
    %728 = vmatpush1.bf16.msra.mxu0 0
    %729 = vmatprep.subr.bf16.mxu0 0
    %730 = vmatpush1.bf16.msra.mxu0 0
    %731 = vmatprep.mubr.bf16.mxu0 0
    %732 = vmatmul.mubr.bf16.gmra.mrb[0].mxu0 %v697
    %v733 = vpop.f32.mrb[0].mxu0
    %v734 = vadd.f32 0.0, %v733
    %v735 = vpop.f32.mrb[0].mxu0
    %v736 = vpop.f32.mrb[0].mxu0
    %v737 = vpop.f32.mrb[0].mxu0
    %738 = vdwg.mxu0
    %v739 = vadd.f32 %v297, %v734
    %v740 = vxor.u32 %v739, 2147483648
    %v741 = vmul.f32 %v740, 1.442695
    %v742 = vpow.pop %v741
    %v743 = vadd.f32 %v742, 1.0
    %v744 = vrcp.pop %v743
    %v745 = vmul.f32 1.0, %v744
    %v746 = vadd.f32 %v734, %v412
    %748 = vrot.lane.b32.xlu0 %v746, 64
    %v749 = vpop.permute.xlu0 %748
    %v751 = vmul.f32 %v745, %v749
    %753 = vrot.lane.b32.xlu0 %v751, 64
    %v754 = vpop.permute.xlu0 %753
    %v756 = vadd.f32 %v297, %v754
    %v757 = vtanh.pop %v756
    %v758 = vsub.f32 1.0, %v745
    %760 = vrot.lane.b32.xlu0 %v757, 96
    %v761 = vpop.permute.xlu0 %760
    %v763 = vmul.f32 %v758, %v761
    %765 = vrot.lane.b32.xlu0 %v694, 32
    %v766 = vpop.permute.xlu0 %765
    %v768 = vmul.f32 %v745, %v766
    %v769 = vadd.f32 %v763, %v768
    %s770 = scalar_lea.vmem %s1, 40
    %v771 = vld [vmem:[%s770] sm:$0xff]
    %vm772 = vcmp.ne.f32.partialorder %v771, 0.0
    %774 = vrot.lane.b32.xlu0 %v769, 96
    %v775 = vpop.permute.xlu0 %774
    %v777 = vsel %vm772, %v775, %v694
    %v778 = vpack.c.bf16 %v777, %v777
    %v780 = vsel %vm359, %v778, 0
    %782 = vmatprep.subr.bf16.mxu0 0
    %783 = vmatpush1.bf16.msra.mxu0 %v355
    %784 = vmatprep.subr.bf16.mxu0 0
    %785 = vmatpush1.bf16.msra.mxu0 %v356
    %786 = vmatprep.subr.bf16.mxu0 0
    %787 = vmatpush1.bf16.msra.mxu0 0
    %788 = vmatprep.subr.bf16.mxu0 0
    %789 = vmatpush1.bf16.msra.mxu0 0
    %790 = vmatprep.subr.bf16.mxu0 0
    %791 = vmatpush1.bf16.msra.mxu0 0
    %792 = vmatprep.subr.bf16.mxu0 0
    %793 = vmatpush1.bf16.msra.mxu0 0
    %794 = vmatprep.subr.bf16.mxu0 0
    %795 = vmatpush1.bf16.msra.mxu0 0
    %796 = vmatprep.subr.bf16.mxu0 0
    %797 = vmatpush1.bf16.msra.mxu0 0
    %798 = vmatprep.subr.bf16.mxu0 0
    %799 = vmatpush1.bf16.msra.mxu0 0
    %800 = vmatprep.subr.bf16.mxu0 0
    %801 = vmatpush1.bf16.msra.mxu0 0
    %802 = vmatprep.subr.bf16.mxu0 0
    %803 = vmatpush1.bf16.msra.mxu0 0
    %804 = vmatprep.subr.bf16.mxu0 0
    %805 = vmatpush1.bf16.msra.mxu0 0
    %806 = vmatprep.subr.bf16.mxu0 0
    %807 = vmatpush1.bf16.msra.mxu0 0
    %808 = vmatprep.subr.bf16.mxu0 0
    %809 = vmatpush1.bf16.msra.mxu0 0
    %810 = vmatprep.subr.bf16.mxu0 0
    %811 = vmatpush1.bf16.msra.mxu0 0
    %812 = vmatprep.subr.bf16.mxu0 0
    %813 = vmatpush1.bf16.msra.mxu0 0
    %814 = vmatprep.mubr.bf16.mxu0 0
    %815 = vmatmul.mubr.bf16.gmra.mrb[0].mxu0 %v780
    %v816 = vpop.f32.mrb[0].mxu0
    %v817 = vadd.f32 0.0, %v816
    %v818 = vpop.f32.mrb[0].mxu0
    %v819 = vpop.f32.mrb[0].mxu0
    %v820 = vpop.f32.mrb[0].mxu0
    %821 = vdwg.mxu0
    %v822 = vadd.f32 %v302, %v817
    %v823 = vxor.u32 %v822, 2147483648
    %v824 = vmul.f32 %v823, 1.442695
    %v825 = vpow.pop %v824
    %v826 = vadd.f32 %v825, 1.0
    %v827 = vrcp.pop %v826
    %v828 = vmul.f32 1.0, %v827
    %v829 = vadd.f32 %v817, %v412
    %831 = vrot.lane.b32.xlu0 %v829, 64
    %v832 = vpop.permute.xlu0 %831
    %v834 = vmul.f32 %v828, %v832
    %836 = vrot.lane.b32.xlu0 %v834, 64
    %v837 = vpop.permute.xlu0 %836
    %v839 = vadd.f32 %v302, %v837
    %v840 = vtanh.pop %v839
    %v841 = vsub.f32 1.0, %v828
    %843 = vrot.lane.b32.xlu0 %v840, 96
    %v844 = vpop.permute.xlu0 %843
    %v846 = vmul.f32 %v841, %v844
    %848 = vrot.lane.b32.xlu0 %v777, 32
    %v849 = vpop.permute.xlu0 %848
    %v851 = vmul.f32 %v828, %v849
    %v852 = vadd.f32 %v846, %v851
    %s853 = scalar_lea.vmem %s1, 48
    %v854 = vld [vmem:[%s853] sm:$0xff]
    %vm855 = vcmp.ne.f32.partialorder %v854, 0.0
    %857 = vrot.lane.b32.xlu0 %v852, 96
    %v858 = vpop.permute.xlu0 %857
    %v860 = vsel %vm855, %v858, %v777
    %v861 = vpack.c.bf16 %v860, %v860
    %v863 = vsel %vm359, %v861, 0
    %865 = vmatprep.subr.bf16.mxu0 0
    %866 = vmatpush1.bf16.msra.mxu0 %v355
    %867 = vmatprep.subr.bf16.mxu0 0
    %868 = vmatpush1.bf16.msra.mxu0 %v356
    %869 = vmatprep.subr.bf16.mxu0 0
    %870 = vmatpush1.bf16.msra.mxu0 0
    %871 = vmatprep.subr.bf16.mxu0 0
    %872 = vmatpush1.bf16.msra.mxu0 0
    %873 = vmatprep.subr.bf16.mxu0 0
    %874 = vmatpush1.bf16.msra.mxu0 0
    %875 = vmatprep.subr.bf16.mxu0 0
    %876 = vmatpush1.bf16.msra.mxu0 0
    %877 = vmatprep.subr.bf16.mxu0 0
    %878 = vmatpush1.bf16.msra.mxu0 0
    %879 = vmatprep.subr.bf16.mxu0 0
    %880 = vmatpush1.bf16.msra.mxu0 0
    %881 = vmatprep.subr.bf16.mxu0 0
    %882 = vmatpush1.bf16.msra.mxu0 0
    %883 = vmatprep.subr.bf16.mxu0 0
    %884 = vmatpush1.bf16.msra.mxu0 0
    %885 = vmatprep.subr.bf16.mxu0 0
    %886 = vmatpush1.bf16.msra.mxu0 0
    %887 = vmatprep.subr.bf16.mxu0 0
    %888 = vmatpush1.bf16.msra.mxu0 0
    %889 = vmatprep.subr.bf16.mxu0 0
    %890 = vmatpush1.bf16.msra.mxu0 0
    %891 = vmatprep.subr.bf16.mxu0 0
    %892 = vmatpush1.bf16.msra.mxu0 0
    %893 = vmatprep.subr.bf16.mxu0 0
    %894 = vmatpush1.bf16.msra.mxu0 0
    %895 = vmatprep.subr.bf16.mxu0 0
    %896 = vmatpush1.bf16.msra.mxu0 0
    %897 = vmatprep.mubr.bf16.mxu0 0
    %898 = vmatmul.mubr.bf16.gmra.mrb[0].mxu0 %v863
    %v899 = vpop.f32.mrb[0].mxu0
    %v900 = vadd.f32 0.0, %v899
    %v901 = vpop.f32.mrb[0].mxu0
    %v902 = vpop.f32.mrb[0].mxu0
    %v903 = vpop.f32.mrb[0].mxu0
    %904 = vdwg.mxu0
    %v905 = vadd.f32 %v305, %v900
    %v906 = vxor.u32 %v905, 2147483648
    %v907 = vmul.f32 %v906, 1.442695
    %v908 = vpow.pop %v907
    %v909 = vadd.f32 %v908, 1.0
    %v910 = vrcp.pop %v909
    %v911 = vmul.f32 1.0, %v910
    %v912 = vadd.f32 %v900, %v412
    %914 = vrot.lane.b32.xlu0 %v912, 64
    %v915 = vpop.permute.xlu0 %914
    %v917 = vmul.f32 %v911, %v915
    %919 = vrot.lane.b32.xlu0 %v917, 64
    %v920 = vpop.permute.xlu0 %919
    %v922 = vadd.f32 %v305, %v920
    %v923 = vtanh.pop %v922
    %v924 = vsub.f32 1.0, %v911
    %926 = vrot.lane.b32.xlu0 %v923, 96
    %v927 = vpop.permute.xlu0 %926
    %v929 = vmul.f32 %v924, %v927
    %931 = vrot.lane.b32.xlu0 %v860, 32
    %v932 = vpop.permute.xlu0 %931
    %v934 = vmul.f32 %v911, %v932
    %v935 = vadd.f32 %v929, %v934
    %s936 = scalar_lea.vmem %s1, 56
    %v937 = vld [vmem:[%s936] sm:$0xff]
    %vm938 = vcmp.ne.f32.partialorder %v937, 0.0
    %940 = vrot.lane.b32.xlu0 %v935, 96
    %v941 = vpop.permute.xlu0 %940
    %v943 = vsel %vm938, %v941, %v860
    %v944 = vpack.c.bf16 %v943, %v943
    %v946 = vsel %vm359, %v944, 0
    %948 = vmatprep.subr.bf16.mxu0 0
    %949 = vmatpush1.bf16.msra.mxu0 %v355
    %950 = vmatprep.subr.bf16.mxu0 0
    %951 = vmatpush1.bf16.msra.mxu0 %v356
    %952 = vmatprep.subr.bf16.mxu0 0
    %953 = vmatpush1.bf16.msra.mxu0 0
    %954 = vmatprep.subr.bf16.mxu0 0
    %955 = vmatpush1.bf16.msra.mxu0 0
    %956 = vmatprep.subr.bf16.mxu0 0
    %957 = vmatpush1.bf16.msra.mxu0 0
    %958 = vmatprep.subr.bf16.mxu0 0
    %959 = vmatpush1.bf16.msra.mxu0 0
    %960 = vmatprep.subr.bf16.mxu0 0
    %961 = vmatpush1.bf16.msra.mxu0 0
    %962 = vmatprep.subr.bf16.mxu0 0
    %963 = vmatpush1.bf16.msra.mxu0 0
    %964 = vmatprep.subr.bf16.mxu0 0
    %965 = vmatpush1.bf16.msra.mxu0 0
    %966 = vmatprep.subr.bf16.mxu0 0
    %967 = vmatpush1.bf16.msra.mxu0 0
    %968 = vmatprep.subr.bf16.mxu0 0
    %969 = vmatpush1.bf16.msra.mxu0 0
    %970 = vmatprep.subr.bf16.mxu0 0
    %971 = vmatpush1.bf16.msra.mxu0 0
    %972 = vmatprep.subr.bf16.mxu0 0
    %973 = vmatpush1.bf16.msra.mxu0 0
    %974 = vmatprep.subr.bf16.mxu0 0
    %975 = vmatpush1.bf16.msra.mxu0 0
    %976 = vmatprep.subr.bf16.mxu0 0
    %977 = vmatpush1.bf16.msra.mxu0 0
    %978 = vmatprep.subr.bf16.mxu0 0
    %979 = vmatpush1.bf16.msra.mxu0 0
    %980 = vmatprep.mubr.bf16.mxu0 0
    %981 = vmatmul.mubr.bf16.gmra.mrb[0].mxu0 %v946
    %v982 = vpop.f32.mrb[0].mxu0
    %v983 = vadd.f32 0.0, %v982
    %v984 = vpop.f32.mrb[0].mxu0
    %v985 = vpop.f32.mrb[0].mxu0
    %v986 = vpop.f32.mrb[0].mxu0
    %987 = vdwg.mxu0
    %v988 = vadd.f32 %v310, %v983
    %v989 = vxor.u32 %v988, 2147483648
    %v990 = vmul.f32 %v989, 1.442695
    %v991 = vpow.pop %v990
    %v992 = vadd.f32 %v991, 1.0
    %v993 = vrcp.pop %v992
    %v994 = vmul.f32 1.0, %v993
    %v995 = vadd.f32 %v983, %v412
    %997 = vrot.lane.b32.xlu0 %v995, 64
    %v998 = vpop.permute.xlu0 %997
    %v1000 = vmul.f32 %v994, %v998
    %1002 = vrot.lane.b32.xlu0 %v1000, 64
    %v1003 = vpop.permute.xlu0 %1002
    %v1005 = vadd.f32 %v310, %v1003
    %v1006 = vtanh.pop %v1005
    %v1007 = vsub.f32 1.0, %v994
    %1009 = vrot.lane.b32.xlu0 %v1006, 96
    %v1010 = vpop.permute.xlu0 %1009
    %v1012 = vmul.f32 %v1007, %v1010
    %1014 = vrot.lane.b32.xlu0 %v943, 32
    %v1015 = vpop.permute.xlu0 %1014
    %v1017 = vmul.f32 %v994, %v1015
    %v1018 = vadd.f32 %v1012, %v1017
    %s1019 = scalar_lea.vmem %s1, 64
    %v1020 = vld [vmem:[%s1019] sm:$0xff]
    %vm1021 = vcmp.ne.f32.partialorder %v1020, 0.0
    %1023 = vrot.lane.b32.xlu0 %v1018, 96
    %v1024 = vpop.permute.xlu0 %1023
    %v1026 = vsel %vm1021, %v1024, %v943
    %v1027 = vpack.c.bf16 %v1026, %v1026
    %v1029 = vsel %vm359, %v1027, 0
    %1031 = vmatprep.subr.bf16.mxu0 0
    %1032 = vmatpush1.bf16.msra.mxu0 %v355
    %1033 = vmatprep.subr.bf16.mxu0 0
    %1034 = vmatpush1.bf16.msra.mxu0 %v356
    %1035 = vmatprep.subr.bf16.mxu0 0
    %1036 = vmatpush1.bf16.msra.mxu0 0
    %1037 = vmatprep.subr.bf16.mxu0 0
    %1038 = vmatpush1.bf16.msra.mxu0 0
    %1039 = vmatprep.subr.bf16.mxu0 0
    %1040 = vmatpush1.bf16.msra.mxu0 0
    %1041 = vmatprep.subr.bf16.mxu0 0
    %1042 = vmatpush1.bf16.msra.mxu0 0
    %1043 = vmatprep.subr.bf16.mxu0 0
    %1044 = vmatpush1.bf16.msra.mxu0 0
    %1045 = vmatprep.subr.bf16.mxu0 0
    %1046 = vmatpush1.bf16.msra.mxu0 0
    %1047 = vmatprep.subr.bf16.mxu0 0
    %1048 = vmatpush1.bf16.msra.mxu0 0
    %1049 = vmatprep.subr.bf16.mxu0 0
    %1050 = vmatpush1.bf16.msra.mxu0 0
    %1051 = vmatprep.subr.bf16.mxu0 0
    %1052 = vmatpush1.bf16.msra.mxu0 0
    %1053 = vmatprep.subr.bf16.mxu0 0
    %1054 = vmatpush1.bf16.msra.mxu0 0
    %1055 = vmatprep.subr.bf16.mxu0 0
    %1056 = vmatpush1.bf16.msra.mxu0 0
    %1057 = vmatprep.subr.bf16.mxu0 0
    %1058 = vmatpush1.bf16.msra.mxu0 0
    %1059 = vmatprep.subr.bf16.mxu0 0
    %1060 = vmatpush1.bf16.msra.mxu0 0
    %1061 = vmatprep.subr.bf16.mxu0 0
    %1062 = vmatpush1.bf16.msra.mxu0 0
    %1063 = vmatprep.mubr.bf16.mxu0 0
    %1064 = vmatmul.mubr.bf16.gmra.mrb[0].mxu0 %v1029
    %v1065 = vpop.f32.mrb[0].mxu0
    %v1066 = vadd.f32 0.0, %v1065
    %v1067 = vpop.f32.mrb[0].mxu0
    %v1068 = vpop.f32.mrb[0].mxu0
    %v1069 = vpop.f32.mrb[0].mxu0
    %1070 = vdwg.mxu0
    %v1071 = vadd.f32 %v313, %v1066
    %v1072 = vxor.u32 %v1071, 2147483648
    %v1073 = vmul.f32 %v1072, 1.442695
    %v1074 = vpow.pop %v1073
    %v1075 = vadd.f32 %v1074, 1.0
    %v1076 = vrcp.pop %v1075
    %v1077 = vmul.f32 1.0, %v1076
    %v1078 = vadd.f32 %v1066, %v412
    %1080 = vrot.lane.b32.xlu0 %v1078, 64
    %v1081 = vpop.permute.xlu0 %1080
    %v1083 = vmul.f32 %v1077, %v1081
    %1085 = vrot.lane.b32.xlu0 %v1083, 64
    %v1086 = vpop.permute.xlu0 %1085
    %v1088 = vadd.f32 %v313, %v1086
    %v1089 = vtanh.pop %v1088
    %v1090 = vsub.f32 1.0, %v1077
    %1092 = vrot.lane.b32.xlu0 %v1089, 96
    %v1093 = vpop.permute.xlu0 %1092
    %v1095 = vmul.f32 %v1090, %v1093
    %1097 = vrot.lane.b32.xlu0 %v1026, 32
    %v1098 = vpop.permute.xlu0 %1097
    %v1100 = vmul.f32 %v1077, %v1098
    %v1101 = vadd.f32 %v1095, %v1100
    %s1102 = scalar_lea.vmem %s1, 72
    %v1103 = vld [vmem:[%s1102] sm:$0xff]
    %vm1104 = vcmp.ne.f32.partialorder %v1103, 0.0
    %1106 = vrot.lane.b32.xlu0 %v1101, 96
    %v1107 = vpop.permute.xlu0 %1106
    %v1109 = vsel %vm1104, %v1107, %v1026
    %v1110 = vld [vmem:[#allocation14] sm:$0xf]
    %v1111 = vld [vmem:[#allocation14 + $0x4] sm:$0xf]
    %v1112 = vld [vmem:[#allocation14 + $0x8] sm:$0xf]
    %v1113 = vld [vmem:[#allocation14 + $0xc] sm:$0xf]
    %v1114 = vld [vmem:[#allocation14 + $0x10] sm:$0xf]
    %v1115 = vld [vmem:[#allocation14 + $0x14] sm:$0xf]
    %v1116 = vld [vmem:[#allocation14 + $0x18] sm:$0xf]
    %v1117 = vld [vmem:[#allocation14 + $0x1c] sm:$0xf]
    %v1118 = vld [vmem:[#allocation14 + $0x20] sm:$0xf]
    %v1119 = vld [vmem:[#allocation14 + $0x24] sm:$0xf]
    %v1120 = vld [vmem:[#allocation14 + $0x28] sm:$0xf]
    %v1121 = vld [vmem:[#allocation14 + $0x2c] sm:$0xf]
    %v1122 = vld [vmem:[#allocation14 + $0x30] sm:$0xf]
    %v1123 = vld [vmem:[#allocation14 + $0x34] sm:$0xf]
    %v1124 = vld [vmem:[#allocation14 + $0x38] sm:$0xf]
    %v1125 = vld [vmem:[#allocation14 + $0x3c] sm:$0xf]
    %v1126 = vld [vmem:[%s12] sm:$0xff]
    %v1127 = vld [vmem:[%s12 + $0x8] sm:$0xff]
    %v1128 = vld [vmem:[%s12 + $0x10] sm:$0xff]
    %v1129 = vld [vmem:[%s12 + $0x18] sm:$0xff]
    %v1130 = vld [vmem:[#allocation11] sm:$0xff]
    %v1131 = vld [vmem:[#allocation13] sm:$0xff]
    %v1132 = vld [vmem:[%s10] sm:$0xff]
    %v1133 = vld [vmem:[%s13] sm:$0xff]
    %v1134 = vld [vmem:[#allocation16] sm:$0xff]
    %v1135 = vld [vmem:[%s15] sm:$0xf]
    %v1136 = vld [vmem:[%s15 + $0x4] sm:$0xf]
    %v1137 = vld [vmem:[%s15 + $0x8] sm:$0xf]
    %v1138 = vld [vmem:[%s15 + $0xc] sm:$0xf]
    %v1139 = vld [vmem:[%s16] sm:$0xff]
    %v1140 = vlaneseq
    %v1141 = vand.u32 %v1140, 127
    %v1142 = vpack.c.bf16 %v1109, %v1109
    %v1147 = vunpack.c.l.b16 %v1126
    %v1148 = vunpack.c.h.b16 %v1126
    %v1149 = vunpack.c.l.b16 %v1127
    %v1150 = vunpack.c.h.b16 %v1127
    %v1151 = vunpack.c.l.b16 %v1128
    %v1152 = vunpack.c.h.b16 %v1128
    %v1153 = vunpack.c.l.b16 %v1129
    %v1154 = vunpack.c.h.b16 %v1129
    %v1155 = vpack.c.b16 %v1149, %v1147
    %v1156 = vpack.c.b16 %v1150, %v1148
    %v1157 = vpack.c.b16 %v1153, %v1151
    %v1158 = vpack.c.b16 %v1154, %v1152
    %v1164 = vsel %vm359, %v1142, 0
    %1166 = vmatprep.subr.bf16.mxu0 %v1156
    %1167 = vmatpush1.bf16.msra.mxu0 %v1155
    %1168 = vmatprep.subr.bf16.mxu0 %v1158
    %1169 = vmatpush1.bf16.msra.mxu0 %v1157
    %1170 = vmatprep.subr.bf16.mxu0 0
    %1171 = vmatpush1.bf16.msra.mxu0 0
    %1172 = vmatprep.subr.bf16.mxu0 0
    %1173 = vmatpush1.bf16.msra.mxu0 0
    %1174 = vmatprep.subr.bf16.mxu0 0
    %1175 = vmatpush1.bf16.msra.mxu0 0
    %1176 = vmatprep.subr.bf16.mxu0 0
    %1177 = vmatpush1.bf16.msra.mxu0 0
    %1178 = vmatprep.subr.bf16.mxu0 0
    %1179 = vmatpush1.bf16.msra.mxu0 0
    %1180 = vmatprep.subr.bf16.mxu0 0
    %1181 = vmatpush1.bf16.msra.mxu0 0
    %1182 = vmatprep.subr.bf16.mxu0 0
    %1183 = vmatpush1.bf16.msra.mxu0 0
    %1184 = vmatprep.subr.bf16.mxu0 0
    %1185 = vmatpush1.bf16.msra.mxu0 0
    %1186 = vmatprep.subr.bf16.mxu0 0
    %1187 = vmatpush1.bf16.msra.mxu0 0
    %1188 = vmatprep.subr.bf16.mxu0 0
    %1189 = vmatpush1.bf16.msra.mxu0 0
    %1190 = vmatprep.subr.bf16.mxu0 0
    %1191 = vmatpush1.bf16.msra.mxu0 0
    %1192 = vmatprep.subr.bf16.mxu0 0
    %1193 = vmatpush1.bf16.msra.mxu0 0
    %1194 = vmatprep.subr.bf16.mxu0 0
    %1195 = vmatpush1.bf16.msra.mxu0 0
    %1196 = vmatprep.subr.bf16.mxu0 0
    %1197 = vmatpush1.bf16.msra.mxu0 0
    %1198 = vmatprep.mubr.bf16.mxu0 0
    %1199 = vmatmul.mubr.bf16.gmra.mrb[0].mxu0 %v1164
    %v1200 = vpop.f32.mrb[0].mxu0
    %v1201 = vpop.f32.mrb[0].mxu0
    %v1202 = vadd.f32 0.0, %v1201
    %v1203 = vpop.f32.mrb[0].mxu0
    %v1204 = vpop.f32.mrb[0].mxu0
    %1205 = vdwg.mxu0
    %v1206 = vld [vmem:[#allocation2] sm:$0xf]
    %v1223 = vunpack.c.l.b16 %v1110
    %v1224 = vunpack.c.l.b16 %v1111
    %v1225 = vunpack.c.l.b16 %v1112
    %v1226 = vunpack.c.l.b16 %v1113
    %v1227 = vunpack.c.l.b16 %v1114
    %v1228 = vunpack.c.l.b16 %v1115
    %v1229 = vunpack.c.l.b16 %v1116
    %v1230 = vunpack.c.l.b16 %v1117
    %v1231 = vunpack.c.l.b16 %v1118
    %v1232 = vunpack.c.l.b16 %v1119
    %v1233 = vunpack.c.l.b16 %v1120
    %v1234 = vunpack.c.l.b16 %v1121
    %v1235 = vunpack.c.l.b16 %v1122
    %v1236 = vunpack.c.l.b16 %v1123
    %v1237 = vunpack.c.l.b16 %v1124
    %v1238 = vunpack.c.l.b16 %v1125
    %v1239 = vpack.c.b16 %v1224, %v1223
    %v1240 = vpack.c.b16 %v1226, %v1225
    %v1241 = vpack.c.b16 %v1228, %v1227
    %v1242 = vpack.c.b16 %v1230, %v1229
    %v1243 = vpack.c.b16 %v1232, %v1231
    %v1244 = vpack.c.b16 %v1234, %v1233
    %v1245 = vpack.c.b16 %v1236, %v1235
    %v1246 = vpack.c.b16 %v1238, %v1237
    %1255 = vmatprep.subr.bf16.mxu0 0
    %1256 = vmatpush1.bf16.msra.mxu0 %v1239
    %1257 = vmatprep.subr.bf16.mxu0 0
    %1258 = vmatpush1.bf16.msra.mxu0 %v1240
    %1259 = vmatprep.subr.bf16.mxu0 0
    %1260 = vmatpush1.bf16.msra.mxu0 %v1241
    %1261 = vmatprep.subr.bf16.mxu0 0
    %1262 = vmatpush1.bf16.msra.mxu0 %v1242
    %1263 = vmatprep.subr.bf16.mxu0 0
    %1264 = vmatpush1.bf16.msra.mxu0 %v1243
    %1265 = vmatprep.subr.bf16.mxu0 0
    %1266 = vmatpush1.bf16.msra.mxu0 %v1244
    %1267 = vmatprep.subr.bf16.mxu0 0
    %1268 = vmatpush1.bf16.msra.mxu0 %v1245
    %1269 = vmatprep.subr.bf16.mxu0 0
    %1270 = vmatpush1.bf16.msra.mxu0 %v1246
    %1271 = vmatprep.subr.bf16.mxu0 0
    %1272 = vmatpush1.bf16.msra.mxu0 0
    %1273 = vmatprep.subr.bf16.mxu0 0
    %1274 = vmatpush1.bf16.msra.mxu0 0
    %1275 = vmatprep.subr.bf16.mxu0 0
    %1276 = vmatpush1.bf16.msra.mxu0 0
    %1277 = vmatprep.subr.bf16.mxu0 0
    %1278 = vmatpush1.bf16.msra.mxu0 0
    %1279 = vmatprep.subr.bf16.mxu0 0
    %1280 = vmatpush1.bf16.msra.mxu0 0
    %1281 = vmatprep.subr.bf16.mxu0 0
    %1282 = vmatpush1.bf16.msra.mxu0 0
    %1283 = vmatprep.subr.bf16.mxu0 0
    %1284 = vmatpush1.bf16.msra.mxu0 0
    %1285 = vmatprep.subr.bf16.mxu0 0
    %1286 = vmatpush1.bf16.msra.mxu0 0
    %1287 = vmatprep.mubr.bf16.mxu0 0
    %1288 = vmatmul.mubr.bf16.gmra.mrb[0].mxu0 %v1206
    %v1289 = vpop.f32.mrb[0].mxu0
    %v1290 = vadd.f32 0.0, %v1289
    %v1291 = vpop.f32.mrb[0].mxu0
    %v1292 = vpop.f32.mrb[0].mxu0
    %v1293 = vpop.f32.mrb[0].mxu0
    %1294 = vdwg.mxu0
    %v1295 = vld [vmem:[%s3] sm:$0xff]
    %1297 = vset.pattern.permute.xlu0 0
    %1298 = vperm.xlu0 %1297, %v1295
    %v1299 = vpop.permute.xlu0 %1298
    %v1301 = vmul.f32 %v1299, %v1130
    %v1302 = vadd.f32 %v1290, %v1301
    %v1303 = vadd.f32 %v1302, %v1131
    %v1304 = vadd.f32 %v1303, %v1202
    %v1305 = vxor.u32 %v1304, 2147483648
    %v1306 = vmul.f32 %v1305, 1.442695
    %v1307 = vpow.pop %v1306
    %v1308 = vadd.f32 %v1307, 1.0
    %v1309 = vrcp.pop %v1308
    %v1310 = vmul.f32 1.0, %v1309
    %1312 = vrot.lane.b32.xlu0 %v1132, 64
    %v1313 = vpop.permute.xlu0 %1312
    %v1315 = vadd.f32 %v1202, %v1313
    %1317 = vrot.lane.b32.xlu0 %v1315, 64
    %v1318 = vpop.permute.xlu0 %1317
    %v1320 = vmul.f32 %v1310, %v1318
    %1322 = vrot.lane.b32.xlu0 %v1320, 64
    %v1323 = vpop.permute.xlu0 %1322
    %v1325 = vadd.f32 %v1303, %v1323
    %v1326 = vtanh.pop %v1325
    %v1327 = vsub.f32 1.0, %v1310
    %1329 = vrot.lane.b32.xlu0 %v1326, 96
    %v1330 = vpop.permute.xlu0 %1329
    %v1332 = vmul.f32 %v1327, %v1330
    %1334 = vrot.lane.b32.xlu0 %v1109, 32
    %v1335 = vpop.permute.xlu0 %1334
    %v1337 = vmul.f32 %v1310, %v1335
    %v1338 = vadd.f32 %v1332, %v1337
    %v1339 = vpack.c.bf16 %v1338, %v1338
    %1341 = vrot.lane.b32.xlu0 %v1339, 96
    %v1342 = vpop.permute.xlu0 %1341
    %v1344 = vsel %vm359, %v1342, 0
    %1346 = vmatprep.subr.bf16.mxu0 %v1156
    %1347 = vmatpush1.bf16.msra.mxu0 %v1155
    %1348 = vmatprep.subr.bf16.mxu0 %v1158
    %1349 = vmatpush1.bf16.msra.mxu0 %v1157
    %1350 = vmatprep.subr.bf16.mxu0 0
    %1351 = vmatpush1.bf16.msra.mxu0 0
    %1352 = vmatprep.subr.bf16.mxu0 0
    %1353 = vmatpush1.bf16.msra.mxu0 0
    %1354 = vmatprep.subr.bf16.mxu0 0
    %1355 = vmatpush1.bf16.msra.mxu0 0
    %1356 = vmatprep.subr.bf16.mxu0 0
    %1357 = vmatpush1.bf16.msra.mxu0 0
    %1358 = vmatprep.subr.bf16.mxu0 0
    %1359 = vmatpush1.bf16.msra.mxu0 0
    %1360 = vmatprep.subr.bf16.mxu0 0
    %1361 = vmatpush1.bf16.msra.mxu0 0
    %1362 = vmatprep.subr.bf16.mxu0 0
    %1363 = vmatpush1.bf16.msra.mxu0 0
    %1364 = vmatprep.subr.bf16.mxu0 0
    %1365 = vmatpush1.bf16.msra.mxu0 0
    %1366 = vmatprep.subr.bf16.mxu0 0
    %1367 = vmatpush1.bf16.msra.mxu0 0
    %1368 = vmatprep.subr.bf16.mxu0 0
    %1369 = vmatpush1.bf16.msra.mxu0 0
    %1370 = vmatprep.subr.bf16.mxu0 0
    %1371 = vmatpush1.bf16.msra.mxu0 0
    %1372 = vmatprep.subr.bf16.mxu0 0
    %1373 = vmatpush1.bf16.msra.mxu0 0
    %1374 = vmatprep.subr.bf16.mxu0 0
    %1375 = vmatpush1.bf16.msra.mxu0 0
    %1376 = vmatprep.subr.bf16.mxu0 0
    %1377 = vmatpush1.bf16.msra.mxu0 0
    %1378 = vmatprep.mubr.bf16.mxu0 0
    %1379 = vmatmul.mubr.bf16.gmra.mrb[0].mxu0 %v1344
    %v1380 = vpop.f32.mrb[0].mxu0
    %v1381 = vadd.f32 0.0, %v1380
    %v1382 = vpop.f32.mrb[0].mxu0
    %v1383 = vadd.f32 0.0, %v1382
    %v1384 = vpop.f32.mrb[0].mxu0
    %v1385 = vpop.f32.mrb[0].mxu0
    %1386 = vdwg.mxu0
    %v1387 = vadd.f32 %v1381, %v1133
    %1388 = vmax.xlane.f32.xlu0 %v1387
    %v1389 = vpop.xlane.xlu0 %1388
    %vm1390 = vcmp.ge.f32.partialorder %v1387, %v1389
    %v1391 = vsel %vm1390, %v1141, 128
    %v1392 = vand.u32 %v1391, 65535
    %v1393 = vshra.s32 %v1391, 16
    %v1394 = vcvt.s32.f32 %v1392
    %v1395 = vcvt.s32.f32 %v1393
    %1396 = vmin.xlane.f32.xlu0 %v1395
    %v1397 = vpop.xlane.xlu0 %1396
    %vm1398 = vcmp.eq.f32.partialorder %v1395, %v1397
    %v1399 = vsel %vm1398, %v1394, inf
    %1400 = vmin.xlane.f32.xlu0 %v1399
    %v1401 = vpop.xlane.xlu0 %1400
    %v1402 = vcvt.f32.s32 %v1401
    %v1403 = vcvt.f32.s32 %v1397
    %v1404 = vshll.u32 %v1403, 16
    %v1405 = vadd.s32 %v1404, %v1402
    %vm1406 = vcmp.eq.s32.totalorder %v1141, %v1405
    %v1407 = vsel %vm1406, 1, 0
    %v1408 = vcvt.s32.f32 %v1407
    %v1409 = vpack.c.bf16 %v1408, %v1408
    %1410 = vmatprep.subr.bf16.mxu0 0
    %1411 = vmatpush1.bf16.msra.mxu0 %v1239
    %1412 = vmatprep.subr.bf16.mxu0 0
    %1413 = vmatpush1.bf16.msra.mxu0 %v1240
    %1414 = vmatprep.subr.bf16.mxu0 0
    %1415 = vmatpush1.bf16.msra.mxu0 %v1241
    %1416 = vmatprep.subr.bf16.mxu0 0
    %1417 = vmatpush1.bf16.msra.mxu0 %v1242
    %1418 = vmatprep.subr.bf16.mxu0 0
    %1419 = vmatpush1.bf16.msra.mxu0 %v1243
    %1420 = vmatprep.subr.bf16.mxu0 0
    %1421 = vmatpush1.bf16.msra.mxu0 %v1244
    %1422 = vmatprep.subr.bf16.mxu0 0
    %1423 = vmatpush1.bf16.msra.mxu0 %v1245
    %1424 = vmatprep.subr.bf16.mxu0 0
    %1425 = vmatpush1.bf16.msra.mxu0 %v1246
    %1426 = vmatprep.subr.bf16.mxu0 0
    %1427 = vmatpush1.bf16.msra.mxu0 0
    %1428 = vmatprep.subr.bf16.mxu0 0
    %1429 = vmatpush1.bf16.msra.mxu0 0
    %1430 = vmatprep.subr.bf16.mxu0 0
    %1431 = vmatpush1.bf16.msra.mxu0 0
    %1432 = vmatprep.subr.bf16.mxu0 0
    %1433 = vmatpush1.bf16.msra.mxu0 0
    %1434 = vmatprep.subr.bf16.mxu0 0
    %1435 = vmatpush1.bf16.msra.mxu0 0
    %1436 = vmatprep.subr.bf16.mxu0 0
    %1437 = vmatpush1.bf16.msra.mxu0 0
    %1438 = vmatprep.subr.bf16.mxu0 0
    %1439 = vmatpush1.bf16.msra.mxu0 0
    %1440 = vmatprep.subr.bf16.mxu0 0
    %1441 = vmatpush1.bf16.msra.mxu0 0
    %1442 = vmatprep.mubr.bf16.mxu0 0
    %1443 = vmatmul.mubr.bf16.gmra.mrb[0].mxu0 %v1409
    %v1444 = vpop.f32.mrb[0].mxu0
    %v1445 = vadd.f32 0.0, %v1444
    %v1446 = vpop.f32.mrb[0].mxu0
    %v1447 = vpop.f32.mrb[0].mxu0
    %v1448 = vpop.f32.mrb[0].mxu0
    %1449 = vdwg.mxu0
    %v1450 = vadd.f32 %v1445, %v1383
    %1452 = vrot.lane.b32.xlu0 %v1134, 96
    %v1453 = vpop.permute.xlu0 %1452
    %v1455 = vadd.f32 %v1450, %v1453
    %v1456 = vmax.f32 %v1455, 0.0
    %v1457 = vpack.c.bf16 %v1456, %v1456
    %1459 = vrot.lane.b32.xlu0 %v1457, 32
    %v1460 = vpop.permute.xlu0 %1459
    %v1465 = vunpack.c.l.b16 %v1135
    %v1466 = vunpack.c.l.b16 %v1136
    %v1467 = vunpack.c.l.b16 %v1137
    %v1468 = vunpack.c.l.b16 %v1138
    %v1469 = vpack.c.b16 %v1466, %v1465
    %v1470 = vpack.c.b16 %v1468, %v1467
    %v1474 = vsel %vm359, %v1460, 0
    %1476 = vmatprep.subr.bf16.mxu0 0
    %1477 = vmatpush1.bf16.msra.mxu0 %v1469
    %1478 = vmatprep.subr.bf16.mxu0 0
    %1479 = vmatpush1.bf16.msra.mxu0 %v1470
    %1480 = vmatprep.subr.bf16.mxu0 0
    %1481 = vmatpush1.bf16.msra.mxu0 0
    %1482 = vmatprep.subr.bf16.mxu0 0
    %1483 = vmatpush1.bf16.msra.mxu0 0
    %1484 = vmatprep.subr.bf16.mxu0 0
    %1485 = vmatpush1.bf16.msra.mxu0 0
    %1486 = vmatprep.subr.bf16.mxu0 0
    %1487 = vmatpush1.bf16.msra.mxu0 0
    %1488 = vmatprep.subr.bf16.mxu0 0
    %1489 = vmatpush1.bf16.msra.mxu0 0
    %1490 = vmatprep.subr.bf16.mxu0 0
    %1491 = vmatpush1.bf16.msra.mxu0 0
    %1492 = vmatprep.subr.bf16.mxu0 0
    %1493 = vmatpush1.bf16.msra.mxu0 0
    %1494 = vmatprep.subr.bf16.mxu0 0
    %1495 = vmatpush1.bf16.msra.mxu0 0
    %1496 = vmatprep.subr.bf16.mxu0 0
    %1497 = vmatpush1.bf16.msra.mxu0 0
    %1498 = vmatprep.subr.bf16.mxu0 0
    %1499 = vmatpush1.bf16.msra.mxu0 0
    %1500 = vmatprep.subr.bf16.mxu0 0
    %1501 = vmatpush1.bf16.msra.mxu0 0
    %1502 = vmatprep.subr.bf16.mxu0 0
    %1503 = vmatpush1.bf16.msra.mxu0 0
    %1504 = vmatprep.subr.bf16.mxu0 0
    %1505 = vmatpush1.bf16.msra.mxu0 0
    %1506 = vmatprep.subr.bf16.mxu0 0
    %1507 = vmatpush1.bf16.msra.mxu0 0
    %1508 = vmatprep.mubr.bf16.mxu0 0
    %1509 = vmatmul.mubr.bf16.gmra.mrb[0].mxu0 %v1474
    %v1510 = vpop.f32.mrb[0].mxu0
    %v1511 = vadd.f32 %v1139, %v1510
    %v1512 = vpop.f32.mrb[0].mxu0
    %v1513 = vpop.f32.mrb[0].mxu0
    %v1514 = vpop.f32.mrb[0].mxu0
    %1515 = vdwg.mxu0
    %v1516 = vxor.u32 %v1511, 2147483648
    %v1517 = vmul.f32 %v1516, 1.442695
    %v1518 = vpow.pop %v1517
    %v1519 = vadd.f32 %v1518, 1.0
    %v1520 = vrcp.pop %v1519
    %v1521 = vmul.f32 1.0, %v1520
    %v1522 = vsub.f32 %v1387, %v1389
    %v1523 = vmul.f32 %v1522, 1.442695
    %v1524 = vpow.pop %v1523
    %1525 = vadd.xlane.f32.xlu0 %v1524
    %v1526 = vpop.xlane.xlu0 %1525
    %v1527 = vlog2.pop %v1526
    %v1528 = vmul.f32 %v1527, 0.6931472
    %v1529 = vsub.f32 %v1522, %v1528
    %s1530 = scalar_lea.vmem [#allocation17], 8
    %1531 = vst [vmem:[%s1530] sm:$0xff] %v1529
    %1533 = vset.pattern.permute.xlu0 0
    %1534 = vperm.xlu0 %1533, %v1521
    %v1535 = vpop.permute.xlu0 %1534
    %v1537 = vmul.f32 %v1535, %v1130
    %v1538 = vadd.f32 %v1445, %v1537
    %v1539 = vadd.f32 %v1538, %v1131
    %v1540 = vadd.f32 %v1539, %v1383
    %v1541 = vxor.u32 %v1540, 2147483648
    %v1542 = vmul.f32 %v1541, 1.442695
    %v1543 = vpow.pop %v1542
    %v1544 = vadd.f32 %v1543, 1.0
    %v1545 = vrcp.pop %v1544
    %v1546 = vmul.f32 1.0, %v1545
    %v1547 = vadd.f32 %v1383, %v1313
    %1549 = vrot.lane.b32.xlu0 %v1547, 64
    %v1550 = vpop.permute.xlu0 %1549
    %v1552 = vmul.f32 %v1546, %v1550
    %1554 = vrot.lane.b32.xlu0 %v1552, 64
    %v1555 = vpop.permute.xlu0 %1554
    %v1557 = vadd.f32 %v1539, %v1555
    %v1558 = vtanh.pop %v1557
    %v1559 = vsub.f32 1.0, %v1546
    %1561 = vrot.lane.b32.xlu0 %v1558, 96
    %v1562 = vpop.permute.xlu0 %1561
    %v1564 = vmul.f32 %v1559, %v1562
    %v1565 = vmul.f32 %v1546, %v1338
    %v1566 = vadd.f32 %v1564, %v1565
    %v1567 = vpack.c.bf16 %v1566, %v1566
    %1569 = vrot.lane.b32.xlu0 %v1567, 96
    %v1570 = vpop.permute.xlu0 %1569
    %v1572 = vsel %vm359, %v1570, 0
    %1574 = vmatprep.subr.bf16.mxu0 %v1156
    %1575 = vmatpush1.bf16.msra.mxu0 %v1155
    %1576 = vmatprep.subr.bf16.mxu0 %v1158
    %1577 = vmatpush1.bf16.msra.mxu0 %v1157
    %1578 = vmatprep.subr.bf16.mxu0 0
    %1579 = vmatpush1.bf16.msra.mxu0 0
    %1580 = vmatprep.subr.bf16.mxu0 0
    %1581 = vmatpush1.bf16.msra.mxu0 0
    %1582 = vmatprep.subr.bf16.mxu0 0
    %1583 = vmatpush1.bf16.msra.mxu0 0
    %1584 = vmatprep.subr.bf16.mxu0 0
    %1585 = vmatpush1.bf16.msra.mxu0 0
    %1586 = vmatprep.subr.bf16.mxu0 0
    %1587 = vmatpush1.bf16.msra.mxu0 0
    %1588 = vmatprep.subr.bf16.mxu0 0
    %1589 = vmatpush1.bf16.msra.mxu0 0
    %1590 = vmatprep.subr.bf16.mxu0 0
    %1591 = vmatpush1.bf16.msra.mxu0 0
    %1592 = vmatprep.subr.bf16.mxu0 0
    %1593 = vmatpush1.bf16.msra.mxu0 0
    %1594 = vmatprep.subr.bf16.mxu0 0
    %1595 = vmatpush1.bf16.msra.mxu0 0
    %1596 = vmatprep.subr.bf16.mxu0 0
    %1597 = vmatpush1.bf16.msra.mxu0 0
    %1598 = vmatprep.subr.bf16.mxu0 0
    %1599 = vmatpush1.bf16.msra.mxu0 0
    %1600 = vmatprep.subr.bf16.mxu0 0
    %1601 = vmatpush1.bf16.msra.mxu0 0
    %1602 = vmatprep.subr.bf16.mxu0 0
    %1603 = vmatpush1.bf16.msra.mxu0 0
    %1604 = vmatprep.subr.bf16.mxu0 0
    %1605 = vmatpush1.bf16.msra.mxu0 0
    %1606 = vmatprep.mubr.bf16.mxu0 0
    %1607 = vmatmul.mubr.bf16.gmra.mrb[0].mxu0 %v1572
    %v1608 = vpop.f32.mrb[0].mxu0
    %v1609 = vadd.f32 0.0, %v1608
    %v1610 = vpop.f32.mrb[0].mxu0
    %v1611 = vadd.f32 0.0, %v1610
    %v1612 = vpop.f32.mrb[0].mxu0
    %v1613 = vpop.f32.mrb[0].mxu0
    %1614 = vdwg.mxu0
    %v1615 = vadd.f32 %v1609, %v1133
    %1616 = vmax.xlane.f32.xlu0 %v1615
    %v1617 = vpop.xlane.xlu0 %1616
    %vm1618 = vcmp.ge.f32.partialorder %v1615, %v1617
    %v1619 = vsel %vm1618, %v1141, 128
    %v1620 = vand.u32 %v1619, 65535
    %v1621 = vshra.s32 %v1619, 16
    %v1622 = vcvt.s32.f32 %v1620
    %v1623 = vcvt.s32.f32 %v1621
    %1624 = vmin.xlane.f32.xlu0 %v1623
    %v1625 = vpop.xlane.xlu0 %1624
    %vm1626 = vcmp.eq.f32.partialorder %v1623, %v1625
    %v1627 = vsel %vm1626, %v1622, inf
    %1628 = vmin.xlane.f32.xlu0 %v1627
    %v1629 = vpop.xlane.xlu0 %1628
    %v1630 = vcvt.f32.s32 %v1629
    %v1631 = vcvt.f32.s32 %v1625
    %v1632 = vshll.u32 %v1631, 16
    %v1633 = vadd.s32 %v1632, %v1630
    %vm1634 = vcmp.eq.s32.totalorder %v1141, %v1633
    %v1635 = vsel %vm1634, 1, 0
    %v1636 = vcvt.s32.f32 %v1635
    %v1637 = vpack.c.bf16 %v1636, %v1636
    %1638 = vmatprep.subr.bf16.mxu0 0
    %1639 = vmatpush1.bf16.msra.mxu0 %v1239
    %1640 = vmatprep.subr.bf16.mxu0 0
    %1641 = vmatpush1.bf16.msra.mxu0 %v1240
    %1642 = vmatprep.subr.bf16.mxu0 0
    %1643 = vmatpush1.bf16.msra.mxu0 %v1241
    %1644 = vmatprep.subr.bf16.mxu0 0
    %1645 = vmatpush1.bf16.msra.mxu0 %v1242
    %1646 = vmatprep.subr.bf16.mxu0 0
    %1647 = vmatpush1.bf16.msra.mxu0 %v1243
    %1648 = vmatprep.subr.bf16.mxu0 0
    %1649 = vmatpush1.bf16.msra.mxu0 %v1244
    %1650 = vmatprep.subr.bf16.mxu0 0
    %1651 = vmatpush1.bf16.msra.mxu0 %v1245
    %1652 = vmatprep.subr.bf16.mxu0 0
    %1653 = vmatpush1.bf16.msra.mxu0 %v1246
    %1654 = vmatprep.subr.bf16.mxu0 0
    %1655 = vmatpush1.bf16.msra.mxu0 0
    %1656 = vmatprep.subr.bf16.mxu0 0
    %1657 = vmatpush1.bf16.msra.mxu0 0
    %1658 = vmatprep.subr.bf16.mxu0 0
    %1659 = vmatpush1.bf16.msra.mxu0 0
    %1660 = vmatprep.subr.bf16.mxu0 0
    %1661 = vmatpush1.bf16.msra.mxu0 0
    %1662 = vmatprep.subr.bf16.mxu0 0
    %1663 = vmatpush1.bf16.msra.mxu0 0
    %1664 = vmatprep.subr.bf16.mxu0 0
    %1665 = vmatpush1.bf16.msra.mxu0 0
    %1666 = vmatprep.subr.bf16.mxu0 0
    %1667 = vmatpush1.bf16.msra.mxu0 0
    %1668 = vmatprep.subr.bf16.mxu0 0
    %1669 = vmatpush1.bf16.msra.mxu0 0
    %1670 = vmatprep.mubr.bf16.mxu0 0
    %1671 = vmatmul.mubr.bf16.gmra.mrb[0].mxu0 %v1637
    %v1672 = vpop.f32.mrb[0].mxu0
    %v1673 = vadd.f32 0.0, %v1672
    %v1674 = vpop.f32.mrb[0].mxu0
    %v1675 = vpop.f32.mrb[0].mxu0
    %v1676 = vpop.f32.mrb[0].mxu0
    %1677 = vdwg.mxu0
    %v1678 = vadd.f32 %v1673, %v1611
    %v1679 = vadd.f32 %v1678, %v1453
    %v1680 = vmax.f32 %v1679, 0.0
    %v1681 = vpack.c.bf16 %v1680, %v1680
    %1683 = vrot.lane.b32.xlu0 %v1681, 32
    %v1684 = vpop.permute.xlu0 %1683
    %v1686 = vsel %vm359, %v1684, 0
    %1688 = vmatprep.subr.bf16.mxu0 0
    %1689 = vmatpush1.bf16.msra.mxu0 %v1469
    %1690 = vmatprep.subr.bf16.mxu0 0
    %1691 = vmatpush1.bf16.msra.mxu0 %v1470
    %1692 = vmatprep.subr.bf16.mxu0 0
    %1693 = vmatpush1.bf16.msra.mxu0 0
    %1694 = vmatprep.subr.bf16.mxu0 0
    %1695 = vmatpush1.bf16.msra.mxu0 0
    %1696 = vmatprep.subr.bf16.mxu0 0
    %1697 = vmatpush1.bf16.msra.mxu0 0
    %1698 = vmatprep.subr.bf16.mxu0 0
    %1699 = vmatpush1.bf16.msra.mxu0 0
    %1700 = vmatprep.subr.bf16.mxu0 0
    %1701 = vmatpush1.bf16.msra.mxu0 0
    %1702 = vmatprep.subr.bf16.mxu0 0
    %1703 = vmatpush1.bf16.msra.mxu0 0
    %1704 = vmatprep.subr.bf16.mxu0 0
    %1705 = vmatpush1.bf16.msra.mxu0 0
    %1706 = vmatprep.subr.bf16.mxu0 0
    %1707 = vmatpush1.bf16.msra.mxu0 0
    %1708 = vmatprep.subr.bf16.mxu0 0
    %1709 = vmatpush1.bf16.msra.mxu0 0
    %1710 = vmatprep.subr.bf16.mxu0 0
    %1711 = vmatpush1.bf16.msra.mxu0 0
    %1712 = vmatprep.subr.bf16.mxu0 0
    %1713 = vmatpush1.bf16.msra.mxu0 0
    %1714 = vmatprep.subr.bf16.mxu0 0
    %1715 = vmatpush1.bf16.msra.mxu0 0
    %1716 = vmatprep.subr.bf16.mxu0 0
    %1717 = vmatpush1.bf16.msra.mxu0 0
    %1718 = vmatprep.subr.bf16.mxu0 0
    %1719 = vmatpush1.bf16.msra.mxu0 0
    %1720 = vmatprep.mubr.bf16.mxu0 0
    %1721 = vmatmul.mubr.bf16.gmra.mrb[0].mxu0 %v1686
    %v1722 = vpop.f32.mrb[0].mxu0
    %v1723 = vadd.f32 %v1139, %v1722
    %v1724 = vpop.f32.mrb[0].mxu0
    %v1725 = vpop.f32.mrb[0].mxu0
    %v1726 = vpop.f32.mrb[0].mxu0
    %1727 = vdwg.mxu0
    %v1728 = vxor.u32 %v1723, 2147483648
    %v1729 = vmul.f32 %v1728, 1.442695
    %v1730 = vpow.pop %v1729
    %v1731 = vadd.f32 %v1730, 1.0
    %v1732 = vrcp.pop %v1731
    %v1733 = vmul.f32 1.0, %v1732
    %v1734 = vsub.f32 %v1615, %v1617
    %v1735 = vmul.f32 %v1734, 1.442695
    %v1736 = vpow.pop %v1735
    %1737 = vadd.xlane.f32.xlu0 %v1736
    %v1738 = vpop.xlane.xlu0 %1737
    %v1739 = vlog2.pop %v1738
    %v1740 = vmul.f32 %v1739, 0.6931472
    %v1741 = vsub.f32 %v1734, %v1740
    %s1742 = scalar_lea.vmem [#allocation17], 16
    %1743 = vst [vmem:[%s1742] sm:$0xff] %v1741
    %1745 = vset.pattern.permute.xlu0 0
    %1746 = vperm.xlu0 %1745, %v1733
    %v1747 = vpop.permute.xlu0 %1746
    %v1749 = vmul.f32 %v1747, %v1130
    %v1750 = vadd.f32 %v1673, %v1749
    %v1751 = vadd.f32 %v1750, %v1131
    %v1752 = vadd.f32 %v1751, %v1611
    %v1753 = vxor.u32 %v1752, 2147483648
    %v1754 = vmul.f32 %v1753, 1.442695
    %v1755 = vpow.pop %v1754
    %v1756 = vadd.f32 %v1755, 1.0
    %v1757 = vrcp.pop %v1756
    %v1758 = vmul.f32 1.0, %v1757
    %v1759 = vadd.f32 %v1611, %v1313
    %1761 = vrot.lane.b32.xlu0 %v1759, 64
    %v1762 = vpop.permute.xlu0 %1761
    %v1764 = vmul.f32 %v1758, %v1762
    %1766 = vrot.lane.b32.xlu0 %v1764, 64
    %v1767 = vpop.permute.xlu0 %1766
    %v1769 = vadd.f32 %v1751, %v1767
    %v1770 = vtanh.pop %v1769
    %v1771 = vsub.f32 1.0, %v1758
    %1773 = vrot.lane.b32.xlu0 %v1770, 96
    %v1774 = vpop.permute.xlu0 %1773
    %v1776 = vmul.f32 %v1771, %v1774
    %v1777 = vmul.f32 %v1758, %v1566
    %v1778 = vadd.f32 %v1776, %v1777
    %v1779 = vpack.c.bf16 %v1778, %v1778
    %1781 = vrot.lane.b32.xlu0 %v1779, 96
    %v1782 = vpop.permute.xlu0 %1781
    %v1784 = vsel %vm359, %v1782, 0
    %1786 = vmatprep.subr.bf16.mxu0 %v1156
    %1787 = vmatpush1.bf16.msra.mxu0 %v1155
    %1788 = vmatprep.subr.bf16.mxu0 %v1158
    %1789 = vmatpush1.bf16.msra.mxu0 %v1157
    %1790 = vmatprep.subr.bf16.mxu0 0
    %1791 = vmatpush1.bf16.msra.mxu0 0
    %1792 = vmatprep.subr.bf16.mxu0 0
    %1793 = vmatpush1.bf16.msra.mxu0 0
    %1794 = vmatprep.subr.bf16.mxu0 0
    %1795 = vmatpush1.bf16.msra.mxu0 0
    %1796 = vmatprep.subr.bf16.mxu0 0
    %1797 = vmatpush1.bf16.msra.mxu0 0
    %1798 = vmatprep.subr.bf16.mxu0 0
    %1799 = vmatpush1.bf16.msra.mxu0 0
    %1800 = vmatprep.subr.bf16.mxu0 0
    %1801 = vmatpush1.bf16.msra.mxu0 0
    %1802 = vmatprep.subr.bf16.mxu0 0
    %1803 = vmatpush1.bf16.msra.mxu0 0
    %1804 = vmatprep.subr.bf16.mxu0 0
    %1805 = vmatpush1.bf16.msra.mxu0 0
    %1806 = vmatprep.subr.bf16.mxu0 0
    %1807 = vmatpush1.bf16.msra.mxu0 0
    %1808 = vmatprep.subr.bf16.mxu0 0
    %1809 = vmatpush1.bf16.msra.mxu0 0
    %1810 = vmatprep.subr.bf16.mxu0 0
    %1811 = vmatpush1.bf16.msra.mxu0 0
    %1812 = vmatprep.subr.bf16.mxu0 0
    %1813 = vmatpush1.bf16.msra.mxu0 0
    %1814 = vmatprep.subr.bf16.mxu0 0
    %1815 = vmatpush1.bf16.msra.mxu0 0
    %1816 = vmatprep.subr.bf16.mxu0 0
    %1817 = vmatpush1.bf16.msra.mxu0 0
    %1818 = vmatprep.mubr.bf16.mxu0 0
    %1819 = vmatmul.mubr.bf16.gmra.mrb[0].mxu0 %v1784
    %v1820 = vpop.f32.mrb[0].mxu0
    %v1821 = vadd.f32 0.0, %v1820
    %v1822 = vpop.f32.mrb[0].mxu0
    %v1823 = vadd.f32 0.0, %v1822
    %v1824 = vpop.f32.mrb[0].mxu0
    %v1825 = vpop.f32.mrb[0].mxu0
    %1826 = vdwg.mxu0
    %v1827 = vadd.f32 %v1821, %v1133
    %1828 = vmax.xlane.f32.xlu0 %v1827
    %v1829 = vpop.xlane.xlu0 %1828
    %vm1830 = vcmp.ge.f32.partialorder %v1827, %v1829
    %v1831 = vsel %vm1830, %v1141, 128
    %v1832 = vand.u32 %v1831, 65535
    %v1833 = vshra.s32 %v1831, 16
    %v1834 = vcvt.s32.f32 %v1832
    %v1835 = vcvt.s32.f32 %v1833
    %1836 = vmin.xlane.f32.xlu0 %v1835
    %v1837 = vpop.xlane.xlu0 %1836
    %vm1838 = vcmp.eq.f32.partialorder %v1835, %v1837
    %v1839 = vsel %vm1838, %v1834, inf
    %1840 = vmin.xlane.f32.xlu0 %v1839
    %v1841 = vpop.xlane.xlu0 %1840
    %v1842 = vcvt.f32.s32 %v1841
    %v1843 = vcvt.f32.s32 %v1837
    %v1844 = vshll.u32 %v1843, 16
    %v1845 = vadd.s32 %v1844, %v1842
    %vm1846 = vcmp.eq.s32.totalorder %v1141, %v1845
    %v1847 = vsel %vm1846, 1, 0
    %v1848 = vcvt.s32.f32 %v1847
    %v1849 = vpack.c.bf16 %v1848, %v1848
    %1850 = vmatprep.subr.bf16.mxu0 0
    %1851 = vmatpush1.bf16.msra.mxu0 %v1239
    %1852 = vmatprep.subr.bf16.mxu0 0
    %1853 = vmatpush1.bf16.msra.mxu0 %v1240
    %1854 = vmatprep.subr.bf16.mxu0 0
    %1855 = vmatpush1.bf16.msra.mxu0 %v1241
    %1856 = vmatprep.subr.bf16.mxu0 0
    %1857 = vmatpush1.bf16.msra.mxu0 %v1242
    %1858 = vmatprep.subr.bf16.mxu0 0
    %1859 = vmatpush1.bf16.msra.mxu0 %v1243
    %1860 = vmatprep.subr.bf16.mxu0 0
    %1861 = vmatpush1.bf16.msra.mxu0 %v1244
    %1862 = vmatprep.subr.bf16.mxu0 0
    %1863 = vmatpush1.bf16.msra.mxu0 %v1245
    %1864 = vmatprep.subr.bf16.mxu0 0
    %1865 = vmatpush1.bf16.msra.mxu0 %v1246
    %1866 = vmatprep.subr.bf16.mxu0 0
    %1867 = vmatpush1.bf16.msra.mxu0 0
    %1868 = vmatprep.subr.bf16.mxu0 0
    %1869 = vmatpush1.bf16.msra.mxu0 0
    %1870 = vmatprep.subr.bf16.mxu0 0
    %1871 = vmatpush1.bf16.msra.mxu0 0
    %1872 = vmatprep.subr.bf16.mxu0 0
    %1873 = vmatpush1.bf16.msra.mxu0 0
    %1874 = vmatprep.subr.bf16.mxu0 0
    %1875 = vmatpush1.bf16.msra.mxu0 0
    %1876 = vmatprep.subr.bf16.mxu0 0
    %1877 = vmatpush1.bf16.msra.mxu0 0
    %1878 = vmatprep.subr.bf16.mxu0 0
    %1879 = vmatpush1.bf16.msra.mxu0 0
    %1880 = vmatprep.subr.bf16.mxu0 0
    %1881 = vmatpush1.bf16.msra.mxu0 0
    %1882 = vmatprep.mubr.bf16.mxu0 0
    %1883 = vmatmul.mubr.bf16.gmra.mrb[0].mxu0 %v1849
    %v1884 = vpop.f32.mrb[0].mxu0
    %v1885 = vadd.f32 0.0, %v1884
    %v1886 = vpop.f32.mrb[0].mxu0
    %v1887 = vpop.f32.mrb[0].mxu0
    %v1888 = vpop.f32.mrb[0].mxu0
    %1889 = vdwg.mxu0
    %v1890 = vadd.f32 %v1885, %v1823
    %v1891 = vadd.f32 %v1890, %v1453
    %v1892 = vmax.f32 %v1891, 0.0
    %v1893 = vpack.c.bf16 %v1892, %v1892
    %1895 = vrot.lane.b32.xlu0 %v1893, 32
    %v1896 = vpop.permute.xlu0 %1895
    %v1898 = vsel %vm359, %v1896, 0
    %1900 = vmatprep.subr.bf16.mxu0 0
    %1901 = vmatpush1.bf16.msra.mxu0 %v1469
    %1902 = vmatprep.subr.bf16.mxu0 0
    %1903 = vmatpush1.bf16.msra.mxu0 %v1470
    %1904 = vmatprep.subr.bf16.mxu0 0
    %1905 = vmatpush1.bf16.msra.mxu0 0
    %1906 = vmatprep.subr.bf16.mxu0 0
    %1907 = vmatpush1.bf16.msra.mxu0 0
    %1908 = vmatprep.subr.bf16.mxu0 0
    %1909 = vmatpush1.bf16.msra.mxu0 0
    %1910 = vmatprep.subr.bf16.mxu0 0
    %1911 = vmatpush1.bf16.msra.mxu0 0
    %1912 = vmatprep.subr.bf16.mxu0 0
    %1913 = vmatpush1.bf16.msra.mxu0 0
    %1914 = vmatprep.subr.bf16.mxu0 0
    %1915 = vmatpush1.bf16.msra.mxu0 0
    %1916 = vmatprep.subr.bf16.mxu0 0
    %1917 = vmatpush1.bf16.msra.mxu0 0
    %1918 = vmatprep.subr.bf16.mxu0 0
    %1919 = vmatpush1.bf16.msra.mxu0 0
    %1920 = vmatprep.subr.bf16.mxu0 0
    %1921 = vmatpush1.bf16.msra.mxu0 0
    %1922 = vmatprep.subr.bf16.mxu0 0
    %1923 = vmatpush1.bf16.msra.mxu0 0
    %1924 = vmatprep.subr.bf16.mxu0 0
    %1925 = vmatpush1.bf16.msra.mxu0 0
    %1926 = vmatprep.subr.bf16.mxu0 0
    %1927 = vmatpush1.bf16.msra.mxu0 0
    %1928 = vmatprep.subr.bf16.mxu0 0
    %1929 = vmatpush1.bf16.msra.mxu0 0
    %1930 = vmatprep.subr.bf16.mxu0 0
    %1931 = vmatpush1.bf16.msra.mxu0 0
    %1932 = vmatprep.mubr.bf16.mxu0 0
    %1933 = vmatmul.mubr.bf16.gmra.mrb[0].mxu0 %v1898
    %v1934 = vpop.f32.mrb[0].mxu0
    %v1935 = vadd.f32 %v1139, %v1934
    %v1936 = vpop.f32.mrb[0].mxu0
    %v1937 = vpop.f32.mrb[0].mxu0
    %v1938 = vpop.f32.mrb[0].mxu0
    %1939 = vdwg.mxu0
    %v1940 = vxor.u32 %v1935, 2147483648
    %v1941 = vmul.f32 %v1940, 1.442695
    %v1942 = vpow.pop %v1941
    %v1943 = vadd.f32 %v1942, 1.0
    %v1944 = vrcp.pop %v1943
    %v1945 = vmul.f32 1.0, %v1944
    %v1946 = vsub.f32 %v1827, %v1829
    %v1947 = vmul.f32 %v1946, 1.442695
    %v1948 = vpow.pop %v1947
    %1949 = vadd.xlane.f32.xlu0 %v1948
    %v1950 = vpop.xlane.xlu0 %1949
    %v1951 = vlog2.pop %v1950
    %v1952 = vmul.f32 %v1951, 0.6931472
    %v1953 = vsub.f32 %v1946, %v1952
    %s1954 = scalar_lea.vmem [#allocation17], 24
    %1955 = vst [vmem:[%s1954] sm:$0xff] %v1953
    %1957 = vset.pattern.permute.xlu0 0
    %1958 = vperm.xlu0 %1957, %v1945
    %v1959 = vpop.permute.xlu0 %1958
    %v1961 = vmul.f32 %v1959, %v1130
    %v1962 = vadd.f32 %v1885, %v1961
    %v1963 = vadd.f32 %v1962, %v1131
    %v1964 = vadd.f32 %v1963, %v1823
    %v1965 = vxor.u32 %v1964, 2147483648
    %v1966 = vmul.f32 %v1965, 1.442695
    %v1967 = vpow.pop %v1966
    %v1968 = vadd.f32 %v1967, 1.0
    %v1969 = vrcp.pop %v1968
    %v1970 = vmul.f32 1.0, %v1969
    %v1971 = vadd.f32 %v1823, %v1313
    %1973 = vrot.lane.b32.xlu0 %v1971, 64
    %v1974 = vpop.permute.xlu0 %1973
    %v1976 = vmul.f32 %v1970, %v1974
    %1978 = vrot.lane.b32.xlu0 %v1976, 64
    %v1979 = vpop.permute.xlu0 %1978
    %v1981 = vadd.f32 %v1963, %v1979
    %v1982 = vtanh.pop %v1981
    %v1983 = vsub.f32 1.0, %v1970
    %1985 = vrot.lane.b32.xlu0 %v1982, 96
    %v1986 = vpop.permute.xlu0 %1985
    %v1988 = vmul.f32 %v1983, %v1986
    %v1989 = vmul.f32 %v1970, %v1778
    %v1990 = vadd.f32 %v1988, %v1989
    %v1991 = vpack.c.bf16 %v1990, %v1990
    %1993 = vrot.lane.b32.xlu0 %v1991, 96
    %v1994 = vpop.permute.xlu0 %1993
    %v1996 = vsel %vm359, %v1994, 0
    %1998 = vmatprep.subr.bf16.mxu0 %v1156
    %1999 = vmatpush1.bf16.msra.mxu0 %v1155
    %2000 = vmatprep.subr.bf16.mxu0 %v1158
    %2001 = vmatpush1.bf16.msra.mxu0 %v1157
    %2002 = vmatprep.subr.bf16.mxu0 0
    %2003 = vmatpush1.bf16.msra.mxu0 0
    %2004 = vmatprep.subr.bf16.mxu0 0
    %2005 = vmatpush1.bf16.msra.mxu0 0
    %2006 = vmatprep.subr.bf16.mxu0 0
    %2007 = vmatpush1.bf16.msra.mxu0 0
    %2008 = vmatprep.subr.bf16.mxu0 0
    %2009 = vmatpush1.bf16.msra.mxu0 0
    %2010 = vmatprep.subr.bf16.mxu0 0
    %2011 = vmatpush1.bf16.msra.mxu0 0
    %2012 = vmatprep.subr.bf16.mxu0 0
    %2013 = vmatpush1.bf16.msra.mxu0 0
    %2014 = vmatprep.subr.bf16.mxu0 0
    %2015 = vmatpush1.bf16.msra.mxu0 0
    %2016 = vmatprep.subr.bf16.mxu0 0
    %2017 = vmatpush1.bf16.msra.mxu0 0
    %2018 = vmatprep.subr.bf16.mxu0 0
    %2019 = vmatpush1.bf16.msra.mxu0 0
    %2020 = vmatprep.subr.bf16.mxu0 0
    %2021 = vmatpush1.bf16.msra.mxu0 0
    %2022 = vmatprep.subr.bf16.mxu0 0
    %2023 = vmatpush1.bf16.msra.mxu0 0
    %2024 = vmatprep.subr.bf16.mxu0 0
    %2025 = vmatpush1.bf16.msra.mxu0 0
    %2026 = vmatprep.subr.bf16.mxu0 0
    %2027 = vmatpush1.bf16.msra.mxu0 0
    %2028 = vmatprep.subr.bf16.mxu0 0
    %2029 = vmatpush1.bf16.msra.mxu0 0
    %2030 = vmatprep.mubr.bf16.mxu0 0
    %2031 = vmatmul.mubr.bf16.gmra.mrb[0].mxu0 %v1996
    %v2032 = vpop.f32.mrb[0].mxu0
    %v2033 = vadd.f32 0.0, %v2032
    %v2034 = vpop.f32.mrb[0].mxu0
    %v2035 = vadd.f32 0.0, %v2034
    %v2036 = vpop.f32.mrb[0].mxu0
    %v2037 = vpop.f32.mrb[0].mxu0
    %2038 = vdwg.mxu0
    %v2039 = vadd.f32 %v2033, %v1133
    %2040 = vmax.xlane.f32.xlu0 %v2039
    %v2041 = vpop.xlane.xlu0 %2040
    %vm2042 = vcmp.ge.f32.partialorder %v2039, %v2041
    %v2043 = vsel %vm2042, %v1141, 128
    %v2044 = vand.u32 %v2043, 65535
    %v2045 = vshra.s32 %v2043, 16
    %v2046 = vcvt.s32.f32 %v2044
    %v2047 = vcvt.s32.f32 %v2045
    %2048 = vmin.xlane.f32.xlu0 %v2047
    %v2049 = vpop.xlane.xlu0 %2048
    %vm2050 = vcmp.eq.f32.partialorder %v2047, %v2049
    %v2051 = vsel %vm2050, %v2046, inf
    %2052 = vmin.xlane.f32.xlu0 %v2051
    %v2053 = vpop.xlane.xlu0 %2052
    %v2054 = vcvt.f32.s32 %v2053
    %v2055 = vcvt.f32.s32 %v2049
    %v2056 = vshll.u32 %v2055, 16
    %v2057 = vadd.s32 %v2056, %v2054
    %vm2058 = vcmp.eq.s32.totalorder %v1141, %v2057
    %v2059 = vsel %vm2058, 1, 0
    %v2060 = vcvt.s32.f32 %v2059
    %v2061 = vpack.c.bf16 %v2060, %v2060
    %2062 = vmatprep.subr.bf16.mxu0 0
    %2063 = vmatpush1.bf16.msra.mxu0 %v1239
    %2064 = vmatprep.subr.bf16.mxu0 0
    %2065 = vmatpush1.bf16.msra.mxu0 %v1240
    %2066 = vmatprep.subr.bf16.mxu0 0
    %2067 = vmatpush1.bf16.msra.mxu0 %v1241
    %2068 = vmatprep.subr.bf16.mxu0 0
    %2069 = vmatpush1.bf16.msra.mxu0 %v1242
    %2070 = vmatprep.subr.bf16.mxu0 0
    %2071 = vmatpush1.bf16.msra.mxu0 %v1243
    %2072 = vmatprep.subr.bf16.mxu0 0
    %2073 = vmatpush1.bf16.msra.mxu0 %v1244
    %2074 = vmatprep.subr.bf16.mxu0 0
    %2075 = vmatpush1.bf16.msra.mxu0 %v1245
    %2076 = vmatprep.subr.bf16.mxu0 0
    %2077 = vmatpush1.bf16.msra.mxu0 %v1246
    %2078 = vmatprep.subr.bf16.mxu0 0
    %2079 = vmatpush1.bf16.msra.mxu0 0
    %2080 = vmatprep.subr.bf16.mxu0 0
    %2081 = vmatpush1.bf16.msra.mxu0 0
    %2082 = vmatprep.subr.bf16.mxu0 0
    %2083 = vmatpush1.bf16.msra.mxu0 0
    %2084 = vmatprep.subr.bf16.mxu0 0
    %2085 = vmatpush1.bf16.msra.mxu0 0
    %2086 = vmatprep.subr.bf16.mxu0 0
    %2087 = vmatpush1.bf16.msra.mxu0 0
    %2088 = vmatprep.subr.bf16.mxu0 0
    %2089 = vmatpush1.bf16.msra.mxu0 0
    %2090 = vmatprep.subr.bf16.mxu0 0
    %2091 = vmatpush1.bf16.msra.mxu0 0
    %2092 = vmatprep.subr.bf16.mxu0 0
    %2093 = vmatpush1.bf16.msra.mxu0 0
    %2094 = vmatprep.mubr.bf16.mxu0 0
    %2095 = vmatmul.mubr.bf16.gmra.mrb[0].mxu0 %v2061
    %v2096 = vpop.f32.mrb[0].mxu0
    %v2097 = vadd.f32 0.0, %v2096
    %v2098 = vpop.f32.mrb[0].mxu0
    %v2099 = vpop.f32.mrb[0].mxu0
    %v2100 = vpop.f32.mrb[0].mxu0
    %2101 = vdwg.mxu0
    %v2102 = vadd.f32 %v2097, %v2035
    %v2103 = vadd.f32 %v2102, %v1453
    %v2104 = vmax.f32 %v2103, 0.0
    %v2105 = vpack.c.bf16 %v2104, %v2104
    %2107 = vrot.lane.b32.xlu0 %v2105, 32
    %v2108 = vpop.permute.xlu0 %2107
    %v2110 = vsel %vm359, %v2108, 0
    %2112 = vmatprep.subr.bf16.mxu0 0
    %2113 = vmatpush1.bf16.msra.mxu0 %v1469
    %2114 = vmatprep.subr.bf16.mxu0 0
    %2115 = vmatpush1.bf16.msra.mxu0 %v1470
    %2116 = vmatprep.subr.bf16.mxu0 0
    %2117 = vmatpush1.bf16.msra.mxu0 0
    %2118 = vmatprep.subr.bf16.mxu0 0
    %2119 = vmatpush1.bf16.msra.mxu0 0
    %2120 = vmatprep.subr.bf16.mxu0 0
    %2121 = vmatpush1.bf16.msra.mxu0 0
    %2122 = vmatprep.subr.bf16.mxu0 0
    %2123 = vmatpush1.bf16.msra.mxu0 0
    %2124 = vmatprep.subr.bf16.mxu0 0
    %2125 = vmatpush1.bf16.msra.mxu0 0
    %2126 = vmatprep.subr.bf16.mxu0 0
    %2127 = vmatpush1.bf16.msra.mxu0 0
    %2128 = vmatprep.subr.bf16.mxu0 0
    %2129 = vmatpush1.bf16.msra.mxu0 0
    %2130 = vmatprep.subr.bf16.mxu0 0
    %2131 = vmatpush1.bf16.msra.mxu0 0
    %2132 = vmatprep.subr.bf16.mxu0 0
    %2133 = vmatpush1.bf16.msra.mxu0 0
    %2134 = vmatprep.subr.bf16.mxu0 0
    %2135 = vmatpush1.bf16.msra.mxu0 0
    %2136 = vmatprep.subr.bf16.mxu0 0
    %2137 = vmatpush1.bf16.msra.mxu0 0
    %2138 = vmatprep.subr.bf16.mxu0 0
    %2139 = vmatpush1.bf16.msra.mxu0 0
    %2140 = vmatprep.subr.bf16.mxu0 0
    %2141 = vmatpush1.bf16.msra.mxu0 0
    %2142 = vmatprep.subr.bf16.mxu0 0
    %2143 = vmatpush1.bf16.msra.mxu0 0
    %2144 = vmatprep.mubr.bf16.mxu0 0
    %2145 = vmatmul.mubr.bf16.gmra.mrb[0].mxu0 %v2110
    %v2146 = vpop.f32.mrb[0].mxu0
    %v2147 = vadd.f32 %v1139, %v2146
    %v2148 = vpop.f32.mrb[0].mxu0
    %v2149 = vpop.f32.mrb[0].mxu0
    %v2150 = vpop.f32.mrb[0].mxu0
    %2151 = vdwg.mxu0
    %v2152 = vxor.u32 %v2147, 2147483648
    %v2153 = vmul.f32 %v2152, 1.442695
    %v2154 = vpow.pop %v2153
    %v2155 = vadd.f32 %v2154, 1.0
    %v2156 = vrcp.pop %v2155
    %v2157 = vmul.f32 1.0, %v2156
    %v2158 = vsub.f32 %v2039, %v2041
    %v2159 = vmul.f32 %v2158, 1.442695
    %v2160 = vpow.pop %v2159
    %2161 = vadd.xlane.f32.xlu0 %v2160
    %v2162 = vpop.xlane.xlu0 %2161
    %v2163 = vlog2.pop %v2162
    %v2164 = vmul.f32 %v2163, 0.6931472
    %v2165 = vsub.f32 %v2158, %v2164
    %s2166 = scalar_lea.vmem [#allocation17], 32
    %2167 = vst [vmem:[%s2166] sm:$0xff] %v2165
    %2169 = vset.pattern.permute.xlu0 0
    %2170 = vperm.xlu0 %2169, %v2157
    %v2171 = vpop.permute.xlu0 %2170
    %v2173 = vmul.f32 %v2171, %v1130
    %v2174 = vadd.f32 %v2097, %v2173
    %v2175 = vadd.f32 %v2174, %v1131
    %v2176 = vadd.f32 %v2175, %v2035
    %v2177 = vxor.u32 %v2176, 2147483648
    %v2178 = vmul.f32 %v2177, 1.442695
    %v2179 = vpow.pop %v2178
    %v2180 = vadd.f32 %v2179, 1.0
    %v2181 = vrcp.pop %v2180
    %v2182 = vmul.f32 1.0, %v2181
    %v2183 = vadd.f32 %v2035, %v1313
    %2185 = vrot.lane.b32.xlu0 %v2183, 64
    %v2186 = vpop.permute.xlu0 %2185
    %v2188 = vmul.f32 %v2182, %v2186
    %2190 = vrot.lane.b32.xlu0 %v2188, 64
    %v2191 = vpop.permute.xlu0 %2190
    %v2193 = vadd.f32 %v2175, %v2191
    %v2194 = vtanh.pop %v2193
    %v2195 = vsub.f32 1.0, %v2182
    %2197 = vrot.lane.b32.xlu0 %v2194, 96
    %v2198 = vpop.permute.xlu0 %2197
    %v2200 = vmul.f32 %v2195, %v2198
    %v2201 = vmul.f32 %v2182, %v1990
    %v2202 = vadd.f32 %v2200, %v2201
    %v2203 = vpack.c.bf16 %v2202, %v2202
    %2205 = vrot.lane.b32.xlu0 %v2203, 96
    %v2206 = vpop.permute.xlu0 %2205
    %v2208 = vsel %vm359, %v2206, 0
    %2210 = vmatprep.subr.bf16.mxu0 %v1156
    %2211 = vmatpush1.bf16.msra.mxu0 %v1155
    %2212 = vmatprep.subr.bf16.mxu0 %v1158
    %2213 = vmatpush1.bf16.msra.mxu0 %v1157
    %2214 = vmatprep.subr.bf16.mxu0 0
    %2215 = vmatpush1.bf16.msra.mxu0 0
    %2216 = vmatprep.subr.bf16.mxu0 0
    %2217 = vmatpush1.bf16.msra.mxu0 0
    %2218 = vmatprep.subr.bf16.mxu0 0
    %2219 = vmatpush1.bf16.msra.mxu0 0
    %2220 = vmatprep.subr.bf16.mxu0 0
    %2221 = vmatpush1.bf16.msra.mxu0 0
    %2222 = vmatprep.subr.bf16.mxu0 0
    %2223 = vmatpush1.bf16.msra.mxu0 0
    %2224 = vmatprep.subr.bf16.mxu0 0
    %2225 = vmatpush1.bf16.msra.mxu0 0
    %2226 = vmatprep.subr.bf16.mxu0 0
    %2227 = vmatpush1.bf16.msra.mxu0 0
    %2228 = vmatprep.subr.bf16.mxu0 0
    %2229 = vmatpush1.bf16.msra.mxu0 0
    %2230 = vmatprep.subr.bf16.mxu0 0
    %2231 = vmatpush1.bf16.msra.mxu0 0
    %2232 = vmatprep.subr.bf16.mxu0 0
    %2233 = vmatpush1.bf16.msra.mxu0 0
    %2234 = vmatprep.subr.bf16.mxu0 0
    %2235 = vmatpush1.bf16.msra.mxu0 0
    %2236 = vmatprep.subr.bf16.mxu0 0
    %2237 = vmatpush1.bf16.msra.mxu0 0
    %2238 = vmatprep.subr.bf16.mxu0 0
    %2239 = vmatpush1.bf16.msra.mxu0 0
    %2240 = vmatprep.subr.bf16.mxu0 0
    %2241 = vmatpush1.bf16.msra.mxu0 0
    %2242 = vmatprep.mubr.bf16.mxu0 0
    %2243 = vmatmul.mubr.bf16.gmra.mrb[0].mxu0 %v2208
    %v2244 = vpop.f32.mrb[0].mxu0
    %v2245 = vadd.f32 0.0, %v2244
    %v2246 = vpop.f32.mrb[0].mxu0
    %v2247 = vadd.f32 0.0, %v2246
    %v2248 = vpop.f32.mrb[0].mxu0
    %v2249 = vpop.f32.mrb[0].mxu0
    %2250 = vdwg.mxu0
    %v2251 = vadd.f32 %v2245, %v1133
    %2252 = vmax.xlane.f32.xlu0 %v2251
    %v2253 = vpop.xlane.xlu0 %2252
    %vm2254 = vcmp.ge.f32.partialorder %v2251, %v2253
    %v2255 = vsel %vm2254, %v1141, 128
    %v2256 = vand.u32 %v2255, 65535
    %v2257 = vshra.s32 %v2255, 16
    %v2258 = vcvt.s32.f32 %v2256
    %v2259 = vcvt.s32.f32 %v2257
    %2260 = vmin.xlane.f32.xlu0 %v2259
    %v2261 = vpop.xlane.xlu0 %2260
    %vm2262 = vcmp.eq.f32.partialorder %v2259, %v2261
    %v2263 = vsel %vm2262, %v2258, inf
    %2264 = vmin.xlane.f32.xlu0 %v2263
    %v2265 = vpop.xlane.xlu0 %2264
    %v2266 = vcvt.f32.s32 %v2265
    %v2267 = vcvt.f32.s32 %v2261
    %v2268 = vshll.u32 %v2267, 16
    %v2269 = vadd.s32 %v2268, %v2266
    %vm2270 = vcmp.eq.s32.totalorder %v1141, %v2269
    %v2271 = vsel %vm2270, 1, 0
    %v2272 = vcvt.s32.f32 %v2271
    %v2273 = vpack.c.bf16 %v2272, %v2272
    %2274 = vmatprep.subr.bf16.mxu0 0
    %2275 = vmatpush1.bf16.msra.mxu0 %v1239
    %2276 = vmatprep.subr.bf16.mxu0 0
    %2277 = vmatpush1.bf16.msra.mxu0 %v1240
    %2278 = vmatprep.subr.bf16.mxu0 0
    %2279 = vmatpush1.bf16.msra.mxu0 %v1241
    %2280 = vmatprep.subr.bf16.mxu0 0
    %2281 = vmatpush1.bf16.msra.mxu0 %v1242
    %2282 = vmatprep.subr.bf16.mxu0 0
    %2283 = vmatpush1.bf16.msra.mxu0 %v1243
    %2284 = vmatprep.subr.bf16.mxu0 0
    %2285 = vmatpush1.bf16.msra.mxu0 %v1244
    %2286 = vmatprep.subr.bf16.mxu0 0
    %2287 = vmatpush1.bf16.msra.mxu0 %v1245
    %2288 = vmatprep.subr.bf16.mxu0 0
    %2289 = vmatpush1.bf16.msra.mxu0 %v1246
    %2290 = vmatprep.subr.bf16.mxu0 0
    %2291 = vmatpush1.bf16.msra.mxu0 0
    %2292 = vmatprep.subr.bf16.mxu0 0
    %2293 = vmatpush1.bf16.msra.mxu0 0
    %2294 = vmatprep.subr.bf16.mxu0 0
    %2295 = vmatpush1.bf16.msra.mxu0 0
    %2296 = vmatprep.subr.bf16.mxu0 0
    %2297 = vmatpush1.bf16.msra.mxu0 0
    %2298 = vmatprep.subr.bf16.mxu0 0
    %2299 = vmatpush1.bf16.msra.mxu0 0
    %2300 = vmatprep.subr.bf16.mxu0 0
    %2301 = vmatpush1.bf16.msra.mxu0 0
    %2302 = vmatprep.subr.bf16.mxu0 0
    %2303 = vmatpush1.bf16.msra.mxu0 0
    %2304 = vmatprep.subr.bf16.mxu0 0
    %2305 = vmatpush1.bf16.msra.mxu0 0
    %2306 = vmatprep.mubr.bf16.mxu0 0
    %2307 = vmatmul.mubr.bf16.gmra.mrb[0].mxu0 %v2273
    %v2308 = vpop.f32.mrb[0].mxu0
    %v2309 = vadd.f32 0.0, %v2308
    %v2310 = vpop.f32.mrb[0].mxu0
    %v2311 = vpop.f32.mrb[0].mxu0
    %v2312 = vpop.f32.mrb[0].mxu0
    %2313 = vdwg.mxu0
    %v2314 = vadd.f32 %v2309, %v2247
    %v2315 = vadd.f32 %v2314, %v1453
    %v2316 = vmax.f32 %v2315, 0.0
    %v2317 = vpack.c.bf16 %v2316, %v2316
    %2319 = vrot.lane.b32.xlu0 %v2317, 32
    %v2320 = vpop.permute.xlu0 %2319
    %v2322 = vsel %vm359, %v2320, 0
    %2324 = vmatprep.subr.bf16.mxu0 0
    %2325 = vmatpush1.bf16.msra.mxu0 %v1469
    %2326 = vmatprep.subr.bf16.mxu0 0
    %2327 = vmatpush1.bf16.msra.mxu0 %v1470
    %2328 = vmatprep.subr.bf16.mxu0 0
    %2329 = vmatpush1.bf16.msra.mxu0 0
    %2330 = vmatprep.subr.bf16.mxu0 0
    %2331 = vmatpush1.bf16.msra.mxu0 0
    %2332 = vmatprep.subr.bf16.mxu0 0
    %2333 = vmatpush1.bf16.msra.mxu0 0
    %2334 = vmatprep.subr.bf16.mxu0 0
    %2335 = vmatpush1.bf16.msra.mxu0 0
    %2336 = vmatprep.subr.bf16.mxu0 0
    %2337 = vmatpush1.bf16.msra.mxu0 0
    %2338 = vmatprep.subr.bf16.mxu0 0
    %2339 = vmatpush1.bf16.msra.mxu0 0
    %2340 = vmatprep.subr.bf16.mxu0 0
    %2341 = vmatpush1.bf16.msra.mxu0 0
    %2342 = vmatprep.subr.bf16.mxu0 0
    %2343 = vmatpush1.bf16.msra.mxu0 0
    %2344 = vmatprep.subr.bf16.mxu0 0
    %2345 = vmatpush1.bf16.msra.mxu0 0
    %2346 = vmatprep.subr.bf16.mxu0 0
    %2347 = vmatpush1.bf16.msra.mxu0 0
    %2348 = vmatprep.subr.bf16.mxu0 0
    %2349 = vmatpush1.bf16.msra.mxu0 0
    %2350 = vmatprep.subr.bf16.mxu0 0
    %2351 = vmatpush1.bf16.msra.mxu0 0
    %2352 = vmatprep.subr.bf16.mxu0 0
    %2353 = vmatpush1.bf16.msra.mxu0 0
    %2354 = vmatprep.subr.bf16.mxu0 0
    %2355 = vmatpush1.bf16.msra.mxu0 0
    %2356 = vmatprep.mubr.bf16.mxu0 0
    %2357 = vmatmul.mubr.bf16.gmra.mrb[0].mxu0 %v2322
    %v2358 = vpop.f32.mrb[0].mxu0
    %v2359 = vadd.f32 %v1139, %v2358
    %v2360 = vpop.f32.mrb[0].mxu0
    %v2361 = vpop.f32.mrb[0].mxu0
    %v2362 = vpop.f32.mrb[0].mxu0
    %2363 = vdwg.mxu0
    %v2364 = vxor.u32 %v2359, 2147483648
    %v2365 = vmul.f32 %v2364, 1.442695
    %v2366 = vpow.pop %v2365
    %v2367 = vadd.f32 %v2366, 1.0
    %v2368 = vrcp.pop %v2367
    %v2369 = vmul.f32 1.0, %v2368
    %v2370 = vsub.f32 %v2251, %v2253
    %v2371 = vmul.f32 %v2370, 1.442695
    %v2372 = vpow.pop %v2371
    %2373 = vadd.xlane.f32.xlu0 %v2372
    %v2374 = vpop.xlane.xlu0 %2373
    %v2375 = vlog2.pop %v2374
    %v2376 = vmul.f32 %v2375, 0.6931472
    %v2377 = vsub.f32 %v2370, %v2376
    %s2378 = scalar_lea.vmem [#allocation17], 40
    %2379 = vst [vmem:[%s2378] sm:$0xff] %v2377
    %2380 = vrot.lane.b32.xlu0 %v1521, 1
    %v2381 = vpop.permute.xlu0 %2380
    %2383 = vrot.lane.b32.xlu0 %v1733, 2
    %v2384 = vpop.permute.xlu0 %2383
    %2386 = vrot.lane.b32.xlu0 %v1945, 3
    %v2387 = vpop.permute.xlu0 %2386
    %2389 = vrot.lane.b32.xlu0 %v2157, 4
    %v2390 = vpop.permute.xlu0 %2389
    %2393 = vrot.lane.b32.xlu0 %v2369, 5
    %v2394 = vpop.permute.xlu0 %2393
    %vm2396 = vcmask 7168
    %v2397 = vsel %vm2396, 0.0, %v2381
    %vm2398 = vcmask 15360
    %v2399 = vsel %vm2398, %v2397, %v2384
    %vm2400 = vcmask 23552
    %v2401 = vsel %vm2400, %v2399, %v2387
    %vm2402 = vcmask 31744
    %v2403 = vsel %vm2402, %v2401, %v2390
    %vm2404 = vcmask 39936
    %v2405 = vsel %vm2404, %v2403, %v2394
    %vm2406 = vcmask 48128
    %2407 = vst.msk [vmem:[#allocation18] sm:$0xff] %vm2406, %v2405
    // Predicated region
    $region106: #{tpu_custom_call.1} parent=1 // pred_check
      _
    $region107: #{tpu_custom_call.1} parent=1 // pred_check_branch
      %2409 = sbr.rel (0) target = $region109
    $region108: #{tpu_custom_call.1} parent=1 // pred_region
      %s2411 = ssub.s32 768, 768
      %2412 = vsyncadd [#allocation4], %s2411
      %s2413 = sshll.u32 [#allocation17], 4
      %s2414 = int_to_ptr.vmem [resolvable:$true] %s2413
      %2419 = dma.vmem_to_hbm [thread:$0]  %s2414, 768, %s17, [#allocation4], 128, 128, 8
    $region109: #{tpu_custom_call.1} parent=1 // pred_fallthru
      _
    // Predicated region
    $region110: #{tpu_custom_call.1} parent=1 // pred_check
      _
    $region111: #{tpu_custom_call.1} parent=1 // pred_check_branch
      %2421 = sbr.rel (0) target = $region113
    $region112: #{tpu_custom_call.1} parent=1 // pred_region
      %s2423 = ssub.s32 128, 128
      %2424 = vsyncadd [#allocation19], %s2423
      %s2426 = sshll.u32 [#allocation18], 4
      %s2427 = int_to_ptr.vmem [resolvable:$true] %s2426
      %2429 = dma.vmem_to_hbm [thread:$0]  %s2427, 128, %s18, [#allocation19]
    $region113: #{tpu_custom_call.1} parent=1 // pred_fallthru
      _
    // Predicated region
    $region114: #{tpu_custom_call.1} parent=1 // pred_check
      _
    $region115: #{tpu_custom_call.1} parent=1 // pred_check_branch
      %2431 = sbr.rel (0) target = $region117
    $region116: #{tpu_custom_call.1} parent=1 // pred_region
      %2432 = dma.done [#allocation4], 768
    $region117: #{tpu_custom_call.1} parent=1 // pred_fallthru
      _
    // Predicated region
    $region118: #{tpu_custom_call.1} parent=1 // pred_check
      _
    $region119: #{tpu_custom_call.1} parent=1 // pred_check_branch
      %2434 = sbr.rel (0) target = $region121
    $region120: #{tpu_custom_call.1} parent=1 // pred_region
      %2435 = dma.done [#allocation19], 128
    $region121: #{tpu_custom_call.1} parent=1 // pred_fallthru
      _
    %2436 = vsyncpa [#allocation3], 1
    %2437 = vsyncpa [#allocation6], 1
    %2438 = vsyncpa [#allocation9], 1
    %2439 = vsyncpa [#allocation12], 1
    %2440 = vsyncpa [#allocation15], 1
    %2441 = vsyncpa [#allocation4], 1
    %2442 = vsyncpa [#allocation19], 1

</llo_original>
